<compile_context>
chip_gen: v7x
topology: tpu7x:2x2x1
jax: 0.10.0
libtpu: 0.0.40
codegen_flags: <defaults>
</compile_context>

<pallas_src>
import functools

import jax
import jax.numpy as jnp
from jax import lax
from jax.experimental import pallas as pl
from jax.experimental.pallas import tpu as pltpu


# ---------------------------------------------------------------------------
# In-kernel helpers (traced inside the Pallas kernel body)
# ---------------------------------------------------------------------------
def _layernorm(x, gamma, beta, eps=1e-5):
    mu = jnp.mean(x, axis=-1, keepdims=True)
    var = jnp.mean((x - mu) ** 2, axis=-1, keepdims=True)
    return (x - mu) * lax.rsqrt(var + eps) * gamma + beta


def _gelu_exact(x):
    # PyTorch nn.GELU() default (erf formulation); applied to f32 values.
    return 0.5 * x * (1.0 + lax.erf(x * 0.7071067811865476))


# ---------------------------------------------------------------------------
# Fused per-layer kernel:  LN -> MHA -> +res -> LN -> MLP -> +res
#   grid = (B, N_pad // TQ).  At qi == 0 the full-sequence LayerNorm output and
#   the K/V projections are computed once per batch row and cached in VMEM
#   scratch; every q-tile then only computes Q, attention, out-proj and the MLP.
# ---------------------------------------------------------------------------
def _layer_kernel(x_ref,
                  g1_ref, b1_ref, wq_ref, wk_ref, wv_ref, wo_ref, bo_ref,
                  g2_ref, b2_ref, w1_ref, bb1_ref, w2_ref, bb2_ref,
                  o_ref,
                  xn_s, k_s, v_s,
                  *, heads, dim_head, q_tile, n_real):
    cdt = wq_ref.dtype                  # MXU operand dtype (bf16 recommended)
    n_pad = x_ref.shape[1]
    inner = heads * dim_head
    qi = pl.program_id(1)

    # ---- once per batch row: LN of the full sequence + K/V (lane-dense) ----
    @pl.when(qi == 0)
    def _():
        xn = _layernorm(x_ref[0], g1_ref[...], b1_ref[...]).astype(cdt)   # (N, D)
        xn_s[...] = xn
        k = jnp.dot(xn, wk_ref[...], preferred_element_type=jnp.float32)  # (N, inner)
        v = jnp.dot(xn, wv_ref[...], preferred_element_type=jnp.float32)
        k_s[...] = k.astype(cdt).reshape(n_pad, heads, dim_head).transpose(1, 0, 2)
        v_s[...] = v.astype(cdt).reshape(n_pad, heads, dim_head).transpose(1, 0, 2)

    # ---- this q-tile --------------------------------------------------------
    q0 = pl.multiple_of(qi * q_tile, 8)
    x = x_ref[0, pl.ds(q0, q_tile), :]                  # (TQ, D) f32 (residual)
    xn = xn_s[pl.ds(q0, q_tile), :]                     # cached LayerNorm(x)

    # Q projection: one lane-dense matmul (scale already folded into W_q).
    q = jnp.dot(xn, wq_ref[...], preferred_element_type=jnp.float32)      # (TQ, inner)
    qh = q.astype(cdt).reshape(q_tile, heads, dim_head).transpose(1, 0, 2)  # (H,TQ,dh)

    s = jnp.einsum('hqd,hnd->hqn', qh, k_s[...],
                   preferred_element_type=jnp.float32)                    # (H,TQ,N)
    if n_real != n_pad:                                  # mask padded key columns
        col = lax.broadcasted_iota(jnp.int32, s.shape, 2)
        s = jnp.where(col < n_real, s, -1e30)
    s = s - jnp.max(s, axis=-1, keepdims=True)
    e = jnp.exp(s)
    attn = e * pl.reciprocal(jnp.sum(e, axis=-1, keepdims=True), approx=True)

    ctx = jnp.einsum('hqn,hnd->hqd', attn.astype(cdt), v_s[...],
                     preferred_element_type=jnp.float32)                  # (H,TQ,dh)
    ctx = ctx.astype(cdt).transpose(1, 0, 2).reshape(q_tile, inner)       # lane-dense
    y = jnp.dot(ctx, wo_ref[...],
                preferred_element_type=jnp.float32) + bo_ref[...] + x     # residual 1

    # ---- feed-forward (elementwise math kept in f32) ------------------------
    yn = _layernorm(y, g2_ref[...], b2_ref[...]).astype(cdt)
    h = jnp.dot(yn, w1_ref[...], preferred_element_type=jnp.float32) + bb1_ref[...]
    h = _gelu_exact(h).astype(cdt)
    z = jnp.dot(h, w2_ref[...], preferred_element_type=jnp.float32) + bb2_ref[...]
    o_ref[0] = (z + y).astype(o_ref.dtype)                                # residual 2


# ---------------------------------------------------------------------------
# Capability / hardware queries (all guarded; fall back to safe defaults)
# ---------------------------------------------------------------------------
_WEIGHT_BUFFERED_ONE = None


def _weights_single_buffered():
    """Probe once whether pipeline_mode=pl.Buffered(1) is supported (single-buffered weights)."""
    global _WEIGHT_BUFFERED_ONE
    if _WEIGHT_BUFFERED_ONE is None:
        try:
            def _cp(x_ref, o_ref):
                o_ref[...] = x_ref[...]

            f = pl.pallas_call(
                _cp,
                out_shape=jax.ShapeDtypeStruct((8, 128), jnp.float32),
                grid_spec=pltpu.PrefetchScalarGridSpec(
                    num_scalar_prefetch=0,
                    grid=(2,),
                    in_specs=[pl.BlockSpec((8, 128), lambda i: (0, 0),
                                           pipeline_mode=pl.Buffered(1))],
                    out_specs=pl.BlockSpec((8, 128), lambda i: (0, 0)),
                ),
            )
            jax.block_until_ready(f(jnp.zeros((8, 128), jnp.float32)))
            _WEIGHT_BUFFERED_ONE = True
        except Exception:
            _WEIGHT_BUFFERED_ONE = False
    return _WEIGHT_BUFFERED_ONE


def _vmem_limit_bytes():
    # Chip-aware VMEM budget: ~4 MiB headroom below physical, capped at 100 MiB
    # (v5e/v6e have 128 MiB per core, v7x only 64 MiB).
    try:
        cap = int(pltpu.get_tpu_info().vmem_capacity_bytes)
    except Exception:
        cap = 128 * 1024 * 1024
    return max(32 * 1024 * 1024, min(cap - 4 * 1024 * 1024, 100 * 1024 * 1024))


def _q_tile_target():
    # v5e's MXU is 128x128 -> favor 128-row tiles; v6e/v7x have 256-wide MXUs.
    try:
        name = str(getattr(pltpu.get_tpu_info(), "chip_version", "")).lower()
        if "5" in name:
            return 128
    except Exception:
        pass
    return 256


def _round_up(x, m):
    return ((x + m - 1) // m) * m


def _choose_q_tile(n, target):
    """Sequence tile: multiple of 8, <= target, minimizing padding of n."""
    n8 = _round_up(n, 8)
    if n8 <= target:
        return n8
    best_t, best_pad = None, None
    t = (target // 8) * 8
    lo = max(8, (target // 2 // 8) * 8)
    while t >= lo:
        pad = _round_up(n, t) - n
        if best_pad is None or pad < best_pad:
            best_t, best_pad = t, pad
            if pad == 0:
                break
        t -= 8
    return best_t


# ---------------------------------------------------------------------------
# pallas_call wrapper for one fused layer
# ---------------------------------------------------------------------------
def transformer_layer(x, p, heads, dim_head, n_real, q_tile):
    B, N_pad, D = x.shape
    Hd = p["w1"].shape[1]
    inner = heads * dim_head
    cdt = p["wq"].dtype
    n_q = N_pad // q_tile

    # Weights never change across the grid -> single-buffer them when supported.
    buf1 = {"pipeline_mode": pl.Buffered(1)} if _weights_single_buffered() else {}

    def wspec(shape):
        return pl.BlockSpec(shape, lambda b, qi: (0, 0), **buf1)

    in_specs = [
        pl.BlockSpec((1, N_pad, D), lambda b, qi: (b, 0, 0)),   # x (once per row)
        wspec((1, D)), wspec((1, D)),                           # ln1 gamma / beta
        wspec((D, inner)),                                      # wq (scale folded in)
        wspec((D, inner)),                                      # wk
        wspec((D, inner)),                                      # wv
        wspec((inner, D)), wspec((1, D)),                       # wo, bo
        wspec((1, D)), wspec((1, D)),                           # ln2 gamma / beta
        wspec((D, Hd)), wspec((1, Hd)),                         # w1, b1
        wspec((Hd, D)), wspec((1, D)),                          # w2, b2
    ]

    kern = functools.partial(_layer_kernel, heads=heads, dim_head=dim_head,
                             q_tile=q_tile, n_real=n_real)

    return pl.pallas_call(
        kern,
        out_shape=jax.ShapeDtypeStruct((B, N_pad, D), x.dtype),
        grid_spec=pltpu.PrefetchScalarGridSpec(
            num_scalar_prefetch=0,
            grid=(B, n_q),
            in_specs=in_specs,
            out_specs=pl.BlockSpec((1, q_tile, D), lambda b, qi: (b, qi, 0)),
            scratch_shapes=[
                pltpu.VMEM((N_pad, D), cdt),                    # cached LayerNorm(x)
                pltpu.VMEM((heads, N_pad, dim_head), cdt),      # K cache (head-major)
                pltpu.VMEM((heads, N_pad, dim_head), cdt),      # V cache (head-major)
            ],
        ),
        compiler_params=pltpu.CompilerParams(
            # NOTE: K/V caching at qi==0 requires the q-tile axis to stay sequential.
            dimension_semantics=("parallel", "arbitrary"),
            vmem_limit_bytes=_vmem_limit_bytes(),
        ),
    )(x, p["g1"], p["b1"], p["wq"], p["wk"], p["wv"], p["wo"], p["bo"],
      p["g2"], p["b2"], p["w1"], p["bb1"], p["w2"], p["bb2"])


# ---------------------------------------------------------------------------
# Parameter prep: split W_qkv, fold softmax scale into W_q, cast MXU operands.
# (For the heads==1 and dim_head==dim corner the PyTorch module uses Identity
#  for to_out; callers should then pass w_out = I, b_out = 0.)
# ---------------------------------------------------------------------------
def _prepare_layer(attn_p, ff_p, heads, dim_head, matmul_dtype):
    inner = heads * dim_head
    scale = float(dim_head) ** -0.5
    wqkv = attn_p["w_qkv"]
    return {
        "g1": attn_p["ln_g"], "b1": attn_p["ln_b"],
        "wq": (wqkv[:, :inner] * scale).astype(matmul_dtype),
        "wk": wqkv[:, inner:2 * inner].astype(matmul_dtype),
        "wv": wqkv[:, 2 * inner:].astype(matmul_dtype),
        "wo": attn_p["w_out"].astype(matmul_dtype),
        "bo": attn_p["b_out"],
        "g2": ff_p["ln_g"], "b2": ff_p["ln_b"],
        "w1": ff_p["w1"].astype(matmul_dtype), "bb1": ff_p["b1"],
        "w2": ff_p["w2"].astype(matmul_dtype), "bb2": ff_p["b2"],
    }


def transformer_forward(x, layers, heads, dim_head, matmul_dtype=jnp.bfloat16,
                        q_tile_target=None):
    B, N, D = x.shape
    if q_tile_target is None:
        q_tile_target = _q_tile_target()
    q_tile = _choose_q_tile(N, q_tile_target)
    n_pad = _round_up(N, q_tile)
    if n_pad != N:                      # pad once for all layers; masked in-kernel
        x = jnp.pad(x, ((0, 0), (0, n_pad - N), (0, 0)))
    prepped = [_prepare_layer(a, f, heads, dim_head, matmul_dtype) for a, f in layers]
    for p in prepped:
        x = transformer_layer(x, p, heads, dim_head, n_real=N, q_tile=q_tile)
    return x[:, :N, :] if n_pad != N else x


# ---------------------------------------------------------------------------
# Deterministic parameter init (synthetic; shapes follow the nn.Module __init__)
# ---------------------------------------------------------------------------
def init_params(key, dim, depth, heads, dim_head, mlp_dim):
    inner = heads * dim_head
    layers = []
    for _ in range(depth):
        key, k1, k2, k3, k4 = jax.random.split(key, 5)
        attn_p = {
            "ln_g": jnp.ones((1, dim), jnp.float32),
            "ln_b": jnp.zeros((1, dim), jnp.float32),
            "w_qkv": 0.05 * jax.random.normal(k1, (dim, 3 * inner), jnp.float32),
            "w_out": 0.05 * jax.random.normal(k2, (inner, dim), jnp.float32),
            "b_out": jnp.zeros((1, dim), jnp.float32),
        }
        ff_p = {
            "ln_g": jnp.ones((1, dim), jnp.float32),
            "ln_b": jnp.zeros((1, dim), jnp.float32),
            "w1": 0.05 * jax.random.normal(k3, (dim, mlp_dim), jnp.float32),
            "b1": jnp.zeros((1, mlp_dim), jnp.float32),
            "w2": 0.05 * jax.random.normal(k4, (mlp_dim, dim), jnp.float32),
            "b2": jnp.zeros((1, dim), jnp.float32),
        }
        layers.append((attn_p, ff_p))
    return layers


# ---------------------------------------------------------------------------
# Pure-JAX reference (for correctness check)
# ---------------------------------------------------------------------------
def reference_forward(x, layers, heads, dim_head):
    inner = heads * dim_head
    for attn_p, ff_p in layers:
        xn = _layernorm(x, attn_p["ln_g"][None], attn_p["ln_b"][None])
        qkv = xn @ attn_p["w_qkv"]
        q, k, v = jnp.split(qkv, 3, axis=-1)
        B, N, _ = x.shape

        def heads_split(t):
            return t.reshape(B, N, heads, dim_head).transpose(0, 2, 1, 3)

        q, k, v = map(heads_split, (q, k, v))
        dots = jnp.einsum("bhnd,bhmd->bhnm", q, k) * (dim_head ** -0.5)
        attn = jax.nn.softmax(dots, axis=-1)
        out = jnp.einsum("bhnm,bhmd->bhnd", attn, v)
        out = out.transpose(0, 2, 1, 3).reshape(B, N, inner)
        x = out @ attn_p["w_out"] + attn_p["b_out"][None] + x

        xn = _layernorm(x, ff_p["ln_g"][None], ff_p["ln_b"][None])
        h = _gelu_exact(xn @ ff_p["w1"] + ff_p["b1"][None])
        x = h @ ff_p["w2"] + ff_p["b2"][None] + x
    return x


if __name__ == "__main__":
    key = jax.random.PRNGKey(0)

    # --- Test 1: small standard config (N multiple of 8, single tile) --------
    B, N = 2, 8
    dim, depth, heads, dim_head, mlp_dim = 32, 2, 4, 16, 64
    kx, kp, key = jax.random.split(key, 3)
    x = jax.random.normal(kx, (B, N, dim), jnp.float32)
    layers = init_params(kp, dim, depth, heads, dim_head, mlp_dim)
    ref = reference_forward(x, layers, heads, dim_head)

    # f32 MXU operands (tight check; approx reciprocal in softmax -> 2e-3 tol).
    out = transformer_forward(x, layers, heads, dim_head, matmul_dtype=jnp.float32)
    out = jax.block_until_ready(out)
    assert out.shape == (B, N, dim)
    assert jnp.allclose(out, ref, atol=2e-3, rtol=2e-3), "f32 path mismatch vs reference"

    # bf16 MXU operands (fast path on all chips), f32 accumulation — looser check.
    out_bf16 = transformer_forward(x, layers, heads, dim_head, matmul_dtype=jnp.bfloat16)
    out_bf16 = jax.block_until_ready(out_bf16)
    assert jnp.allclose(out_bf16, ref, atol=1e-1, rtol=1e-1), "bf16 path mismatch vs reference"

    # --- Test 2: N not a multiple of 8 (exercises padding + key masking) -----
    B2, N2 = 1, 12
    kx2, kp2, key = jax.random.split(key, 3)
    x2 = jax.random.normal(kx2, (B2, N2, dim), jnp.float32)
    layers2 = init_params(kp2, dim, 1, heads, dim_head, mlp_dim)
    ref2 = reference_forward(x2, layers2, heads, dim_head)
    out2 = transformer_forward(x2, layers2, heads, dim_head, matmul_dtype=jnp.float32)
    out2 = jax.block_until_ready(out2)
    assert out2.shape == (B2, N2, dim)
    assert jnp.allclose(out2, ref2, atol=2e-3, rtol=2e-3), "masked/padded path mismatch"

    # --- Test 3: longer sequence (multi-tile grid, K/V cache reuse + masking) -
    B3, N3 = 1, 260
    kx3, kp3, key = jax.random.split(key, 3)
    x3 = jax.random.normal(kx3, (B3, N3, dim), jnp.float32)
    layers3 = init_params(kp3, dim, 1, heads, dim_head, mlp_dim)
    ref3 = reference_forward(x3, layers3, heads, dim_head)
    out3 = transformer_forward(x3, layers3, heads, dim_head, matmul_dtype=jnp.float32)
    out3 = jax.block_until_ready(out3)
    assert out3.shape == (B3, N3, dim)
    assert jnp.allclose(out3, ref3, atol=2e-3, rtol=2e-3), "multi-tile path mismatch"

    print("KERNEL_OK")
</pallas_src>

<mosaic_0001>
module attributes {stable_mosaic.version = 11 : i64} {
  func.func @_cp(%arg0: i32, %arg1: memref<8x128xf32, #tpu.memory_space<vmem>>, %arg2: memref<8x128xf32, #tpu.memory_space<vmem>>) attributes {dimension_semantics = [#tpu.dimension_semantics<arbitrary>], iteration_bounds = array<i64: 2>, scalar_prefetch = 0 : i64, scratch_operands = 0 : i64, tpu.core_type = #tpu.core_type<tc>, window_params = [{pipeline_mode = #tpu.pipeline_mode<synchronous>, transform_indices = @transform_0, window_bounds = array<i64: 8, 128>}, {pipeline_mode = #tpu.pipeline_mode<synchronous>, transform_indices = @transform_1, window_bounds = array<i64: 8, 128>}]} {
    %c0 = arith.constant 0 : index
    %c0_0 = arith.constant 0 : index
    %0 = vector.load %arg1[%c0, %c0_0] : memref<8x128xf32, #tpu.memory_space<vmem>>, vector<8x128xf32>
    %c0_1 = arith.constant 0 : index
    %c0_2 = arith.constant 0 : index
    %1 = vector.load %arg2[%c0_1, %c0_2] : memref<8x128xf32, #tpu.memory_space<vmem>>, vector<8x128xf32>
    tpu.vector_store %arg2[%c0_1, %c0_2], %0 {strides = array<i32>} : memref<8x128xf32, #tpu.memory_space<vmem>>, vector<8x128xf32>,
    return
  }
  func.func @transform_0(%arg0: i32) -> (i32, i32) {
    %c0_i32 = arith.constant 0 : i32
    %c0_i32_0 = arith.constant 0 : i32
    %c0_i32_1 = arith.constant 0 : i32
    return %c0_i32, %c0_i32_0 : i32, i32
  }
  func.func @transform_1(%arg0: i32) -> (i32, i32) {
    %c0_i32 = arith.constant 0 : i32
    %c0_i32_0 = arith.constant 0 : i32
    %c0_i32_1 = arith.constant 0 : i32
    return %c0_i32, %c0_i32_0 : i32, i32
  }
}

module attributes {stable_mosaic.version = 11 : i64} {
  func.func @_layer_kernel(%arg0: i32, %arg1: i32, %arg2: memref<1x8x32xf32, #tpu.memory_space<vmem>>, %arg3: memref<1x32xf32, #tpu.memory_space<vmem>>, %arg4: memref<1x32xf32, #tpu.memory_space<vmem>>, %arg5: memref<32x64xf32, #tpu.memory_space<vmem>>, %arg6: memref<32x64xf32, #tpu.memory_space<vmem>>, %arg7: memref<32x64xf32, #tpu.memory_space<vmem>>, %arg8: memref<64x32xf32, #tpu.memory_space<vmem>>, %arg9: memref<1x32xf32, #tpu.memory_space<vmem>>, %arg10: memref<1x32xf32, #tpu.memory_space<vmem>>, %arg11: memref<1x32xf32, #tpu.memory_space<vmem>>, %arg12: memref<32x64xf32, #tpu.memory_space<vmem>>, %arg13: memref<1x64xf32, #tpu.memory_space<vmem>>, %arg14: memref<64x32xf32, #tpu.memory_space<vmem>>, %arg15: memref<1x32xf32, #tpu.memory_space<vmem>>, %arg16: memref<1x8x32xf32, #tpu.memory_space<vmem>>, %arg17: memref<8x32xf32, #tpu.memory_space<vmem>>, %arg18: memref<4x8x16xf32, #tpu.memory_space<vmem>>, %arg19: memref<4x8x16xf32, #tpu.memory_space<vmem>>) attributes {dimension_semantics = [#tpu.dimension_semantics<parallel>, #tpu.dimension_semantics<arbitrary>], iteration_bounds = array<i64: 2, 1>, scalar_prefetch = 0 : i64, scratch_operands = 3 : i64, tpu.core_type = #tpu.core_type<tc>, window_params = [{transform_indices = @transform_0, window_bounds = array<i64: 1, 8, 32>}, {pipeline_mode = #tpu.pipeline_mode<synchronous>, transform_indices = @transform_1, window_bounds = array<i64: 1, 32>}, {pipeline_mode = #tpu.pipeline_mode<synchronous>, transform_indices = @transform_2, window_bounds = array<i64: 1, 32>}, {pipeline_mode = #tpu.pipeline_mode<synchronous>, transform_indices = @transform_3, window_bounds = array<i64: 32, 64>}, {pipeline_mode = #tpu.pipeline_mode<synchronous>, transform_indices = @transform_4, window_bounds = array<i64: 32, 64>}, {pipeline_mode = #tpu.pipeline_mode<synchronous>, transform_indices = @transform_5, window_bounds = array<i64: 32, 64>}, {pipeline_mode = #tpu.pipeline_mode<synchronous>, transform_indices = @transform_6, window_bounds = array<i64: 64, 32>}, {pipeline_mode = #tpu.pipeline_mode<synchronous>, transform_indices = @transform_7, window_bounds = array<i64: 1, 32>}, {pipeline_mode = #tpu.pipeline_mode<synchronous>, transform_indices = @transform_8, window_bounds = array<i64: 1, 32>}, {pipeline_mode = #tpu.pipeline_mode<synchronous>, transform_indices = @transform_9, window_bounds = array<i64: 1, 32>}, {pipeline_mode = #tpu.pipeline_mode<synchronous>, transform_indices = @transform_10, window_bounds = array<i64: 32, 64>}, {pipeline_mode = #tpu.pipeline_mode<synchronous>, transform_indices = @transform_11, window_bounds = array<i64: 1, 64>}, {pipeline_mode = #tpu.pipeline_mode<synchronous>, transform_indices = @transform_12, window_bounds = array<i64: 64, 32>}, {pipeline_mode = #tpu.pipeline_mode<synchronous>, transform_indices = @transform_13, window_bounds = array<i64: 1, 32>}, {transform_indices = @transform_14, window_bounds = array<i64: 1, 8, 32>}]} {
    %c0_i32 = arith.constant 0 : i32
    %0 = arith.cmpi eq, %arg1, %c0_i32 : i32
    %1 = arith.extui %0 : i1 to i32
    %c0_i32_0 = arith.constant 0 : i32
    %2 = arith.cmpi ne, %1, %c0_i32_0 : i32
    scf.if %2 {
      %c0_45 = arith.constant 0 : index
      %c0_46 = arith.constant 0 : index
      %c0_47 = arith.constant 0 : index
      %82 = vector.load %arg2[%c0_45, %c0_46, %c0_47] : memref<1x8x32xf32, #tpu.memory_space<vmem>>, vector<1x8x32xf32>
      %83 = vector.shape_cast %82 : vector<1x8x32xf32> to vector<8x32xf32>
      %c0_48 = arith.constant 0 : index
      %c0_49 = arith.constant 0 : index
      %84 = vector.load %arg3[%c0_48, %c0_49] : memref<1x32xf32, #tpu.memory_space<vmem>>, vector<1x32xf32>
      %c0_50 = arith.constant 0 : index
      %c0_51 = arith.constant 0 : index
      %85 = vector.load %arg4[%c0_50, %c0_51] : memref<1x32xf32, #tpu.memory_space<vmem>>, vector<1x32xf32>
      %cst_52 = arith.constant dense<0.000000e+00> : vector<8xf32>
      %86 = vector.multi_reduction <add>, %83, %cst_52 [1] : vector<8x32xf32> to vector<8xf32>
      %87 = vector.shape_cast %86 : vector<8xf32> to vector<8x1xf32>
      %cst_53 = arith.constant 3.200000e+01 : f32
      %88 = vector.broadcast %cst_53 : f32 to vector<8x1xf32>
      %89 = arith.divf %87, %88 : vector<8x1xf32>
      %90 = vector.broadcast %89 : vector<8x1xf32> to vector<8x32xf32>
      %91 = arith.subf %83, %90 : vector<8x32xf32>
      %92 = arith.mulf %91, %91 : vector<8x32xf32>
      %cst_54 = arith.constant dense<0.000000e+00> : vector<8xf32>
      %93 = vector.multi_reduction <add>, %92, %cst_54 [1] : vector<8x32xf32> to vector<8xf32>
      %94 = vector.shape_cast %93 : vector<8xf32> to vector<8x1xf32>
      %cst_55 = arith.constant 3.200000e+01 : f32
      %95 = vector.broadcast %cst_55 : f32 to vector<8x1xf32>
      %96 = arith.divf %94, %95 : vector<8x1xf32>
      %97 = vector.broadcast %89 : vector<8x1xf32> to vector<8x32xf32>
      %98 = arith.subf %83, %97 : vector<8x32xf32>
      %cst_56 = arith.constant 9.99999974E-6 : f32
      %99 = vector.broadcast %cst_56 : f32 to vector<8x1xf32>
      %100 = arith.addf %96, %99 : vector<8x1xf32>
      %101 = math.rsqrt %100 : vector<8x1xf32>
      %102 = vector.broadcast %101 : vector<8x1xf32> to vector<8x32xf32>
      %103 = arith.mulf %98, %102 : vector<8x32xf32>
      %104 = vector.broadcast %84 : vector<1x32xf32> to vector<8x32xf32>
      %105 = arith.mulf %103, %104 : vector<8x32xf32>
      %106 = vector.broadcast %85 : vector<1x32xf32> to vector<8x32xf32>
      %107 = arith.addf %105, %106 : vector<8x32xf32>
      %c0_57 = arith.constant 0 : index
      %c0_58 = arith.constant 0 : index
      %108 = vector.load %arg17[%c0_57, %c0_58] : memref<8x32xf32, #tpu.memory_space<vmem>>, vector<8x32xf32>
      tpu.vector_store %arg17[%c0_57, %c0_58], %107 {strides = array<i32>} : memref<8x32xf32, #tpu.memory_space<vmem>>, vector<8x32xf32>,
      %c0_59 = arith.constant 0 : index
      %c0_60 = arith.constant 0 : index
      %109 = vector.load %arg6[%c0_59, %c0_60] : memref<32x64xf32, #tpu.memory_space<vmem>>, vector<32x64xf32>
      %cst_61 = arith.constant dense<0.000000e+00> : vector<8x64xf32>
      %110 = tpu.matmul %107, %109, %cst_61 {dimension_numbers = #tpu.dot_dimension_numbers<[1], [0], [0], [1], [0, 0, 1, 1], [], []>} : vector<8x32xf32>, vector<32x64xf32>, vector<8x64xf32> -> vector<8x64xf32>
      %c0_62 = arith.constant 0 : index
      %c0_63 = arith.constant 0 : index
      %111 = vector.load %arg7[%c0_62, %c0_63] : memref<32x64xf32, #tpu.memory_space<vmem>>, vector<32x64xf32>
      %cst_64 = arith.constant dense<0.000000e+00> : vector<8x64xf32>
      %112 = tpu.matmul %107, %111, %cst_64 {dimension_numbers = #tpu.dot_dimension_numbers<[1], [0], [0], [1], [0, 0, 1, 1], [], []>} : vector<8x32xf32>, vector<32x64xf32>, vector<8x64xf32> -> vector<8x64xf32>
      %113 = vector.shape_cast %110 : vector<8x64xf32> to vector<8x4x16xf32>
      %114 = tpu.transpose %113, [1, 0, 2] : vector<8x4x16xf32> -> vector<4x8x16xf32>
      %c0_65 = arith.constant 0 : index
      %c0_66 = arith.constant 0 : index
      %c0_67 = arith.constant 0 : index
      %115 = vector.load %arg18[%c0_65, %c0_66, %c0_67] : memref<4x8x16xf32, #tpu.memory_space<vmem>>, vector<4x8x16xf32>
      tpu.vector_store %arg18[%c0_65, %c0_66, %c0_67], %114 {strides = array<i32>} : memref<4x8x16xf32, #tpu.memory_space<vmem>>, vector<4x8x16xf32>,
      %116 = vector.shape_cast %112 : vector<8x64xf32> to vector<8x4x16xf32>
      %117 = tpu.transpose %116, [1, 0, 2] : vector<8x4x16xf32> -> vector<4x8x16xf32>
      %c0_68 = arith.constant 0 : index
      %c0_69 = arith.constant 0 : index
      %c0_70 = arith.constant 0 : index
      %118 = vector.load %arg19[%c0_68, %c0_69, %c0_70] : memref<4x8x16xf32, #tpu.memory_space<vmem>>, vector<4x8x16xf32>
      tpu.vector_store %arg19[%c0_68, %c0_69, %c0_70], %117 {strides = array<i32>} : memref<4x8x16xf32, #tpu.memory_space<vmem>>, vector<4x8x16xf32>,
    } else {
    }
    %c8_i32 = arith.constant 8 : i32
    %3 = arith.muli %arg1, %c8_i32 : i32
    %4 = tpu.assume_multiple %3, 8 : i32
    %c0 = arith.constant 0 : index
    %5 = arith.index_cast %4 : i32 to index
    %c0_1 = arith.constant 0 : index
    %6 = vector.load %arg2[%c0, %5, %c0_1] : memref<1x8x32xf32, #tpu.memory_space<vmem>>, vector<1x8x32xf32>
    %7 = vector.shape_cast %6 : vector<1x8x32xf32> to vector<8x32xf32>
    %8 = arith.index_cast %4 : i32 to index
    %c0_2 = arith.constant 0 : index
    %9 = vector.load %arg17[%8, %c0_2] : memref<8x32xf32, #tpu.memory_space<vmem>>, vector<8x32xf32>
    %c0_3 = arith.constant 0 : index
    %c0_4 = arith.constant 0 : index
    %10 = vector.load %arg5[%c0_3, %c0_4] : memref<32x64xf32, #tpu.memory_space<vmem>>, vector<32x64xf32>
    %cst = arith.constant dense<0.000000e+00> : vector<8x64xf32>
    %11 = tpu.matmul %9, %10, %cst {dimension_numbers = #tpu.dot_dimension_numbers<[1], [0], [0], [1], [0, 0, 1, 1], [], []>} : vector<8x32xf32>, vector<32x64xf32>, vector<8x64xf32> -> vector<8x64xf32>
    %12 = vector.shape_cast %11 : vector<8x64xf32> to vector<8x4x16xf32>
    %13 = tpu.transpose %12, [1, 0, 2] : vector<8x4x16xf32> -> vector<4x8x16xf32>
    %c0_5 = arith.constant 0 : index
    %c0_6 = arith.constant 0 : index
    %c0_7 = arith.constant 0 : index
    %14 = vector.load %arg18[%c0_5, %c0_6, %c0_7] : memref<4x8x16xf32, #tpu.memory_space<vmem>>, vector<4x8x16xf32>
    "tpu.trace_start"() <{level = 10 : i32, message = "hqd,hnd->hqn"}> : () -> ()
    %cst_8 = arith.constant dense<0.000000e+00> : vector<4x8x8xf32>
    %15 = tpu.matmul %13, %14, %cst_8 {dimension_numbers = #tpu.dot_dimension_numbers<[2], [2], [1], [1], [0, 0, 0, 1, 1, 1], [0], [0]>} : vector<4x8x16xf32>, vector<4x8x16xf32>, vector<4x8x8xf32> -> vector<4x8x8xf32>
    "tpu.trace_stop"() : () -> ()
    %cst_9 = arith.constant dense<0xFF800000> : vector<4x8xf32>
    %16 = vector.multi_reduction <maximumf>, %15, %cst_9 [2] : vector<4x8x8xf32> to vector<4x8xf32>
    %17 = vector.shape_cast %16 : vector<4x8xf32> to vector<4x8x1xf32>
    %18 = vector.broadcast %17 : vector<4x8x1xf32> to vector<4x8x8xf32>
    %19 = arith.subf %15, %18 : vector<4x8x8xf32>
    %20 = math.exp %19 : vector<4x8x8xf32>
    %cst_10 = arith.constant dense<0.000000e+00> : vector<4x8xf32>
    %21 = vector.multi_reduction <add>, %20, %cst_10 [2] : vector<4x8x8xf32> to vector<4x8xf32>
    %22 = vector.shape_cast %21 : vector<4x8xf32> to vector<4x8x1xf32>
    %23 = tpu.reciprocal %22 {approx = true} : vector<4x8x1xf32> -> vector<4x8x1xf32>
    %24 = vector.broadcast %23 : vector<4x8x1xf32> to vector<4x8x8xf32>
    %25 = arith.mulf %20, %24 : vector<4x8x8xf32>
    %c0_11 = arith.constant 0 : index
    %c0_12 = arith.constant 0 : index
    %c0_13 = arith.constant 0 : index
    %26 = vector.load %arg19[%c0_11, %c0_12, %c0_13] : memref<4x8x16xf32, #tpu.memory_space<vmem>>, vector<4x8x16xf32>
    "tpu.trace_start"() <{level = 10 : i32, message = "hqn,hnd->hqd"}> : () -> ()
    %cst_14 = arith.constant dense<0.000000e+00> : vector<4x8x16xf32>
    %27 = tpu.matmul %25, %26, %cst_14 {dimension_numbers = #tpu.dot_dimension_numbers<[2], [1], [1], [2], [0, 0, 0, 1, 1, 2], [0], [0]>} : vector<4x8x8xf32>, vector<4x8x16xf32>, vector<4x8x16xf32> -> vector<4x8x16xf32>
    "tpu.trace_stop"() : () -> ()
    %28 = tpu.transpose %27, [1, 0, 2] : vector<4x8x16xf32> -> vector<8x4x16xf32>
    %29 = vector.shape_cast %28 : vector<8x4x16xf32> to vector<8x64xf32>
    %c0_15 = arith.constant 0 : index
    %c0_16 = arith.constant 0 : index
    %30 = vector.load %arg8[%c0_15, %c0_16] : memref<64x32xf32, #tpu.memory_space<vmem>>, vector<64x32xf32>
    %cst_17 = arith.constant dense<0.000000e+00> : vector<8x32xf32>
    %31 = tpu.matmul %29, %30, %cst_17 {dimension_numbers = #tpu.dot_dimension_numbers<[1], [0], [0], [1], [0, 0, 1, 1], [], []>} : vector<8x64xf32>, vector<64x32xf32>, vector<8x32xf32> -> vector<8x32xf32>
    %c0_18 = arith.constant 0 : index
    %c0_19 = arith.constant 0 : index
    %32 = vector.load %arg9[%c0_18, %c0_19] : memref<1x32xf32, #tpu.memory_space<vmem>>, vector<1x32xf32>
    %33 = vector.broadcast %32 : vector<1x32xf32> to vector<8x32xf32>
    %34 = arith.addf %31, %33 : vector<8x32xf32>
    %35 = arith.addf %34, %7 : vector<8x32xf32>
    %c0_20 = arith.constant 0 : index
    %c0_21 = arith.constant 0 : index
    %36 = vector.load %arg10[%c0_20, %c0_21] : memref<1x32xf32, #tpu.memory_space<vmem>>, vector<1x32xf32>
    %c0_22 = arith.constant 0 : index
    %c0_23 = arith.constant 0 : index
    %37 = vector.load %arg11[%c0_22, %c0_23] : memref<1x32xf32, #tpu.memory_space<vmem>>, vector<1x32xf32>
    %cst_24 = arith.constant dense<0.000000e+00> : vector<8xf32>
    %38 = vector.multi_reduction <add>, %35, %cst_24 [1] : vector<8x32xf32> to vector<8xf32>
    %39 = vector.shape_cast %38 : vector<8xf32> to vector<8x1xf32>
    %cst_25 = arith.constant 3.200000e+01 : f32
    %40 = vector.broadcast %cst_25 : f32 to vector<8x1xf32>
    %41 = arith.divf %39, %40 : vector<8x1xf32>
    %42 = vector.broadcast %41 : vector<8x1xf32> to vector<8x32xf32>
    %43 = arith.subf %35, %42 : vector<8x32xf32>
    %44 = arith.mulf %43, %43 : vector<8x32xf32>
    %cst_26 = arith.constant dense<0.000000e+00> : vector<8xf32>
    %45 = vector.multi_reduction <add>, %44, %cst_26 [1] : vector<8x32xf32> to vector<8xf32>
    %46 = vector.shape_cast %45 : vector<8xf32> to vector<8x1xf32>
    %cst_27 = arith.constant 3.200000e+01 : f32
    %47 = vector.broadcast %cst_27 : f32 to vector<8x1xf32>
    %48 = arith.divf %46, %47 : vector<8x1xf32>
    %49 = vector.broadcast %41 : vector<8x1xf32> to vector<8x32xf32>
    %50 = arith.subf %35, %49 : vector<8x32xf32>
    %cst_28 = arith.constant 9.99999974E-6 : f32
    %51 = vector.broadcast %cst_28 : f32 to vector<8x1xf32>
    %52 = arith.addf %48, %51 : vector<8x1xf32>
    %53 = math.rsqrt %52 : vector<8x1xf32>
    %54 = vector.broadcast %53 : vector<8x1xf32> to vector<8x32xf32>
    %55 = arith.mulf %50, %54 : vector<8x32xf32>
    %56 = vector.broadcast %36 : vector<1x32xf32> to vector<8x32xf32>
    %57 = arith.mulf %55, %56 : vector<8x32xf32>
    %58 = vector.broadcast %37 : vector<1x32xf32> to vector<8x32xf32>
    %59 = arith.addf %57, %58 : vector<8x32xf32>
    %c0_29 = arith.constant 0 : index
    %c0_30 = arith.constant 0 : index
    %60 = vector.load %arg12[%c0_29, %c0_30] : memref<32x64xf32, #tpu.memory_space<vmem>>, vector<32x64xf32>
    %cst_31 = arith.constant dense<0.000000e+00> : vector<8x64xf32>
    %61 = tpu.matmul %59, %60, %cst_31 {dimension_numbers = #tpu.dot_dimension_numbers<[1], [0], [0], [1], [0, 0, 1, 1], [], []>} : vector<8x32xf32>, vector<32x64xf32>, vector<8x64xf32> -> vector<8x64xf32>
    %c0_32 = arith.constant 0 : index
    %c0_33 = arith.constant 0 : index
    %62 = vector.load %arg13[%c0_32, %c0_33] : memref<1x64xf32, #tpu.memory_space<vmem>>, vector<1x64xf32>
    %63 = vector.broadcast %62 : vector<1x64xf32> to vector<8x64xf32>
    %64 = arith.addf %61, %63 : vector<8x64xf32>
    %cst_34 = arith.constant 5.000000e-01 : f32
    %65 = vector.broadcast %cst_34 : f32 to vector<8x64xf32>
    %66 = arith.mulf %65, %64 : vector<8x64xf32>
    %cst_35 = arith.constant 0.707106769 : f32
    %67 = vector.broadcast %cst_35 : f32 to vector<8x64xf32>
    %68 = arith.mulf %64, %67 : vector<8x64xf32>
    %69 = math.erf %68 : vector<8x64xf32>
    %cst_36 = arith.constant 1.000000e+00 : f32
    %70 = vector.broadcast %cst_36 : f32 to vector<8x64xf32>
    %71 = arith.addf %70, %69 : vector<8x64xf32>
    %72 = arith.mulf %66, %71 : vector<8x64xf32>
    %c0_37 = arith.constant 0 : index
    %c0_38 = arith.constant 0 : index
    %73 = vector.load %arg14[%c0_37, %c0_38] : memref<64x32xf32, #tpu.memory_space<vmem>>, vector<64x32xf32>
    %cst_39 = arith.constant dense<0.000000e+00> : vector<8x32xf32>
    %74 = tpu.matmul %72, %73, %cst_39 {dimension_numbers = #tpu.dot_dimension_numbers<[1], [0], [0], [1], [0, 0, 1, 1], [], []>} : vector<8x64xf32>, vector<64x32xf32>, vector<8x32xf32> -> vector<8x32xf32>
    %c0_40 = arith.constant 0 : index
    %c0_41 = arith.constant 0 : index
    %75 = vector.load %arg15[%c0_40, %c0_41] : memref<1x32xf32, #tpu.memory_space<vmem>>, vector<1x32xf32>
    %76 = vector.broadcast %75 : vector<1x32xf32> to vector<8x32xf32>
    %77 = arith.addf %74, %76 : vector<8x32xf32>
    %78 = arith.addf %77, %35 : vector<8x32xf32>
    %c0_42 = arith.constant 0 : index
    %c0_43 = arith.constant 0 : index
    %c0_44 = arith.constant 0 : index
    %79 = vector.load %arg16[%c0_42, %c0_43, %c0_44] : memref<1x8x32xf32, #tpu.memory_space<vmem>>, vector<1x8x32xf32>
    %80 = vector.shape_cast %79 : vector<1x8x32xf32> to vector<8x32xf32>
    %81 = vector.shape_cast %78 : vector<8x32xf32> to vector<1x8x32xf32>
    tpu.vector_store %arg16[%c0_42, %c0_43, %c0_44], %81 {strides = array<i32>} : memref<1x8x32xf32, #tpu.memory_space<vmem>>, vector<1x8x32xf32>,
    return
  }
  func.func @transform_0(%arg0: i32, %arg1: i32) -> (i32, i32, i32) {
    %c0_i32 = arith.constant 0 : i32
    %c0_i32_0 = arith.constant 0 : i32
    %c0_i32_1 = arith.constant 0 : i32
    return %arg0, %c0_i32, %c0_i32_0 : i32, i32, i32
  }
  func.func @transform_1(%arg0: i32, %arg1: i32) -> (i32, i32) {
    %c0_i32 = arith.constant 0 : i32
    %c0_i32_0 = arith.constant 0 : i32
    %c0_i32_1 = arith.constant 0 : i32
    return %c0_i32, %c0_i32_0 : i32, i32
  }
  func.func @transform_2(%arg0: i32, %arg1: i32) -> (i32, i32) {
    %c0_i32 = arith.constant 0 : i32
    %c0_i32_0 = arith.constant 0 : i32
    %c0_i32_1 = arith.constant 0 : i32
    return %c0_i32, %c0_i32_0 : i32, i32
  }
  func.func @transform_3(%arg0: i32, %arg1: i32) -> (i32, i32) {
    %c0_i32 = arith.constant 0 : i32
    %c0_i32_0 = arith.constant 0 : i32
    %c0_i32_1 = arith.constant 0 : i32
    return %c0_i32, %c0_i32_0 : i32, i32
  }
  func.func @transform_4(%arg0: i32, %arg1: i32) -> (i32, i32) {
    %c0_i32 = arith.constant 0 : i32
    %c0_i32_0 = arith.constant 0 : i32
    %c0_i32_1 = arith.constant 0 : i32
    return %c0_i32, %c0_i32_0 : i32, i32
  }
  func.func @transform_5(%arg0: i32, %arg1: i32) -> (i32, i32) {
    %c0_i32 = arith.constant 0 : i32
    %c0_i32_0 = arith.constant 0 : i32
    %c0_i32_1 = arith.constant 0 : i32
    return %c0_i32, %c0_i32_0 : i32, i32
  }
  func.func @transform_6(%arg0: i32, %arg1: i32) -> (i32, i32) {
    %c0_i32 = arith.constant 0 : i32
    %c0_i32_0 = arith.constant 0 : i32
    %c0_i32_1 = arith.constant 0 : i32
    return %c0_i32, %c0_i32_0 : i32, i32
  }
  func.func @transform_7(%arg0: i32, %arg1: i32) -> (i32, i32) {
    %c0_i32 = arith.constant 0 : i32
    %c0_i32_0 = arith.constant 0 : i32
    %c0_i32_1 = arith.constant 0 : i32
    return %c0_i32, %c0_i32_0 : i32, i32
  }
  func.func @transform_8(%arg0: i32, %arg1: i32) -> (i32, i32) {
    %c0_i32 = arith.constant 0 : i32
    %c0_i32_0 = arith.constant 0 : i32
    %c0_i32_1 = arith.constant 0 : i32
    return %c0_i32, %c0_i32_0 : i32, i32
  }
  func.func @transform_9(%arg0: i32, %arg1: i32) -> (i32, i32) {
    %c0_i32 = arith.constant 0 : i32
    %c0_i32_0 = arith.constant 0 : i32
    %c0_i32_1 = arith.constant 0 : i32
    return %c0_i32, %c0_i32_0 : i32, i32
  }
  func.func @transform_10(%arg0: i32, %arg1: i32) -> (i32, i32) {
    %c0_i32 = arith.constant 0 : i32
    %c0_i32_0 = arith.constant 0 : i32
    %c0_i32_1 = arith.constant 0 : i32
    return %c0_i32, %c0_i32_0 : i32, i32
  }
  func.func @transform_11(%arg0: i32, %arg1: i32) -> (i32, i32) {
    %c0_i32 = arith.constant 0 : i32
    %c0_i32_0 = arith.constant 0 : i32
    %c0_i32_1 = arith.constant 0 : i32
    return %c0_i32, %c0_i32_0 : i32, i32
  }
  func.func @transform_12(%arg0: i32, %arg1: i32) -> (i32, i32) {
    %c0_i32 = arith.constant 0 : i32
    %c0_i32_0 = arith.constant 0 : i32
    %c0_i32_1 = arith.constant 0 : i32
    return %c0_i32, %c0_i32_0 : i32, i32
  }
  func.func @transform_13(%arg0: i32, %arg1: i32) -> (i32, i32) {
    %c0_i32 = arith.constant 0 : i32
    %c0_i32_0 = arith.constant 0 : i32
    %c0_i32_1 = arith.constant 0 : i32
    return %c0_i32, %c0_i32_0 : i32, i32
  }
  func.func @transform_14(%arg0: i32, %arg1: i32) -> (i32, i32, i32) {
    %c0_i32 = arith.constant 0 : i32
    %c0_i32_0 = arith.constant 0 : i32
    return %arg0, %arg1, %c0_i32 : i32, i32, i32
  }
}

</mosaic_0001>

<llo_original>
// kernel: tpu_custom_call.1
$region0: #{tpu_custom_call.1}
  #allocation0 [shape = 'u32[]', space=smem, size = 0x4, offset = 0x4, fixed_abs, tag = 'smem constant byte address 0x4 - core index']
  #allocation1 [shape = 'u32[144,128]{1,0:T(1,128)}', space=vmem, size = 0x12000, scoped, tag = 'internal scratch']
  %s0 = inlined_call_operand.hbm [shape: f32[8,128], index: 0, kind: input, shape index: {}]
  %s1 = inlined_call_operand.hbm [shape: f32[8,128], index: 1, kind: output, shape index: {}]
  %s2 = sld [smem:[#allocation0]]
  $region41: #{tpu_custom_call.1} parent=0
    _
  %s4 = ssub.s32 1, %s2
  %s5 = scalar_select 0, %s4, %s2
  $region1: #{tpu_custom_call.1} parent=0
    #allocation2 [shape = 'u8[4096]{0}', space=vmem, size = 0x1000, scoped, tag = 'input window, operand 0, single buffered']
    #allocation3 [shape = 's32[2]{0}', space=sflag, size = 0x8, scoped, tag = 'scoped memory for tpu_custom_call.1']
    #allocation4 [shape = 's32[2]{0}', space=sflag, size = 0x8, scoped, tag = 'scoped memory for tpu_custom_call.1']
    #allocation5 [shape = 'u8[4096]{0}', space=vmem, size = 0x1000, scoped, tag = 'output window, operand 0, single buffered']
    %6 = vsyncpa [#allocation3], 0
    %7 = vsyncpa [#allocation4], 0
    loop: start=0, step=1, limit=4
    $region2: #{tpu_custom_call.1} parent=1 // loop_pre_header
      _
    $region3: #{tpu_custom_call.1} parent=1 // loop_header
      %s9 = sphi 0, %s13
      %p10 = scmp.ge.s32.totalorder %s9, 4
      %s17 = sphi 0, %s17
      %s19 = sphi 0, %s17
      %s20 = sphi 0, %s19
      %s34 = sphi 0, %s20
      %s38 = sphi 0, %s38
      %s40 = sphi 0, %s38
      %s41 = sphi 0, %s40
      %s55 = sphi 0, %s41
    $region4: #{tpu_custom_call.1} parent=1 // loop_header_branch
      %12 = sbr.rel (%p10) target = $region8
    $region5: #{tpu_custom_call.1} parent=1 // loop_body
      %s14 = ssub.s32 %s9, 1
      %s15 = ssub.s32 %s9, 2
      %s16 = sadd.s32 %s9, 1
      %s18 = sadd.s32 %s17, 1
      %p21 = scmp.eq.s32.totalorder %s9, 1
      %p22 = scmp.ne.s32.totalorder %s17, %s19
      %p23 = scmp.eq.s32.totalorder %s9, 0
      %p24 = por %p22, %p23
      %p25 = scmp.ne.s32.totalorder %s17, %s19
      %p26 = scmp.eq.s32.totalorder %s14, 1
      %p27 = por %p25, %p26
      %p28 = scmp.ne.s32.totalorder %s19, %s20
      %p29 = scmp.eq.s32.totalorder %s14, 0
      %p30 = por %p28, %p29
      %p31 = scmp.ne.s32.totalorder %s19, %s20
      %p32 = scmp.eq.s32.totalorder %s15, 1
      %p33 = por %p31, %p32
      %p35 = scmp.ne.s32.totalorder %s20, %s34
      %p36 = scmp.eq.s32.totalorder %s15, 0
      %p37 = por %p35, %p36
      %s39 = sadd.s32 %s38, 1
      %p42 = scmp.eq.s32.totalorder %s9, 1
      %p43 = scmp.ne.s32.totalorder %s38, %s40
      %p44 = scmp.eq.s32.totalorder %s9, 0
      %p45 = por %p43, %p44
      %p46 = scmp.ne.s32.totalorder %s38, %s40
      %p47 = scmp.eq.s32.totalorder %s14, 1
      %p48 = por %p46, %p47
      %p49 = scmp.ne.s32.totalorder %s40, %s41
      %p50 = scmp.eq.s32.totalorder %s14, 0
      %p51 = por %p49, %p50
      %p52 = scmp.ne.s32.totalorder %s40, %s41
      %p53 = scmp.eq.s32.totalorder %s15, 1
      %p54 = por %p52, %p53
      %p56 = scmp.ne.s32.totalorder %s41, %s55
      %p57 = scmp.eq.s32.totalorder %s15, 0
      %p58 = por %p56, %p57
      %p59 = scmp.le.s32.totalorder 1, %s9
      %p60 = scmp.lt.s32.totalorder %s9, 3
      %p61 = pnand %p59, %p60
      %p62 = pneg %p61
      // Predicated region
      $region9: #{tpu_custom_call.1} parent=5 // pred_check
        _
      $region10: #{tpu_custom_call.1} parent=5 // pred_check_branch
        %64 = sbr.rel (%p61) target = $region12
      $region11: #{tpu_custom_call.1} parent=5 // pred_region
        %s65 = ssub.s32 %s9, 1
        // Predicated region
        $region13: #{tpu_custom_call.1} parent=11 // pred_check
          %p66 = pneg %p30
        $region14: #{tpu_custom_call.1} parent=11 // pred_check_branch
          %68 = sbr.rel (%p66) target = $region16
        $region15: #{tpu_custom_call.1} parent=11 // pred_region
          %s70 = ssub.s32 128, 128
          %71 = vsyncadd [#allocation3], %s70
          %s73 = sshll.u32 [#allocation2], 4
          %s74 = int_to_ptr.vmem [resolvable:$true] %s73
          %76 = dma.hbm_to_vmem [thread:$0]  %s0, 128, %s74, [#allocation3]
        $region16: #{tpu_custom_call.1} parent=11 // pred_fallthru
          _
      $region12: #{tpu_custom_call.1} parent=5 // pred_fallthru
        _
      %p77 = scmp.lt.s32.totalorder %s9, 2
      // Predicated region
      $region17: #{tpu_custom_call.1} parent=5 // pred_check
        %p78 = pneg %p77
      $region18: #{tpu_custom_call.1} parent=5 // pred_check_branch
        %80 = sbr.rel (%p78) target = $region20
      $region19: #{tpu_custom_call.1} parent=5 // pred_region
        _
      $region20: #{tpu_custom_call.1} parent=5 // pred_fallthru
        _
      %p81 = scmp.le.s32.totalorder 1, %s9
      %p82 = scmp.lt.s32.totalorder %s9, 3
      %p83 = pnand %p81, %p82
      %p84 = pneg %p83
      // Predicated region
      $region21: #{tpu_custom_call.1} parent=5 // pred_check
        _
      $region22: #{tpu_custom_call.1} parent=5 // pred_check_branch
        %86 = sbr.rel (%p83) target = $region24
      $region23: #{tpu_custom_call.1} parent=5 // pred_region
        %s87 = ssub.s32 %s9, 1
        // Predicated region
        $region25: #{tpu_custom_call.1} parent=23 // pred_check
          %p88 = pneg %p30
        $region26: #{tpu_custom_call.1} parent=23 // pred_check_branch
          %90 = sbr.rel (%p88) target = $region28
        $region27: #{tpu_custom_call.1} parent=23 // pred_region
          %91 = dma.done [#allocation3], 128
        $region28: #{tpu_custom_call.1} parent=23 // pred_fallthru
          _
        %p92 = pneg %p30
        %p93 = pneg %p27
        %p94 = pneg %p51
        %p95 = pneg %p48
        %v96 = vld [vmem:[#allocation2] sm:$0xff]
        %97 = vst [vmem:[#allocation5] sm:$0xff] %v96
        // Predicated region
        $region29: #{tpu_custom_call.1} parent=23 // pred_check
          %p98 = pneg %p48
        $region30: #{tpu_custom_call.1} parent=23 // pred_check_branch
          %100 = sbr.rel (%p98) target = $region32
        $region31: #{tpu_custom_call.1} parent=23 // pred_region
          %s102 = ssub.s32 128, 128
          %103 = vsyncadd [#allocation4], %s102
          %s105 = sshll.u32 [#allocation5], 4
          %s106 = int_to_ptr.vmem [resolvable:$true] %s105
          %108 = dma.vmem_to_hbm [thread:$0]  %s106, 128, %s1, [#allocation4]
        $region32: #{tpu_custom_call.1} parent=23 // pred_fallthru
          _
        // Predicated region
        $region33: #{tpu_custom_call.1} parent=23 // pred_check
          %p109 = pneg %p48
        $region34: #{tpu_custom_call.1} parent=23 // pred_check_branch
          %111 = sbr.rel (%p109) target = $region36
        $region35: #{tpu_custom_call.1} parent=23 // pred_region
          %112 = dma.done [#allocation4], 128
        $region36: #{tpu_custom_call.1} parent=23 // pred_fallthru
          _
      $region24: #{tpu_custom_call.1} parent=5 // pred_fallthru
        _
      %p113 = scmp.le.s32.totalorder 2, %s9
      // Predicated region
      $region37: #{tpu_custom_call.1} parent=5 // pred_check
        %p114 = pneg %p113
      $region38: #{tpu_custom_call.1} parent=5 // pred_check_branch
        %116 = sbr.rel (%p114) target = $region40
      $region39: #{tpu_custom_call.1} parent=5 // pred_region
        %s117 = ssub.s32 %s9, 2
      $region40: #{tpu_custom_call.1} parent=5 // pred_fallthru
        _
    $region6: #{tpu_custom_call.1} parent=1 // loop_footer
      %s13 = sadd.s32 1, %s9
    $region7: #{tpu_custom_call.1} parent=1 // loop_footer_branch
      %8 = sbr.rel target = $region3
    $region8: #{tpu_custom_call.1} parent=1 // loop_exit
      _
    %118 = vsyncpa [#allocation3], 1
    %s119 = scalar_lea.sflag [#allocation3], 1
    %120 = vsyncpa %s119, 1
    %121 = vsyncpa [#allocation4], 1
    %s122 = scalar_lea.sflag [#allocation4], 1
    %123 = vsyncpa %s122, 1

// kernel: tpu_custom_call.1
$region0: #{tpu_custom_call.1}
  #allocation0 [shape = 'u32[]', space=smem, size = 0x4, offset = 0x4, fixed_abs, tag = 'smem constant byte address 0x4 - core index']
  #allocation1 [shape = 'u32[144,128]{1,0:T(1,128)}', space=vmem, size = 0x12000, scoped, tag = 'internal scratch']
  #allocation2 [shape = 'f32[8,32]{1,0:T(8,128)}', space=vmem, size = 0x1000, scoped, tag = 'scratch operand']
  #allocation3 [shape = 'f32[4,8,16]{2,1,0:T(8,128)}', space=vmem, size = 0x4000, scoped, tag = 'scratch operand']
  #allocation4 [shape = 'f32[4,8,16]{2,1,0:T(8,128)}', space=vmem, size = 0x4000, scoped, tag = 'scratch operand']
  %s0 = inlined_call_operand.hbm [shape: f32[2,8,32], index: 0, kind: input, shape index: {}]
  %s1 = inlined_call_operand.hbm [shape: f32[1,32], index: 1, kind: input, shape index: {}]
  %s2 = inlined_call_operand.hbm [shape: f32[1,32], index: 2, kind: input, shape index: {}]
  %s3 = inlined_call_operand.hbm [shape: f32[32,64], index: 3, kind: input, shape index: {}]
  %s4 = inlined_call_operand.hbm [shape: f32[32,64], index: 4, kind: input, shape index: {}]
  %s5 = inlined_call_operand.hbm [shape: f32[32,64], index: 5, kind: input, shape index: {}]
  %s6 = inlined_call_operand.hbm [shape: f32[64,32], index: 6, kind: input, shape index: {}]
  %s7 = inlined_call_operand.hbm [shape: f32[1,32], index: 7, kind: input, shape index: {}]
  %s8 = inlined_call_operand.hbm [shape: f32[1,32], index: 8, kind: input, shape index: {}]
  %s9 = inlined_call_operand.hbm [shape: f32[1,32], index: 9, kind: input, shape index: {}]
  %s10 = inlined_call_operand.hbm [shape: f32[32,64], index: 10, kind: input, shape index: {}]
  %s11 = inlined_call_operand.hbm [shape: f32[1,64], index: 11, kind: input, shape index: {}]
  %s12 = inlined_call_operand.hbm [shape: f32[64,32], index: 12, kind: input, shape index: {}]
  %s13 = inlined_call_operand.hbm [shape: f32[1,32], index: 13, kind: input, shape index: {}]
  %s14 = inlined_call_operand.hbm [shape: f32[2,8,32], index: 14, kind: output, shape index: {}]
  %s15 = sld [smem:[#allocation0]]
  $region149: #{tpu_custom_call.1} parent=0
    _
  %s17 = ssub.s32 1, %s15
  %s18 = scalar_select 0, %s17, %s15
  $region1: #{tpu_custom_call.1} parent=0
    #allocation5 [shape = 'u8[8192]{0}', space=vmem, size = 0x2000, scoped, tag = 'input window, operand 0']
    #allocation6 [shape = 's32[2]{0}', space=sflag, size = 0x8, scoped, tag = 'scoped memory for tpu_custom_call.1']
    #allocation7 [shape = 's32[2]{0}', space=sflag, size = 0x8, scoped, tag = 'scoped memory for tpu_custom_call.1']
    #allocation8 [shape = 'u8[512]{0}', space=vmem, size = 0x400, scoped, tag = 'input window, operand 1, single buffered']
    #allocation9 [shape = 's32[1]{0}', space=sflag, size = 0x4, scoped, tag = 'scoped memory for tpu_custom_call.1']
    #allocation10 [shape = 'u8[512]{0}', space=vmem, size = 0x400, scoped, tag = 'input window, operand 2, single buffered']
    #allocation11 [shape = 'u8[16384]{0}', space=vmem, size = 0x4000, scoped, tag = 'input window, operand 3, single buffered']
    #allocation12 [shape = 's32[1]{0}', space=sflag, size = 0x4, scoped, tag = 'scoped memory for tpu_custom_call.1']
    #allocation13 [shape = 'u8[16384]{0}', space=vmem, size = 0x4000, scoped, tag = 'input window, operand 4, single buffered']
    #allocation14 [shape = 'u8[16384]{0}', space=vmem, size = 0x4000, scoped, tag = 'input window, operand 5, single buffered']
    #allocation15 [shape = 's32[1]{0}', space=sflag, size = 0x4, scoped, tag = 'scoped memory for tpu_custom_call.1']
    #allocation16 [shape = 'u8[32768]{0}', space=vmem, size = 0x8000, scoped, tag = 'input window, operand 6, single buffered']
    #allocation17 [shape = 'u8[512]{0}', space=vmem, size = 0x400, scoped, tag = 'input window, operand 7, single buffered']
    #allocation18 [shape = 's32[1]{0}', space=sflag, size = 0x4, scoped, tag = 'scoped memory for tpu_custom_call.1']
    #allocation19 [shape = 'u8[512]{0}', space=vmem, size = 0x400, scoped, tag = 'input window, operand 8, single buffered']
    #allocation20 [shape = 'u8[512]{0}', space=vmem, size = 0x400, scoped, tag = 'input window, operand 9, single buffered']
    #allocation21 [shape = 's32[1]{0}', space=sflag, size = 0x4, scoped, tag = 'scoped memory for tpu_custom_call.1']
    #allocation22 [shape = 'u8[16384]{0}', space=vmem, size = 0x4000, scoped, tag = 'input window, operand 10, single buffered']
    #allocation23 [shape = 'u8[512]{0}', space=vmem, size = 0x400, scoped, tag = 'input window, operand 11, single buffered']
    #allocation24 [shape = 's32[1]{0}', space=sflag, size = 0x4, scoped, tag = 'scoped memory for tpu_custom_call.1']
    #allocation25 [shape = 'u8[32768]{0}', space=vmem, size = 0x8000, scoped, tag = 'input window, operand 12, single buffered']
    #allocation26 [shape = 'u8[512]{0}', space=vmem, size = 0x400, scoped, tag = 'input window, operand 13, single buffered']
    #allocation27 [shape = 's32[1]{0}', space=sflag, size = 0x4, scoped, tag = 'scoped memory for tpu_custom_call.1']
    #allocation28 [shape = 'u8[8192]{0}', space=vmem, size = 0x2000, scoped, tag = 'output window, operand 0']
    %19 = vsyncpa [#allocation6], 0
    %s20 = scalar_lea.sflag [#allocation6], 1
    %21 = vsyncpa %s20, 0
    %22 = vsyncpa [#allocation9], 0
    %23 = vsyncpa [#allocation12], 0
    %24 = vsyncpa [#allocation15], 0
    %25 = vsyncpa [#allocation18], 0
    %26 = vsyncpa [#allocation21], 0
    %27 = vsyncpa [#allocation24], 0
    %28 = vsyncpa [#allocation27], 0
    %29 = vsyncpa [#allocation7], 0
    %s30 = scalar_lea.sflag [#allocation7], 1
    %31 = vsyncpa %s30, 0
    loop: start=0, step=1, limit=4
    $region2: #{tpu_custom_call.1} parent=1 // loop_pre_header
      _
    $region3: #{tpu_custom_call.1} parent=1 // loop_header
      %s33 = sphi 0, %s37
      %p34 = scmp.ge.s32.totalorder %s33, 4
      %s40 = sphi 0, %s52
      %s41 = sphi 0, %s48
      %s42 = sphi 0, %s40
      %s43 = sphi 0, %s41
      %s44 = sphi 0, %s42
      %s45 = sphi 0, %s43
      %s55 = sphi 0, %s57
      %s58 = sphi 0, %s55
      %s59 = sphi 0, %s58
      %s75 = sphi 0, %s59
      %s79 = sphi 0, %s79
      %s81 = sphi 0, %s79
      %s82 = sphi 0, %s81
      %s96 = sphi 0, %s82
      %s100 = sphi 0, %s100
      %s102 = sphi 0, %s100
      %s103 = sphi 0, %s102
      %s117 = sphi 0, %s103
      %s121 = sphi 0, %s121
      %s123 = sphi 0, %s121
      %s124 = sphi 0, %s123
      %s138 = sphi 0, %s124
      %s142 = sphi 0, %s142
      %s144 = sphi 0, %s142
      %s145 = sphi 0, %s144
      %s159 = sphi 0, %s145
      %s163 = sphi 0, %s163
      %s165 = sphi 0, %s163
      %s166 = sphi 0, %s165
      %s180 = sphi 0, %s166
      %s184 = sphi 0, %s184
      %s186 = sphi 0, %s184
      %s187 = sphi 0, %s186
      %s201 = sphi 0, %s187
      %s205 = sphi 0, %s205
      %s207 = sphi 0, %s205
      %s208 = sphi 0, %s207
      %s222 = sphi 0, %s208
      %s226 = sphi 0, %s226
      %s228 = sphi 0, %s226
      %s229 = sphi 0, %s228
      %s243 = sphi 0, %s229
      %s247 = sphi 0, %s247
      %s249 = sphi 0, %s247
      %s250 = sphi 0, %s249
      %s264 = sphi 0, %s250
      %s268 = sphi 0, %s268
      %s270 = sphi 0, %s268
      %s271 = sphi 0, %s270
      %s285 = sphi 0, %s271
      %s289 = sphi 0, %s289
      %s291 = sphi 0, %s289
      %s292 = sphi 0, %s291
      %s306 = sphi 0, %s292
      %s310 = sphi 0, %s310
      %s312 = sphi 0, %s310
      %s313 = sphi 0, %s312
      %s327 = sphi 0, %s313
      %s331 = sphi 0, %s331
      %s333 = sphi 0, %s331
      %s334 = sphi 0, %s333
      %s348 = sphi 0, %s334
      %s356 = sphi 0, %s358
      %s359 = sphi 0, %s356
      %s360 = sphi 0, %s359
      %s376 = sphi 0, %s360
    $region4: #{tpu_custom_call.1} parent=1 // loop_header_branch
      %36 = sbr.rel (%p34) target = $region8
    $region5: #{tpu_custom_call.1} parent=1 // loop_body
      %s38 = ssub.s32 %s33, 1
      %s39 = ssub.s32 %s33, 2
      %s46 = sadd.s32 1, %s41
      %p47 = scmp.ge.s32.totalorder %s46, 1
      %s48 = scalar_select %p47, 0, %s46
      %s49 = sadd.s32 1, %s40
      %s50 = scalar_select %p47, %s49, %s40
      %p51 = scmp.ge.s32.totalorder %s50, 2
      %s52 = scalar_select %p51, 0, %s50
      %s53 = ssub.s32 %s40, %s52
      %p54 = scmp.eq.s32.totalorder %s53, 0
      %s56 = sadd.s32 %s55, 1
      %s57 = scalar_select %p54, %s55, %s56
      %p60 = pneg %p54
      %p61 = scmp.eq.s32.totalorder %s33, 1
      %p62 = por %p60, %p61
      %p63 = scmp.ne.s32.totalorder %s55, %s58
      %p64 = scmp.eq.s32.totalorder %s33, 0
      %p65 = por %p63, %p64
      %p66 = scmp.ne.s32.totalorder %s55, %s58
      %p67 = scmp.eq.s32.totalorder %s38, 1
      %p68 = por %p66, %p67
      %p69 = scmp.ne.s32.totalorder %s58, %s59
      %p70 = scmp.eq.s32.totalorder %s38, 0
      %p71 = por %p69, %p70
      %p72 = scmp.ne.s32.totalorder %s58, %s59
      %p73 = scmp.eq.s32.totalorder %s39, 1
      %p74 = por %p72, %p73
      %p76 = scmp.ne.s32.totalorder %s59, %s75
      %p77 = scmp.eq.s32.totalorder %s39, 0
      %p78 = por %p76, %p77
      %s80 = sadd.s32 %s79, 1
      %p83 = scmp.eq.s32.totalorder %s33, 1
      %p84 = scmp.ne.s32.totalorder %s79, %s81
      %p85 = scmp.eq.s32.totalorder %s33, 0
      %p86 = por %p84, %p85
      %p87 = scmp.ne.s32.totalorder %s79, %s81
      %p88 = scmp.eq.s32.totalorder %s38, 1
      %p89 = por %p87, %p88
      %p90 = scmp.ne.s32.totalorder %s81, %s82
      %p91 = scmp.eq.s32.totalorder %s38, 0
      %p92 = por %p90, %p91
      %p93 = scmp.ne.s32.totalorder %s81, %s82
      %p94 = scmp.eq.s32.totalorder %s39, 1
      %p95 = por %p93, %p94
      %p97 = scmp.ne.s32.totalorder %s82, %s96
      %p98 = scmp.eq.s32.totalorder %s39, 0
      %p99 = por %p97, %p98
      %s101 = sadd.s32 %s100, 1
      %p104 = scmp.eq.s32.totalorder %s33, 1
      %p105 = scmp.ne.s32.totalorder %s100, %s102
      %p106 = scmp.eq.s32.totalorder %s33, 0
      %p107 = por %p105, %p106
      %p108 = scmp.ne.s32.totalorder %s100, %s102
      %p109 = scmp.eq.s32.totalorder %s38, 1
      %p110 = por %p108, %p109
      %p111 = scmp.ne.s32.totalorder %s102, %s103
      %p112 = scmp.eq.s32.totalorder %s38, 0
      %p113 = por %p111, %p112
      %p114 = scmp.ne.s32.totalorder %s102, %s103
      %p115 = scmp.eq.s32.totalorder %s39, 1
      %p116 = por %p114, %p115
      %p118 = scmp.ne.s32.totalorder %s103, %s117
      %p119 = scmp.eq.s32.totalorder %s39, 0
      %p120 = por %p118, %p119
      %s122 = sadd.s32 %s121, 1
      %p125 = scmp.eq.s32.totalorder %s33, 1
      %p126 = scmp.ne.s32.totalorder %s121, %s123
      %p127 = scmp.eq.s32.totalorder %s33, 0
      %p128 = por %p126, %p127
      %p129 = scmp.ne.s32.totalorder %s121, %s123
      %p130 = scmp.eq.s32.totalorder %s38, 1
      %p131 = por %p129, %p130
      %p132 = scmp.ne.s32.totalorder %s123, %s124
      %p133 = scmp.eq.s32.totalorder %s38, 0
      %p134 = por %p132, %p133
      %p135 = scmp.ne.s32.totalorder %s123, %s124
      %p136 = scmp.eq.s32.totalorder %s39, 1
      %p137 = por %p135, %p136
      %p139 = scmp.ne.s32.totalorder %s124, %s138
      %p140 = scmp.eq.s32.totalorder %s39, 0
      %p141 = por %p139, %p140
      %s143 = sadd.s32 %s142, 1
      %p146 = scmp.eq.s32.totalorder %s33, 1
      %p147 = scmp.ne.s32.totalorder %s142, %s144
      %p148 = scmp.eq.s32.totalorder %s33, 0
      %p149 = por %p147, %p148
      %p150 = scmp.ne.s32.totalorder %s142, %s144
      %p151 = scmp.eq.s32.totalorder %s38, 1
      %p152 = por %p150, %p151
      %p153 = scmp.ne.s32.totalorder %s144, %s145
      %p154 = scmp.eq.s32.totalorder %s38, 0
      %p155 = por %p153, %p154
      %p156 = scmp.ne.s32.totalorder %s144, %s145
      %p157 = scmp.eq.s32.totalorder %s39, 1
      %p158 = por %p156, %p157
      %p160 = scmp.ne.s32.totalorder %s145, %s159
      %p161 = scmp.eq.s32.totalorder %s39, 0
      %p162 = por %p160, %p161
      %s164 = sadd.s32 %s163, 1
      %p167 = scmp.eq.s32.totalorder %s33, 1
      %p168 = scmp.ne.s32.totalorder %s163, %s165
      %p169 = scmp.eq.s32.totalorder %s33, 0
      %p170 = por %p168, %p169
      %p171 = scmp.ne.s32.totalorder %s163, %s165
      %p172 = scmp.eq.s32.totalorder %s38, 1
      %p173 = por %p171, %p172
      %p174 = scmp.ne.s32.totalorder %s165, %s166
      %p175 = scmp.eq.s32.totalorder %s38, 0
      %p176 = por %p174, %p175
      %p177 = scmp.ne.s32.totalorder %s165, %s166
      %p178 = scmp.eq.s32.totalorder %s39, 1
      %p179 = por %p177, %p178
      %p181 = scmp.ne.s32.totalorder %s166, %s180
      %p182 = scmp.eq.s32.totalorder %s39, 0
      %p183 = por %p181, %p182
      %s185 = sadd.s32 %s184, 1
      %p188 = scmp.eq.s32.totalorder %s33, 1
      %p189 = scmp.ne.s32.totalorder %s184, %s186
      %p190 = scmp.eq.s32.totalorder %s33, 0
      %p191 = por %p189, %p190
      %p192 = scmp.ne.s32.totalorder %s184, %s186
      %p193 = scmp.eq.s32.totalorder %s38, 1
      %p194 = por %p192, %p193
      %p195 = scmp.ne.s32.totalorder %s186, %s187
      %p196 = scmp.eq.s32.totalorder %s38, 0
      %p197 = por %p195, %p196
      %p198 = scmp.ne.s32.totalorder %s186, %s187
      %p199 = scmp.eq.s32.totalorder %s39, 1
      %p200 = por %p198, %p199
      %p202 = scmp.ne.s32.totalorder %s187, %s201
      %p203 = scmp.eq.s32.totalorder %s39, 0
      %p204 = por %p202, %p203
      %s206 = sadd.s32 %s205, 1
      %p209 = scmp.eq.s32.totalorder %s33, 1
      %p210 = scmp.ne.s32.totalorder %s205, %s207
      %p211 = scmp.eq.s32.totalorder %s33, 0
      %p212 = por %p210, %p211
      %p213 = scmp.ne.s32.totalorder %s205, %s207
      %p214 = scmp.eq.s32.totalorder %s38, 1
      %p215 = por %p213, %p214
      %p216 = scmp.ne.s32.totalorder %s207, %s208
      %p217 = scmp.eq.s32.totalorder %s38, 0
      %p218 = por %p216, %p217
      %p219 = scmp.ne.s32.totalorder %s207, %s208
      %p220 = scmp.eq.s32.totalorder %s39, 1
      %p221 = por %p219, %p220
      %p223 = scmp.ne.s32.totalorder %s208, %s222
      %p224 = scmp.eq.s32.totalorder %s39, 0
      %p225 = por %p223, %p224
      %s227 = sadd.s32 %s226, 1
      %p230 = scmp.eq.s32.totalorder %s33, 1
      %p231 = scmp.ne.s32.totalorder %s226, %s228
      %p232 = scmp.eq.s32.totalorder %s33, 0
      %p233 = por %p231, %p232
      %p234 = scmp.ne.s32.totalorder %s226, %s228
      %p235 = scmp.eq.s32.totalorder %s38, 1
      %p236 = por %p234, %p235
      %p237 = scmp.ne.s32.totalorder %s228, %s229
      %p238 = scmp.eq.s32.totalorder %s38, 0
      %p239 = por %p237, %p238
      %p240 = scmp.ne.s32.totalorder %s228, %s229
      %p241 = scmp.eq.s32.totalorder %s39, 1
      %p242 = por %p240, %p241
      %p244 = scmp.ne.s32.totalorder %s229, %s243
      %p245 = scmp.eq.s32.totalorder %s39, 0
      %p246 = por %p244, %p245
      %s248 = sadd.s32 %s247, 1
      %p251 = scmp.eq.s32.totalorder %s33, 1
      %p252 = scmp.ne.s32.totalorder %s247, %s249
      %p253 = scmp.eq.s32.totalorder %s33, 0
      %p254 = por %p252, %p253
      %p255 = scmp.ne.s32.totalorder %s247, %s249
      %p256 = scmp.eq.s32.totalorder %s38, 1
      %p257 = por %p255, %p256
      %p258 = scmp.ne.s32.totalorder %s249, %s250
      %p259 = scmp.eq.s32.totalorder %s38, 0
      %p260 = por %p258, %p259
      %p261 = scmp.ne.s32.totalorder %s249, %s250
      %p262 = scmp.eq.s32.totalorder %s39, 1
      %p263 = por %p261, %p262
      %p265 = scmp.ne.s32.totalorder %s250, %s264
      %p266 = scmp.eq.s32.totalorder %s39, 0
      %p267 = por %p265, %p266
      %s269 = sadd.s32 %s268, 1
      %p272 = scmp.eq.s32.totalorder %s33, 1
      %p273 = scmp.ne.s32.totalorder %s268, %s270
      %p274 = scmp.eq.s32.totalorder %s33, 0
      %p275 = por %p273, %p274
      %p276 = scmp.ne.s32.totalorder %s268, %s270
      %p277 = scmp.eq.s32.totalorder %s38, 1
      %p278 = por %p276, %p277
      %p279 = scmp.ne.s32.totalorder %s270, %s271
      %p280 = scmp.eq.s32.totalorder %s38, 0
      %p281 = por %p279, %p280
      %p282 = scmp.ne.s32.totalorder %s270, %s271
      %p283 = scmp.eq.s32.totalorder %s39, 1
      %p284 = por %p282, %p283
      %p286 = scmp.ne.s32.totalorder %s271, %s285
      %p287 = scmp.eq.s32.totalorder %s39, 0
      %p288 = por %p286, %p287
      %s290 = sadd.s32 %s289, 1
      %p293 = scmp.eq.s32.totalorder %s33, 1
      %p294 = scmp.ne.s32.totalorder %s289, %s291
      %p295 = scmp.eq.s32.totalorder %s33, 0
      %p296 = por %p294, %p295
      %p297 = scmp.ne.s32.totalorder %s289, %s291
      %p298 = scmp.eq.s32.totalorder %s38, 1
      %p299 = por %p297, %p298
      %p300 = scmp.ne.s32.totalorder %s291, %s292
      %p301 = scmp.eq.s32.totalorder %s38, 0
      %p302 = por %p300, %p301
      %p303 = scmp.ne.s32.totalorder %s291, %s292
      %p304 = scmp.eq.s32.totalorder %s39, 1
      %p305 = por %p303, %p304
      %p307 = scmp.ne.s32.totalorder %s292, %s306
      %p308 = scmp.eq.s32.totalorder %s39, 0
      %p309 = por %p307, %p308
      %s311 = sadd.s32 %s310, 1
      %p314 = scmp.eq.s32.totalorder %s33, 1
      %p315 = scmp.ne.s32.totalorder %s310, %s312
      %p316 = scmp.eq.s32.totalorder %s33, 0
      %p317 = por %p315, %p316
      %p318 = scmp.ne.s32.totalorder %s310, %s312
      %p319 = scmp.eq.s32.totalorder %s38, 1
      %p320 = por %p318, %p319
      %p321 = scmp.ne.s32.totalorder %s312, %s313
      %p322 = scmp.eq.s32.totalorder %s38, 0
      %p323 = por %p321, %p322
      %p324 = scmp.ne.s32.totalorder %s312, %s313
      %p325 = scmp.eq.s32.totalorder %s39, 1
      %p326 = por %p324, %p325
      %p328 = scmp.ne.s32.totalorder %s313, %s327
      %p329 = scmp.eq.s32.totalorder %s39, 0
      %p330 = por %p328, %p329
      %s332 = sadd.s32 %s331, 1
      %p335 = scmp.eq.s32.totalorder %s33, 1
      %p336 = scmp.ne.s32.totalorder %s331, %s333
      %p337 = scmp.eq.s32.totalorder %s33, 0
      %p338 = por %p336, %p337
      %p339 = scmp.ne.s32.totalorder %s331, %s333
      %p340 = scmp.eq.s32.totalorder %s38, 1
      %p341 = por %p339, %p340
      %p342 = scmp.ne.s32.totalorder %s333, %s334
      %p343 = scmp.eq.s32.totalorder %s38, 0
      %p344 = por %p342, %p343
      %p345 = scmp.ne.s32.totalorder %s333, %s334
      %p346 = scmp.eq.s32.totalorder %s39, 1
      %p347 = por %p345, %p346
      %p349 = scmp.ne.s32.totalorder %s334, %s348
      %p350 = scmp.eq.s32.totalorder %s39, 0
      %p351 = por %p349, %p350
      %s352 = ssub.s32 %s40, %s52
      %s353 = ssub.s32 %s41, %s48
      %s354 = sor.u32 %s352, %s353
      %p355 = scmp.eq.s32.totalorder %s354, 0
      %s357 = sadd.s32 %s356, 1
      %s358 = scalar_select %p355, %s356, %s357
      %p361 = pneg %p355
      %p362 = scmp.eq.s32.totalorder %s33, 1
      %p363 = por %p361, %p362
      %p364 = scmp.ne.s32.totalorder %s356, %s359
      %p365 = scmp.eq.s32.totalorder %s33, 0
      %p366 = por %p364, %p365
      %p367 = scmp.ne.s32.totalorder %s356, %s359
      %p368 = scmp.eq.s32.totalorder %s38, 1
      %p369 = por %p367, %p368
      %p370 = scmp.ne.s32.totalorder %s359, %s360
      %p371 = scmp.eq.s32.totalorder %s38, 0
      %p372 = por %p370, %p371
      %p373 = scmp.ne.s32.totalorder %s359, %s360
      %p374 = scmp.eq.s32.totalorder %s39, 1
      %p375 = por %p373, %p374
      %p377 = scmp.ne.s32.totalorder %s360, %s376
      %p378 = scmp.eq.s32.totalorder %s39, 0
      %p379 = por %p377, %p378
      %p380 = scmp.le.s32.totalorder 1, %s33
      %p381 = scmp.lt.s32.totalorder %s33, 3
      %p382 = pnand %p380, %p381
      %p383 = pneg %p382
      // Predicated region
      $region9: #{tpu_custom_call.1} parent=5 // pred_check
        _
      $region10: #{tpu_custom_call.1} parent=5 // pred_check_branch
        %385 = sbr.rel (%p382) target = $region12
      $region11: #{tpu_custom_call.1} parent=5 // pred_region
        %s386 = ssub.s32 %s33, 1
        // Predicated region
        $region13: #{tpu_custom_call.1} parent=11 // pred_check
          %p387 = pneg %p92
        $region14: #{tpu_custom_call.1} parent=11 // pred_check_branch
          %389 = sbr.rel (%p387) target = $region16
        $region15: #{tpu_custom_call.1} parent=11 // pred_region
          %s391 = ssub.s32 16, 16
          %392 = vsyncadd [#allocation9], %s391
          %s394 = sshll.u32 [#allocation8], 4
          %s395 = int_to_ptr.vmem [resolvable:$true] %s394
          %397 = dma.hbm_to_vmem [thread:$0]  %s1, 16, %s395, [#allocation9]
        $region16: #{tpu_custom_call.1} parent=11 // pred_fallthru
          _
        // Predicated region
        $region17: #{tpu_custom_call.1} parent=11 // pred_check
          %p398 = pneg %p113
        $region18: #{tpu_custom_call.1} parent=11 // pred_check_branch
          %400 = sbr.rel (%p398) target = $region20
        $region19: #{tpu_custom_call.1} parent=11 // pred_region
          %s402 = ssub.s32 16, 16
          %403 = vsyncadd [#allocation9], %s402
          %s405 = sshll.u32 [#allocation10], 4
          %s406 = int_to_ptr.vmem [resolvable:$true] %s405
          %408 = dma.hbm_to_vmem [thread:$0]  %s2, 16, %s406, [#allocation9]
        $region20: #{tpu_custom_call.1} parent=11 // pred_fallthru
          _
        // Predicated region
        $region21: #{tpu_custom_call.1} parent=11 // pred_check
          %p409 = pneg %p134
        $region22: #{tpu_custom_call.1} parent=11 // pred_check_branch
          %411 = sbr.rel (%p409) target = $region24
        $region23: #{tpu_custom_call.1} parent=11 // pred_region
          %s413 = ssub.s32 512, 512
          %414 = vsyncadd [#allocation12], %s413
          %s415 = sshll.u32 [#allocation11], 4
          %s416 = int_to_ptr.vmem [resolvable:$true] %s415
          %421 = dma.hbm_to_vmem [thread:$0]  %s3, 512, %s416, [#allocation12], 128, 128, 8
        $region24: #{tpu_custom_call.1} parent=11 // pred_fallthru
          _
        // Predicated region
        $region25: #{tpu_custom_call.1} parent=11 // pred_check
          %p422 = pneg %p155
        $region26: #{tpu_custom_call.1} parent=11 // pred_check_branch
          %424 = sbr.rel (%p422) target = $region28
        $region27: #{tpu_custom_call.1} parent=11 // pred_region
          %s426 = ssub.s32 512, 512
          %427 = vsyncadd [#allocation12], %s426
          %s428 = sshll.u32 [#allocation13], 4
          %s429 = int_to_ptr.vmem [resolvable:$true] %s428
          %434 = dma.hbm_to_vmem [thread:$0]  %s4, 512, %s429, [#allocation12], 128, 128, 8
        $region28: #{tpu_custom_call.1} parent=11 // pred_fallthru
          _
        // Predicated region
        $region29: #{tpu_custom_call.1} parent=11 // pred_check
          %p435 = pneg %p176
        $region30: #{tpu_custom_call.1} parent=11 // pred_check_branch
          %437 = sbr.rel (%p435) target = $region32
        $region31: #{tpu_custom_call.1} parent=11 // pred_region
          %s439 = ssub.s32 512, 512
          %440 = vsyncadd [#allocation15], %s439
          %s441 = sshll.u32 [#allocation14], 4
          %s442 = int_to_ptr.vmem [resolvable:$true] %s441
          %447 = dma.hbm_to_vmem [thread:$0]  %s5, 512, %s442, [#allocation15], 128, 128, 8
        $region32: #{tpu_custom_call.1} parent=11 // pred_fallthru
          _
        // Predicated region
        $region33: #{tpu_custom_call.1} parent=11 // pred_check
          %p448 = pneg %p197
        $region34: #{tpu_custom_call.1} parent=11 // pred_check_branch
          %450 = sbr.rel (%p448) target = $region36
        $region35: #{tpu_custom_call.1} parent=11 // pred_region
          %s452 = ssub.s32 1024, 1024
          %453 = vsyncadd [#allocation15], %s452
          %s454 = sshll.u32 [#allocation16], 4
          %s455 = int_to_ptr.vmem [resolvable:$true] %s454
          %460 = dma.hbm_to_vmem [thread:$0]  %s6, 1024, %s455, [#allocation15], 128, 128, 8
        $region36: #{tpu_custom_call.1} parent=11 // pred_fallthru
          _
        // Predicated region
        $region37: #{tpu_custom_call.1} parent=11 // pred_check
          %p461 = pneg %p218
        $region38: #{tpu_custom_call.1} parent=11 // pred_check_branch
          %463 = sbr.rel (%p461) target = $region40
        $region39: #{tpu_custom_call.1} parent=11 // pred_region
          %s465 = ssub.s32 16, 16
          %466 = vsyncadd [#allocation18], %s465
          %s468 = sshll.u32 [#allocation17], 4
          %s469 = int_to_ptr.vmem [resolvable:$true] %s468
          %471 = dma.hbm_to_vmem [thread:$0]  %s7, 16, %s469, [#allocation18]
        $region40: #{tpu_custom_call.1} parent=11 // pred_fallthru
          _
        // Predicated region
        $region41: #{tpu_custom_call.1} parent=11 // pred_check
          %p472 = pneg %p239
        $region42: #{tpu_custom_call.1} parent=11 // pred_check_branch
          %474 = sbr.rel (%p472) target = $region44
        $region43: #{tpu_custom_call.1} parent=11 // pred_region
          %s476 = ssub.s32 16, 16
          %477 = vsyncadd [#allocation18], %s476
          %s479 = sshll.u32 [#allocation19], 4
          %s480 = int_to_ptr.vmem [resolvable:$true] %s479
          %482 = dma.hbm_to_vmem [thread:$0]  %s8, 16, %s480, [#allocation18]
        $region44: #{tpu_custom_call.1} parent=11 // pred_fallthru
          _
        // Predicated region
        $region45: #{tpu_custom_call.1} parent=11 // pred_check
          %p483 = pneg %p260
        $region46: #{tpu_custom_call.1} parent=11 // pred_check_branch
          %485 = sbr.rel (%p483) target = $region48
        $region47: #{tpu_custom_call.1} parent=11 // pred_region
          %s487 = ssub.s32 16, 16
          %488 = vsyncadd [#allocation21], %s487
          %s490 = sshll.u32 [#allocation20], 4
          %s491 = int_to_ptr.vmem [resolvable:$true] %s490
          %493 = dma.hbm_to_vmem [thread:$0]  %s9, 16, %s491, [#allocation21]
        $region48: #{tpu_custom_call.1} parent=11 // pred_fallthru
          _
        // Predicated region
        $region49: #{tpu_custom_call.1} parent=11 // pred_check
          %p494 = pneg %p281
        $region50: #{tpu_custom_call.1} parent=11 // pred_check_branch
          %496 = sbr.rel (%p494) target = $region52
        $region51: #{tpu_custom_call.1} parent=11 // pred_region
          %s498 = ssub.s32 512, 512
          %499 = vsyncadd [#allocation21], %s498
          %s500 = sshll.u32 [#allocation22], 4
          %s501 = int_to_ptr.vmem [resolvable:$true] %s500
          %506 = dma.hbm_to_vmem [thread:$0]  %s10, 512, %s501, [#allocation21], 128, 128, 8
        $region52: #{tpu_custom_call.1} parent=11 // pred_fallthru
          _
        // Predicated region
        $region53: #{tpu_custom_call.1} parent=11 // pred_check
          %p507 = pneg %p302
        $region54: #{tpu_custom_call.1} parent=11 // pred_check_branch
          %509 = sbr.rel (%p507) target = $region56
        $region55: #{tpu_custom_call.1} parent=11 // pred_region
          %s511 = ssub.s32 16, 16
          %512 = vsyncadd [#allocation24], %s511
          %s514 = sshll.u32 [#allocation23], 4
          %s515 = int_to_ptr.vmem [resolvable:$true] %s514
          %517 = dma.hbm_to_vmem [thread:$0]  %s11, 16, %s515, [#allocation24]
        $region56: #{tpu_custom_call.1} parent=11 // pred_fallthru
          _
        // Predicated region
        $region57: #{tpu_custom_call.1} parent=11 // pred_check
          %p518 = pneg %p323
        $region58: #{tpu_custom_call.1} parent=11 // pred_check_branch
          %520 = sbr.rel (%p518) target = $region60
        $region59: #{tpu_custom_call.1} parent=11 // pred_region
          %s522 = ssub.s32 1024, 1024
          %523 = vsyncadd [#allocation24], %s522
          %s524 = sshll.u32 [#allocation25], 4
          %s525 = int_to_ptr.vmem [resolvable:$true] %s524
          %530 = dma.hbm_to_vmem [thread:$0]  %s12, 1024, %s525, [#allocation24], 128, 128, 8
        $region60: #{tpu_custom_call.1} parent=11 // pred_fallthru
          _
        // Predicated region
        $region61: #{tpu_custom_call.1} parent=11 // pred_check
          %p531 = pneg %p344
        $region62: #{tpu_custom_call.1} parent=11 // pred_check_branch
          %533 = sbr.rel (%p531) target = $region64
        $region63: #{tpu_custom_call.1} parent=11 // pred_region
          %s535 = ssub.s32 16, 16
          %536 = vsyncadd [#allocation27], %s535
          %s538 = sshll.u32 [#allocation26], 4
          %s539 = int_to_ptr.vmem [resolvable:$true] %s538
          %541 = dma.hbm_to_vmem [thread:$0]  %s13, 16, %s539, [#allocation27]
        $region64: #{tpu_custom_call.1} parent=11 // pred_fallthru
          _
      $region12: #{tpu_custom_call.1} parent=5 // pred_fallthru
        _
      %p542 = scmp.lt.s32.totalorder %s33, 2
      // Predicated region
      $region65: #{tpu_custom_call.1} parent=5 // pred_check
        %p543 = pneg %p542
      $region66: #{tpu_custom_call.1} parent=5 // pred_check_branch
        %545 = sbr.rel (%p543) target = $region68
      $region67: #{tpu_custom_call.1} parent=5 // pred_region
        // Predicated region
        $region69: #{tpu_custom_call.1} parent=67 // pred_check
          %p546 = pneg %p65
        $region70: #{tpu_custom_call.1} parent=67 // pred_check_branch
          %548 = sbr.rel (%p546) target = $region72
        $region71: #{tpu_custom_call.1} parent=67 // pred_region
          %s549 = sand.u32 %s55, 1
          %s550 = scalar_lea.sflag [#allocation6], %s549
          %s551 = sand.u32 %s55, 1
          %s552 = smul.addr %s551, 8
          %s553 = scalar_lea.vmem [#allocation5], %s552
          %s555 = ssub.s32 128, 128
          %556 = vsyncadd %s550, %s555
          %s557 = smul.addr %s40, 128
          %s558 = scalar_lea.hbm %s0, %s557
          %s560 = sshll.u32 %s553, 4
          %s561 = int_to_ptr.vmem [resolvable:$true] %s560
          %563 = dma.hbm_to_vmem [thread:$0]  %s558, 128, %s561, %s550
        $region72: #{tpu_custom_call.1} parent=67 // pred_fallthru
          _
      $region68: #{tpu_custom_call.1} parent=5 // pred_fallthru
        _
      %p564 = scmp.le.s32.totalorder 1, %s33
      %p565 = scmp.lt.s32.totalorder %s33, 3
      %p566 = pnand %p564, %p565
      %p567 = pneg %p566
      // Predicated region
      $region73: #{tpu_custom_call.1} parent=5 // pred_check
        _
      $region74: #{tpu_custom_call.1} parent=5 // pred_check_branch
        %569 = sbr.rel (%p566) target = $region76
      $region75: #{tpu_custom_call.1} parent=5 // pred_region
        %s570 = ssub.s32 %s33, 1
        %s571 = sand.u32 %s58, 1
        %s572 = scalar_lea.sflag [#allocation6], %s571
        %s573 = sand.u32 %s58, 1
        %s574 = smul.addr %s573, 8
        %s575 = scalar_lea.vmem [#allocation5], %s574
        // Predicated region
        $region77: #{tpu_custom_call.1} parent=75 // pred_check
          %p576 = pneg %p71
        $region78: #{tpu_custom_call.1} parent=75 // pred_check_branch
          %578 = sbr.rel (%p576) target = $region80
        $region79: #{tpu_custom_call.1} parent=75 // pred_region
          %579 = dma.done %s572, 128
        $region80: #{tpu_custom_call.1} parent=75 // pred_fallthru
          _
        // Predicated region
        $region81: #{tpu_custom_call.1} parent=75 // pred_check
          %p580 = pneg %p92
        $region82: #{tpu_custom_call.1} parent=75 // pred_check_branch
          %582 = sbr.rel (%p580) target = $region84
        $region83: #{tpu_custom_call.1} parent=75 // pred_region
          %583 = dma.done [#allocation9], 16
        $region84: #{tpu_custom_call.1} parent=75 // pred_fallthru
          _
        // Predicated region
        $region85: #{tpu_custom_call.1} parent=75 // pred_check
          %p584 = pneg %p113
        $region86: #{tpu_custom_call.1} parent=75 // pred_check_branch
          %586 = sbr.rel (%p584) target = $region88
        $region87: #{tpu_custom_call.1} parent=75 // pred_region
          %587 = dma.done [#allocation9], 16
        $region88: #{tpu_custom_call.1} parent=75 // pred_fallthru
          _
        // Predicated region
        $region89: #{tpu_custom_call.1} parent=75 // pred_check
          %p588 = pneg %p134
        $region90: #{tpu_custom_call.1} parent=75 // pred_check_branch
          %590 = sbr.rel (%p588) target = $region92
        $region91: #{tpu_custom_call.1} parent=75 // pred_region
          %591 = dma.done [#allocation12], 512
        $region92: #{tpu_custom_call.1} parent=75 // pred_fallthru
          _
        // Predicated region
        $region93: #{tpu_custom_call.1} parent=75 // pred_check
          %p592 = pneg %p155
        $region94: #{tpu_custom_call.1} parent=75 // pred_check_branch
          %594 = sbr.rel (%p592) target = $region96
        $region95: #{tpu_custom_call.1} parent=75 // pred_region
          %595 = dma.done [#allocation12], 512
        $region96: #{tpu_custom_call.1} parent=75 // pred_fallthru
          _
        // Predicated region
        $region97: #{tpu_custom_call.1} parent=75 // pred_check
          %p596 = pneg %p176
        $region98: #{tpu_custom_call.1} parent=75 // pred_check_branch
          %598 = sbr.rel (%p596) target = $region100
        $region99: #{tpu_custom_call.1} parent=75 // pred_region
          %599 = dma.done [#allocation15], 512
        $region100: #{tpu_custom_call.1} parent=75 // pred_fallthru
          _
        // Predicated region
        $region101: #{tpu_custom_call.1} parent=75 // pred_check
          %p600 = pneg %p197
        $region102: #{tpu_custom_call.1} parent=75 // pred_check_branch
          %602 = sbr.rel (%p600) target = $region104
        $region103: #{tpu_custom_call.1} parent=75 // pred_region
          %603 = dma.done [#allocation15], 1024
        $region104: #{tpu_custom_call.1} parent=75 // pred_fallthru
          _
        // Predicated region
        $region105: #{tpu_custom_call.1} parent=75 // pred_check
          %p604 = pneg %p218
        $region106: #{tpu_custom_call.1} parent=75 // pred_check_branch
          %606 = sbr.rel (%p604) target = $region108
        $region107: #{tpu_custom_call.1} parent=75 // pred_region
          %607 = dma.done [#allocation18], 16
        $region108: #{tpu_custom_call.1} parent=75 // pred_fallthru
          _
        // Predicated region
        $region109: #{tpu_custom_call.1} parent=75 // pred_check
          %p608 = pneg %p239
        $region110: #{tpu_custom_call.1} parent=75 // pred_check_branch
          %610 = sbr.rel (%p608) target = $region112
        $region111: #{tpu_custom_call.1} parent=75 // pred_region
          %611 = dma.done [#allocation18], 16
        $region112: #{tpu_custom_call.1} parent=75 // pred_fallthru
          _
        // Predicated region
        $region113: #{tpu_custom_call.1} parent=75 // pred_check
          %p612 = pneg %p260
        $region114: #{tpu_custom_call.1} parent=75 // pred_check_branch
          %614 = sbr.rel (%p612) target = $region116
        $region115: #{tpu_custom_call.1} parent=75 // pred_region
          %615 = dma.done [#allocation21], 16
        $region116: #{tpu_custom_call.1} parent=75 // pred_fallthru
          _
        // Predicated region
        $region117: #{tpu_custom_call.1} parent=75 // pred_check
          %p616 = pneg %p281
        $region118: #{tpu_custom_call.1} parent=75 // pred_check_branch
          %618 = sbr.rel (%p616) target = $region120
        $region119: #{tpu_custom_call.1} parent=75 // pred_region
          %619 = dma.done [#allocation21], 512
        $region120: #{tpu_custom_call.1} parent=75 // pred_fallthru
          _
        // Predicated region
        $region121: #{tpu_custom_call.1} parent=75 // pred_check
          %p620 = pneg %p302
        $region122: #{tpu_custom_call.1} parent=75 // pred_check_branch
          %622 = sbr.rel (%p620) target = $region124
        $region123: #{tpu_custom_call.1} parent=75 // pred_region
          %623 = dma.done [#allocation24], 16
        $region124: #{tpu_custom_call.1} parent=75 // pred_fallthru
          _
        // Predicated region
        $region125: #{tpu_custom_call.1} parent=75 // pred_check
          %p624 = pneg %p323
        $region126: #{tpu_custom_call.1} parent=75 // pred_check_branch
          %626 = sbr.rel (%p624) target = $region128
        $region127: #{tpu_custom_call.1} parent=75 // pred_region
          %627 = dma.done [#allocation24], 1024
        $region128: #{tpu_custom_call.1} parent=75 // pred_fallthru
          _
        // Predicated region
        $region129: #{tpu_custom_call.1} parent=75 // pred_check
          %p628 = pneg %p344
        $region130: #{tpu_custom_call.1} parent=75 // pred_check_branch
          %630 = sbr.rel (%p628) target = $region132
        $region131: #{tpu_custom_call.1} parent=75 // pred_region
          %631 = dma.done [#allocation27], 16
        $region132: #{tpu_custom_call.1} parent=75 // pred_fallthru
          _
        %s632 = sand.u32 %s58, 1
        %s633 = scalar_lea.sflag [#allocation6], %s632
        %s634 = sand.u32 %s58, 1
        %s635 = smul.addr %s634, 8
        %s636 = scalar_lea.vmem [#allocation5], %s635
        %p637 = pneg %p71
        %p638 = pneg %p68
        %p639 = pneg %p92
        %p640 = pneg %p89
        %p641 = pneg %p113
        %p642 = pneg %p110
        %p643 = pneg %p134
        %p644 = pneg %p131
        %p645 = pneg %p155
        %p646 = pneg %p152
        %p647 = pneg %p176
        %p648 = pneg %p173
        %p649 = pneg %p197
        %p650 = pneg %p194
        %p651 = pneg %p218
        %p652 = pneg %p215
        %p653 = pneg %p239
        %p654 = pneg %p236
        %p655 = pneg %p260
        %p656 = pneg %p257
        %p657 = pneg %p281
        %p658 = pneg %p278
        %p659 = pneg %p302
        %p660 = pneg %p299
        %p661 = pneg %p323
        %p662 = pneg %p320
        %p663 = pneg %p344
        %p664 = pneg %p341
        %p665 = pneg %p372
        %p666 = pneg %p369
        %s667 = sand.u32 %s359, 1
        %s668 = scalar_lea.sflag [#allocation7], %s667
        %s669 = sand.u32 %s359, 1
        %s670 = smul.addr %s669, 8
        %s671 = scalar_lea.vmem [#allocation28], %s670
        %p672 = scmp.eq.s32.totalorder %s43, 0
        // Predicated region
        $region133: #{tpu_custom_call.1} parent=75 // pred_check
          %p673 = pneg %p672
        $region134: #{tpu_custom_call.1} parent=75 // pred_check_branch
          %675 = sbr.rel (%p673) target = $region136
        $region135: #{tpu_custom_call.1} parent=75 // pred_region
          %v676 = vld [vmem:[%s575] sm:$0xff]
          %v677 = vld [vmem:[#allocation8] sm:$0x1]
          %v678 = vld [vmem:[#allocation10] sm:$0x1]
          %vm679 = vcmask 261120
          %v680 = vsel %vm679, %v676, 0.0
          %681 = vadd.xlane.f32.xlu0 %v680
          %v682 = vpop.xlane.xlu0 %681
          %v683 = vrcp.pop 32.0
          %v684 = vmul.f32 %v682, %v683
          %v685 = vsub.f32 %v676, %v684
          %v686 = vmul.f32 %v685, %v685
          %v687 = vsel %vm679, %v686, 0.0
          %688 = vadd.xlane.f32.xlu0 %v687
          %v689 = vpop.xlane.xlu0 %688
          %v690 = vmul.f32 %v689, %v683
          %v691 = vadd.f32 %v690, 1e-05
          %v692 = vrsqrt.pop %v691
          %v693 = vmul.f32 %v685, %v692
          %v695 = vlaneseq
          %v696 = vshrl.u32 %v695, 7
          %v697 = vsub.s32 0, %v696
          %v698 = vrot.slane %v677, %v697
          %v700 = vmul.f32 %v693, %v698
          %v702 = vlaneseq
          %v703 = vshrl.u32 %v702, 7
          %v704 = vsub.s32 0, %v703
          %v705 = vrot.slane %v678, %v704
          %v707 = vadd.f32 %v700, %v705
          %708 = vst.msk [vmem:[#allocation2] sm:$0xff] %vm679, %v707
          %v709 = vld [vmem:[#allocation13] sm:$0xff]
          %v710 = vld [vmem:[#allocation13 + $0x8] sm:$0xff]
          %v711 = vld [vmem:[#allocation13 + $0x10] sm:$0xff]
          %v712 = vld [vmem:[#allocation13 + $0x18] sm:$0xff]
          %v714 = vsel %vm679, %v707, 0
          %716 = vmatprep.subr.mxu0 0.0
          %717 = vmatpush1.msra.mxu0 %v709
          %718 = vmatprep.subr.mxu0 0.0
          %719 = vmatpush1.msra.mxu0 %v710
          %720 = vmatprep.subr.mxu0 0.0
          %721 = vmatpush1.msra.mxu0 %v711
          %722 = vmatprep.subr.mxu0 0.0
          %723 = vmatpush1.msra.mxu0 %v712
          %724 = vmatprep.subr.mxu0 0.0
          %725 = vmatpush1.msra.mxu0 0.0
          %726 = vmatprep.subr.mxu0 0.0
          %727 = vmatpush1.msra.mxu0 0.0
          %728 = vmatprep.subr.mxu0 0.0
          %729 = vmatpush1.msra.mxu0 0.0
          %730 = vmatprep.subr.mxu0 0.0
          %731 = vmatpush1.msra.mxu0 0.0
          %732 = vmatprep.subr.mxu0 0.0
          %733 = vmatpush1.msra.mxu0 0.0
          %734 = vmatprep.subr.mxu0 0.0
          %735 = vmatpush1.msra.mxu0 0.0
          %736 = vmatprep.subr.mxu0 0.0
          %737 = vmatpush1.msra.mxu0 0.0
          %738 = vmatprep.subr.mxu0 0.0
          %739 = vmatpush1.msra.mxu0 0.0
          %740 = vmatprep.subr.mxu0 0.0
          %741 = vmatpush1.msra.mxu0 0.0
          %742 = vmatprep.subr.mxu0 0.0
          %743 = vmatpush1.msra.mxu0 0.0
          %744 = vmatprep.subr.mxu0 0.0
          %745 = vmatpush1.msra.mxu0 0.0
          %746 = vmatprep.subr.mxu0 0.0
          %747 = vmatpush1.msra.mxu0 0.0
          %748 = vmatprep.subr.mxu0 0.0
          %749 = vmatpush1.msra.mxu0 0.0
          %750 = vmatprep.subr.mxu0 0.0
          %751 = vmatpush1.msra.mxu0 0.0
          %752 = vmatprep.subr.mxu0 0.0
          %753 = vmatpush1.msra.mxu0 0.0
          %754 = vmatprep.subr.mxu0 0.0
          %755 = vmatpush1.msra.mxu0 0.0
          %756 = vmatprep.subr.mxu0 0.0
          %757 = vmatpush1.msra.mxu0 0.0
          %758 = vmatprep.subr.mxu0 0.0
          %759 = vmatpush1.msra.mxu0 0.0
          %760 = vmatprep.subr.mxu0 0.0
          %761 = vmatpush1.msra.mxu0 0.0
          %762 = vmatprep.subr.mxu0 0.0
          %763 = vmatpush1.msra.mxu0 0.0
          %764 = vmatprep.subr.mxu0 0.0
          %765 = vmatpush1.msra.mxu0 0.0
          %766 = vmatprep.subr.mxu0 0.0
          %767 = vmatpush1.msra.mxu0 0.0
          %768 = vmatprep.subr.mxu0 0.0
          %769 = vmatpush1.msra.mxu0 0.0
          %770 = vmatprep.subr.mxu0 0.0
          %771 = vmatpush1.msra.mxu0 0.0
          %772 = vmatprep.subr.mxu0 0.0
          %773 = vmatpush1.msra.mxu0 0.0
          %774 = vmatprep.subr.mxu0 0.0
          %775 = vmatpush1.msra.mxu0 0.0
          %776 = vmatprep.subr.mxu0 0.0
          %777 = vmatpush1.msra.mxu0 0.0
          %778 = vmatprep.subr.mxu0 0.0
          %779 = vmatpush1.msra.mxu0 0.0
          %780 = vmatprep.mubr.f32.mxu0 0.0
          %781 = vmatmul.mubr.f32.gmra.mrb[0].mxu0 %v714
          %v782 = vpop.f32.mrb[0].mxu0
          %v783 = vadd.f32 0.0, %v782
          %v784 = vpop.f32.mrb[0].mxu0
          %785 = vdwg.mxu0
          %v786 = vld [vmem:[#allocation14] sm:$0xff]
          %v787 = vld [vmem:[#allocation14 + $0x8] sm:$0xff]
          %v788 = vld [vmem:[#allocation14 + $0x10] sm:$0xff]
          %v789 = vld [vmem:[#allocation14 + $0x18] sm:$0xff]
          %790 = vmatprep.subr.mxu0 0.0
          %791 = vmatpush1.msra.mxu0 %v786
          %792 = vmatprep.subr.mxu0 0.0
          %793 = vmatpush1.msra.mxu0 %v787
          %794 = vmatprep.subr.mxu0 0.0
          %795 = vmatpush1.msra.mxu0 %v788
          %796 = vmatprep.subr.mxu0 0.0
          %797 = vmatpush1.msra.mxu0 %v789
          %798 = vmatprep.subr.mxu0 0.0
          %799 = vmatpush1.msra.mxu0 0.0
          %800 = vmatprep.subr.mxu0 0.0
          %801 = vmatpush1.msra.mxu0 0.0
          %802 = vmatprep.subr.mxu0 0.0
          %803 = vmatpush1.msra.mxu0 0.0
          %804 = vmatprep.subr.mxu0 0.0
          %805 = vmatpush1.msra.mxu0 0.0
          %806 = vmatprep.subr.mxu0 0.0
          %807 = vmatpush1.msra.mxu0 0.0
          %808 = vmatprep.subr.mxu0 0.0
          %809 = vmatpush1.msra.mxu0 0.0
          %810 = vmatprep.subr.mxu0 0.0
          %811 = vmatpush1.msra.mxu0 0.0
          %812 = vmatprep.subr.mxu0 0.0
          %813 = vmatpush1.msra.mxu0 0.0
          %814 = vmatprep.subr.mxu0 0.0
          %815 = vmatpush1.msra.mxu0 0.0
          %816 = vmatprep.subr.mxu0 0.0
          %817 = vmatpush1.msra.mxu0 0.0
          %818 = vmatprep.subr.mxu0 0.0
          %819 = vmatpush1.msra.mxu0 0.0
          %820 = vmatprep.subr.mxu0 0.0
          %821 = vmatpush1.msra.mxu0 0.0
          %822 = vmatprep.subr.mxu0 0.0
          %823 = vmatpush1.msra.mxu0 0.0
          %824 = vmatprep.subr.mxu0 0.0
          %825 = vmatpush1.msra.mxu0 0.0
          %826 = vmatprep.subr.mxu0 0.0
          %827 = vmatpush1.msra.mxu0 0.0
          %828 = vmatprep.subr.mxu0 0.0
          %829 = vmatpush1.msra.mxu0 0.0
          %830 = vmatprep.subr.mxu0 0.0
          %831 = vmatpush1.msra.mxu0 0.0
          %832 = vmatprep.subr.mxu0 0.0
          %833 = vmatpush1.msra.mxu0 0.0
          %834 = vmatprep.subr.mxu0 0.0
          %835 = vmatpush1.msra.mxu0 0.0
          %836 = vmatprep.subr.mxu0 0.0
          %837 = vmatpush1.msra.mxu0 0.0
          %838 = vmatprep.subr.mxu0 0.0
          %839 = vmatpush1.msra.mxu0 0.0
          %840 = vmatprep.subr.mxu0 0.0
          %841 = vmatpush1.msra.mxu0 0.0
          %842 = vmatprep.subr.mxu0 0.0
          %843 = vmatpush1.msra.mxu0 0.0
          %844 = vmatprep.subr.mxu0 0.0
          %845 = vmatpush1.msra.mxu0 0.0
          %846 = vmatprep.subr.mxu0 0.0
          %847 = vmatpush1.msra.mxu0 0.0
          %848 = vmatprep.subr.mxu0 0.0
          %849 = vmatpush1.msra.mxu0 0.0
          %850 = vmatprep.subr.mxu0 0.0
          %851 = vmatpush1.msra.mxu0 0.0
          %852 = vmatprep.subr.mxu0 0.0
          %853 = vmatpush1.msra.mxu0 0.0
          %854 = vmatprep.mubr.f32.mxu0 0.0
          %855 = vmatmul.mubr.f32.gmra.mrb[0].mxu0 %v714
          %v856 = vpop.f32.mrb[0].mxu0
          %v857 = vadd.f32 0.0, %v856
          %v858 = vpop.f32.mrb[0].mxu0
          %859 = vdwg.mxu0
          %861 = vrot.lane.b32.xlu0 %v783, 112
          %v862 = vpop.permute.xlu0 %861
          %864 = vrot.lane.b32.xlu0 %v783, 96
          %v865 = vpop.permute.xlu0 %864
          %867 = vrot.lane.b32.xlu0 %v783, 80
          %v868 = vpop.permute.xlu0 %867
          %v870 = vcombine.low %v783, %v865
          %v871 = vcombine.high %v783, %v865
          %v873 = vunpack.c.l.s4 1983009808
          %v874 = vunpack.c.0.s8 %v873
          %v875 = vlaneseq
          %v876 = vshrl.u32 %v875, 7
          %v877 = vsub.s32 %v874, %v876
          %v878 = vrot.slane %v870, %v877
          %v880 = vunpack.c.l.s4 1983009808
          %v881 = vunpack.c.0.s8 %v880
          %v882 = vlaneseq
          %v883 = vshrl.u32 %v882, 7
          %v884 = vsub.s32 %v881, %v883
          %v885 = vrot.slane %v871, %v884
          %v886 = vcombine.low %v862, %v868
          %v887 = vcombine.high %v862, %v868
          %v889 = vunpack.c.l.s4 1983009808
          %v890 = vunpack.c.0.s8 %v889
          %v891 = vlaneseq
          %v892 = vshrl.u32 %v891, 7
          %v893 = vsub.s32 %v890, %v892
          %v894 = vrot.slane %v886, %v893
          %v896 = vunpack.c.l.s4 1983009808
          %v897 = vunpack.c.0.s8 %v896
          %v898 = vlaneseq
          %v899 = vshrl.u32 %v898, 7
          %v900 = vsub.s32 %v897, %v899
          %v901 = vrot.slane %v887, %v900
          %v902 = vcombine.low %v878, %v894
          %v903 = vcombine.high %v878, %v894
          %v905 = vunpack.c.l.s4 1934713408
          %v906 = vunpack.c.0.s8 %v905
          %v907 = vlaneseq
          %v908 = vshrl.u32 %v907, 7
          %v909 = vsub.s32 %v906, %v908
          %v910 = vrot.slane %v902, %v909
          %v912 = vunpack.c.l.s4 1934713408
          %v913 = vunpack.c.0.s8 %v912
          %v914 = vlaneseq
          %v915 = vshrl.u32 %v914, 7
          %v916 = vsub.s32 %v913, %v915
          %v917 = vrot.slane %v903, %v916
          %v918 = vcombine.low %v885, %v901
          %v919 = vcombine.high %v885, %v901
          %v921 = vunpack.c.l.s4 1934713408
          %v922 = vunpack.c.0.s8 %v921
          %v923 = vlaneseq
          %v924 = vshrl.u32 %v923, 7
          %v925 = vsub.s32 %v922, %v924
          %v926 = vrot.slane %v918, %v925
          %v928 = vunpack.c.l.s4 1934713408
          %v929 = vunpack.c.0.s8 %v928
          %v930 = vlaneseq
          %v931 = vshrl.u32 %v930, 7
          %v932 = vsub.s32 %v929, %v931
          %v933 = vrot.slane %v919, %v932
          %v934 = vcombine.high %v910, 0.0
          %v935 = vcombine.high %v917, 0.0
          %v936 = vcombine.high %v926, 0.0
          %v937 = vcombine.high %v933, 0.0
          %v938 = vcombine.low %v910, %v917
          %v940 = vunpack.c.l.s4 1983009808
          %v941 = vunpack.c.0.s8 %v940
          %v942 = vlaneseq
          %v943 = vshrl.u32 %v942, 7
          %v944 = vsub.s32 %v941, %v943
          %v945 = vrot.slane %v938, %v944
          %v946 = vcombine.low %v934, %v935
          %v948 = vunpack.c.l.s4 1983009808
          %v949 = vunpack.c.0.s8 %v948
          %v950 = vlaneseq
          %v951 = vshrl.u32 %v950, 7
          %v952 = vsub.s32 %v949, %v951
          %v953 = vrot.slane %v946, %v952
          %v954 = vcombine.low %v926, %v933
          %v956 = vunpack.c.l.s4 1983009808
          %v957 = vunpack.c.0.s8 %v956
          %v958 = vlaneseq
          %v959 = vshrl.u32 %v958, 7
          %v960 = vsub.s32 %v957, %v959
          %v961 = vrot.slane %v954, %v960
          %v962 = vcombine.low %v936, %v937
          %v964 = vunpack.c.l.s4 1983009808
          %v965 = vunpack.c.0.s8 %v964
          %v966 = vlaneseq
          %v967 = vshrl.u32 %v966, 7
          %v968 = vsub.s32 %v965, %v967
          %v969 = vrot.slane %v962, %v968
          %v970 = vcombine.low %v945, %v953
          %v971 = vcombine.high %v945, %v953
          %v973 = vunpack.c.l.s4 1934713408
          %v974 = vunpack.c.0.s8 %v973
          %v975 = vlaneseq
          %v976 = vshrl.u32 %v975, 7
          %v977 = vsub.s32 %v974, %v976
          %v978 = vrot.slane %v970, %v977
          %v980 = vunpack.c.l.s4 1934713408
          %v981 = vunpack.c.0.s8 %v980
          %v982 = vlaneseq
          %v983 = vshrl.u32 %v982, 7
          %v984 = vsub.s32 %v981, %v983
          %v985 = vrot.slane %v971, %v984
          %v986 = vcombine.low %v961, %v969
          %v987 = vcombine.high %v961, %v969
          %v989 = vunpack.c.l.s4 1934713408
          %v990 = vunpack.c.0.s8 %v989
          %v991 = vlaneseq
          %v992 = vshrl.u32 %v991, 7
          %v993 = vsub.s32 %v990, %v992
          %v994 = vrot.slane %v986, %v993
          %v996 = vunpack.c.l.s4 1934713408
          %v997 = vunpack.c.0.s8 %v996
          %v998 = vlaneseq
          %v999 = vshrl.u32 %v998, 7
          %v1000 = vsub.s32 %v997, %v999
          %v1001 = vrot.slane %v987, %v1000
          %v1002 = vcombine.low %v978, %v994
          %v1003 = vcombine.high %v978, %v994
          %v1004 = vcombine.low %v985, %v1001
          %v1005 = vcombine.high %v985, %v1001
          %vm1006 = vcmask 130048
          %1007 = vst.msk [vmem:[#allocation3] sm:$0xff] %vm1006, %v1002
          %1008 = vst.msk [vmem:[#allocation3 + $0x8] sm:$0xff] %vm1006, %v1003
          %1009 = vst.msk [vmem:[#allocation3 + $0x10] sm:$0xff] %vm1006, %v1004
          %1010 = vst.msk [vmem:[#allocation3 + $0x18] sm:$0xff] %vm1006, %v1005
          %1012 = vrot.lane.b32.xlu0 %v857, 112
          %v1013 = vpop.permute.xlu0 %1012
          %1015 = vrot.lane.b32.xlu0 %v857, 96
          %v1016 = vpop.permute.xlu0 %1015
          %1018 = vrot.lane.b32.xlu0 %v857, 80
          %v1019 = vpop.permute.xlu0 %1018
          %v1021 = vcombine.low %v857, %v1016
          %v1022 = vcombine.high %v857, %v1016
          %v1024 = vunpack.c.l.s4 1983009808
          %v1025 = vunpack.c.0.s8 %v1024
          %v1026 = vlaneseq
          %v1027 = vshrl.u32 %v1026, 7
          %v1028 = vsub.s32 %v1025, %v1027
          %v1029 = vrot.slane %v1021, %v1028
          %v1031 = vunpack.c.l.s4 1983009808
          %v1032 = vunpack.c.0.s8 %v1031
          %v1033 = vlaneseq
          %v1034 = vshrl.u32 %v1033, 7
          %v1035 = vsub.s32 %v1032, %v1034
          %v1036 = vrot.slane %v1022, %v1035
          %v1037 = vcombine.low %v1013, %v1019
          %v1038 = vcombine.high %v1013, %v1019
          %v1040 = vunpack.c.l.s4 1983009808
          %v1041 = vunpack.c.0.s8 %v1040
          %v1042 = vlaneseq
          %v1043 = vshrl.u32 %v1042, 7
          %v1044 = vsub.s32 %v1041, %v1043
          %v1045 = vrot.slane %v1037, %v1044
          %v1047 = vunpack.c.l.s4 1983009808
          %v1048 = vunpack.c.0.s8 %v1047
          %v1049 = vlaneseq
          %v1050 = vshrl.u32 %v1049, 7
          %v1051 = vsub.s32 %v1048, %v1050
          %v1052 = vrot.slane %v1038, %v1051
          %v1053 = vcombine.low %v1029, %v1045
          %v1054 = vcombine.high %v1029, %v1045
          %v1056 = vunpack.c.l.s4 1934713408
          %v1057 = vunpack.c.0.s8 %v1056
          %v1058 = vlaneseq
          %v1059 = vshrl.u32 %v1058, 7
          %v1060 = vsub.s32 %v1057, %v1059
          %v1061 = vrot.slane %v1053, %v1060
          %v1063 = vunpack.c.l.s4 1934713408
          %v1064 = vunpack.c.0.s8 %v1063
          %v1065 = vlaneseq
          %v1066 = vshrl.u32 %v1065, 7
          %v1067 = vsub.s32 %v1064, %v1066
          %v1068 = vrot.slane %v1054, %v1067
          %v1069 = vcombine.low %v1036, %v1052
          %v1070 = vcombine.high %v1036, %v1052
          %v1072 = vunpack.c.l.s4 1934713408
          %v1073 = vunpack.c.0.s8 %v1072
          %v1074 = vlaneseq
          %v1075 = vshrl.u32 %v1074, 7
          %v1076 = vsub.s32 %v1073, %v1075
          %v1077 = vrot.slane %v1069, %v1076
          %v1079 = vunpack.c.l.s4 1934713408
          %v1080 = vunpack.c.0.s8 %v1079
          %v1081 = vlaneseq
          %v1082 = vshrl.u32 %v1081, 7
          %v1083 = vsub.s32 %v1080, %v1082
          %v1084 = vrot.slane %v1070, %v1083
          %v1085 = vcombine.high %v1061, 0.0
          %v1086 = vcombine.high %v1068, 0.0
          %v1087 = vcombine.high %v1077, 0.0
          %v1088 = vcombine.high %v1084, 0.0
          %v1089 = vcombine.low %v1061, %v1068
          %v1091 = vunpack.c.l.s4 1983009808
          %v1092 = vunpack.c.0.s8 %v1091
          %v1093 = vlaneseq
          %v1094 = vshrl.u32 %v1093, 7
          %v1095 = vsub.s32 %v1092, %v1094
          %v1096 = vrot.slane %v1089, %v1095
          %v1097 = vcombine.low %v1085, %v1086
          %v1099 = vunpack.c.l.s4 1983009808
          %v1100 = vunpack.c.0.s8 %v1099
          %v1101 = vlaneseq
          %v1102 = vshrl.u32 %v1101, 7
          %v1103 = vsub.s32 %v1100, %v1102
          %v1104 = vrot.slane %v1097, %v1103
          %v1105 = vcombine.low %v1077, %v1084
          %v1107 = vunpack.c.l.s4 1983009808
          %v1108 = vunpack.c.0.s8 %v1107
          %v1109 = vlaneseq
          %v1110 = vshrl.u32 %v1109, 7
          %v1111 = vsub.s32 %v1108, %v1110
          %v1112 = vrot.slane %v1105, %v1111
          %v1113 = vcombine.low %v1087, %v1088
          %v1115 = vunpack.c.l.s4 1983009808
          %v1116 = vunpack.c.0.s8 %v1115
          %v1117 = vlaneseq
          %v1118 = vshrl.u32 %v1117, 7
          %v1119 = vsub.s32 %v1116, %v1118
          %v1120 = vrot.slane %v1113, %v1119
          %v1121 = vcombine.low %v1096, %v1104
          %v1122 = vcombine.high %v1096, %v1104
          %v1124 = vunpack.c.l.s4 1934713408
          %v1125 = vunpack.c.0.s8 %v1124
          %v1126 = vlaneseq
          %v1127 = vshrl.u32 %v1126, 7
          %v1128 = vsub.s32 %v1125, %v1127
          %v1129 = vrot.slane %v1121, %v1128
          %v1131 = vunpack.c.l.s4 1934713408
          %v1132 = vunpack.c.0.s8 %v1131
          %v1133 = vlaneseq
          %v1134 = vshrl.u32 %v1133, 7
          %v1135 = vsub.s32 %v1132, %v1134
          %v1136 = vrot.slane %v1122, %v1135
          %v1137 = vcombine.low %v1112, %v1120
          %v1138 = vcombine.high %v1112, %v1120
          %v1140 = vunpack.c.l.s4 1934713408
          %v1141 = vunpack.c.0.s8 %v1140
          %v1142 = vlaneseq
          %v1143 = vshrl.u32 %v1142, 7
          %v1144 = vsub.s32 %v1141, %v1143
          %v1145 = vrot.slane %v1137, %v1144
          %v1147 = vunpack.c.l.s4 1934713408
          %v1148 = vunpack.c.0.s8 %v1147
          %v1149 = vlaneseq
          %v1150 = vshrl.u32 %v1149, 7
          %v1151 = vsub.s32 %v1148, %v1150
          %v1152 = vrot.slane %v1138, %v1151
          %v1153 = vcombine.low %v1129, %v1145
          %v1154 = vcombine.high %v1129, %v1145
          %v1155 = vcombine.low %v1136, %v1152
          %v1156 = vcombine.high %v1136, %v1152
          %1157 = vst.msk [vmem:[#allocation4] sm:$0xff] %vm1006, %v1153
          %1158 = vst.msk [vmem:[#allocation4 + $0x8] sm:$0xff] %vm1006, %v1154
          %1159 = vst.msk [vmem:[#allocation4 + $0x10] sm:$0xff] %vm1006, %v1155
          %1160 = vst.msk [vmem:[#allocation4 + $0x18] sm:$0xff] %vm1006, %v1156
        $region136: #{tpu_custom_call.1} parent=75 // pred_fallthru
          _
        %s1161 = smul.u32 %s43, 8
        %s1162 = scalar_lea.vmem %s575, %s1161 [#allocation5]
        %v1163 = vld [vmem:[%s1162] sm:$0xff]
        %s1164 = scalar_lea.vmem [#allocation2], %s1161
        %v1165 = vld [vmem:[%s1164] sm:$0xff]
        %v1166 = vld [vmem:[#allocation11] sm:$0xff]
        %v1167 = vld [vmem:[#allocation11 + $0x8] sm:$0xff]
        %v1168 = vld [vmem:[#allocation11 + $0x10] sm:$0xff]
        %v1169 = vld [vmem:[#allocation11 + $0x18] sm:$0xff]
        %vm1170 = vcmask 261120
        %v1172 = vsel %vm1170, %v1165, 0
        %1174 = vmatprep.subr.mxu0 0.0
        %1175 = vmatpush1.msra.mxu0 %v1166
        %1176 = vmatprep.subr.mxu0 0.0
        %1177 = vmatpush1.msra.mxu0 %v1167
        %1178 = vmatprep.subr.mxu0 0.0
        %1179 = vmatpush1.msra.mxu0 %v1168
        %1180 = vmatprep.subr.mxu0 0.0
        %1181 = vmatpush1.msra.mxu0 %v1169
        %1182 = vmatprep.subr.mxu0 0.0
        %1183 = vmatpush1.msra.mxu0 0.0
        %1184 = vmatprep.subr.mxu0 0.0
        %1185 = vmatpush1.msra.mxu0 0.0
        %1186 = vmatprep.subr.mxu0 0.0
        %1187 = vmatpush1.msra.mxu0 0.0
        %1188 = vmatprep.subr.mxu0 0.0
        %1189 = vmatpush1.msra.mxu0 0.0
        %1190 = vmatprep.subr.mxu0 0.0
        %1191 = vmatpush1.msra.mxu0 0.0
        %1192 = vmatprep.subr.mxu0 0.0
        %1193 = vmatpush1.msra.mxu0 0.0
        %1194 = vmatprep.subr.mxu0 0.0
        %1195 = vmatpush1.msra.mxu0 0.0
        %1196 = vmatprep.subr.mxu0 0.0
        %1197 = vmatpush1.msra.mxu0 0.0
        %1198 = vmatprep.subr.mxu0 0.0
        %1199 = vmatpush1.msra.mxu0 0.0
        %1200 = vmatprep.subr.mxu0 0.0
        %1201 = vmatpush1.msra.mxu0 0.0
        %1202 = vmatprep.subr.mxu0 0.0
        %1203 = vmatpush1.msra.mxu0 0.0
        %1204 = vmatprep.subr.mxu0 0.0
        %1205 = vmatpush1.msra.mxu0 0.0
        %1206 = vmatprep.subr.mxu0 0.0
        %1207 = vmatpush1.msra.mxu0 0.0
        %1208 = vmatprep.subr.mxu0 0.0
        %1209 = vmatpush1.msra.mxu0 0.0
        %1210 = vmatprep.subr.mxu0 0.0
        %1211 = vmatpush1.msra.mxu0 0.0
        %1212 = vmatprep.subr.mxu0 0.0
        %1213 = vmatpush1.msra.mxu0 0.0
        %1214 = vmatprep.subr.mxu0 0.0
        %1215 = vmatpush1.msra.mxu0 0.0
        %1216 = vmatprep.subr.mxu0 0.0
        %1217 = vmatpush1.msra.mxu0 0.0
        %1218 = vmatprep.subr.mxu0 0.0
        %1219 = vmatpush1.msra.mxu0 0.0
        %1220 = vmatprep.subr.mxu0 0.0
        %1221 = vmatpush1.msra.mxu0 0.0
        %1222 = vmatprep.subr.mxu0 0.0
        %1223 = vmatpush1.msra.mxu0 0.0
        %1224 = vmatprep.subr.mxu0 0.0
        %1225 = vmatpush1.msra.mxu0 0.0
        %1226 = vmatprep.subr.mxu0 0.0
        %1227 = vmatpush1.msra.mxu0 0.0
        %1228 = vmatprep.subr.mxu0 0.0
        %1229 = vmatpush1.msra.mxu0 0.0
        %1230 = vmatprep.subr.mxu0 0.0
        %1231 = vmatpush1.msra.mxu0 0.0
        %1232 = vmatprep.subr.mxu0 0.0
        %1233 = vmatpush1.msra.mxu0 0.0
        %1234 = vmatprep.subr.mxu0 0.0
        %1235 = vmatpush1.msra.mxu0 0.0
        %1236 = vmatprep.subr.mxu0 0.0
        %1237 = vmatpush1.msra.mxu0 0.0
        %1238 = vmatprep.mubr.f32.mxu0 0.0
        %1239 = vmatmul.mubr.f32.gmra.mrb[0].mxu0 %v1172
        %v1240 = vpop.f32.mrb[0].mxu0
        %v1241 = vadd.f32 0.0, %v1240
        %v1242 = vpop.f32.mrb[0].mxu0
        %1243 = vdwg.mxu0
        %1245 = vrot.lane.b32.xlu0 %v1241, 112
        %v1246 = vpop.permute.xlu0 %1245
        %1248 = vrot.lane.b32.xlu0 %v1241, 96
        %v1249 = vpop.permute.xlu0 %1248
        %1251 = vrot.lane.b32.xlu0 %v1241, 80
        %v1252 = vpop.permute.xlu0 %1251
        %v1254 = vcombine.low %v1241, %v1249
        %v1255 = vcombine.high %v1241, %v1249
        %v1257 = vunpack.c.l.s4 1983009808
        %v1258 = vunpack.c.0.s8 %v1257
        %v1259 = vlaneseq
        %v1260 = vshrl.u32 %v1259, 7
        %v1261 = vsub.s32 %v1258, %v1260
        %v1262 = vrot.slane %v1254, %v1261
        %v1264 = vunpack.c.l.s4 1983009808
        %v1265 = vunpack.c.0.s8 %v1264
        %v1266 = vlaneseq
        %v1267 = vshrl.u32 %v1266, 7
        %v1268 = vsub.s32 %v1265, %v1267
        %v1269 = vrot.slane %v1255, %v1268
        %v1270 = vcombine.low %v1246, %v1252
        %v1271 = vcombine.high %v1246, %v1252
        %v1273 = vunpack.c.l.s4 1983009808
        %v1274 = vunpack.c.0.s8 %v1273
        %v1275 = vlaneseq
        %v1276 = vshrl.u32 %v1275, 7
        %v1277 = vsub.s32 %v1274, %v1276
        %v1278 = vrot.slane %v1270, %v1277
        %v1280 = vunpack.c.l.s4 1983009808
        %v1281 = vunpack.c.0.s8 %v1280
        %v1282 = vlaneseq
        %v1283 = vshrl.u32 %v1282, 7
        %v1284 = vsub.s32 %v1281, %v1283
        %v1285 = vrot.slane %v1271, %v1284
        %v1286 = vcombine.low %v1262, %v1278
        %v1287 = vcombine.high %v1262, %v1278
        %v1289 = vunpack.c.l.s4 1934713408
        %v1290 = vunpack.c.0.s8 %v1289
        %v1291 = vlaneseq
        %v1292 = vshrl.u32 %v1291, 7
        %v1293 = vsub.s32 %v1290, %v1292
        %v1294 = vrot.slane %v1286, %v1293
        %v1296 = vunpack.c.l.s4 1934713408
        %v1297 = vunpack.c.0.s8 %v1296
        %v1298 = vlaneseq
        %v1299 = vshrl.u32 %v1298, 7
        %v1300 = vsub.s32 %v1297, %v1299
        %v1301 = vrot.slane %v1287, %v1300
        %v1302 = vcombine.low %v1269, %v1285
        %v1303 = vcombine.high %v1269, %v1285
        %v1305 = vunpack.c.l.s4 1934713408
        %v1306 = vunpack.c.0.s8 %v1305
        %v1307 = vlaneseq
        %v1308 = vshrl.u32 %v1307, 7
        %v1309 = vsub.s32 %v1306, %v1308
        %v1310 = vrot.slane %v1302, %v1309
        %v1312 = vunpack.c.l.s4 1934713408
        %v1313 = vunpack.c.0.s8 %v1312
        %v1314 = vlaneseq
        %v1315 = vshrl.u32 %v1314, 7
        %v1316 = vsub.s32 %v1313, %v1315
        %v1317 = vrot.slane %v1303, %v1316
        %v1318 = vcombine.high %v1294, 0.0
        %v1319 = vcombine.high %v1301, 0.0
        %v1320 = vcombine.high %v1310, 0.0
        %v1321 = vcombine.high %v1317, 0.0
        %v1322 = vcombine.low %v1294, %v1301
        %v1324 = vunpack.c.l.s4 1983009808
        %v1325 = vunpack.c.0.s8 %v1324
        %v1326 = vlaneseq
        %v1327 = vshrl.u32 %v1326, 7
        %v1328 = vsub.s32 %v1325, %v1327
        %v1329 = vrot.slane %v1322, %v1328
        %v1330 = vcombine.low %v1318, %v1319
        %v1332 = vunpack.c.l.s4 1983009808
        %v1333 = vunpack.c.0.s8 %v1332
        %v1334 = vlaneseq
        %v1335 = vshrl.u32 %v1334, 7
        %v1336 = vsub.s32 %v1333, %v1335
        %v1337 = vrot.slane %v1330, %v1336
        %v1338 = vcombine.low %v1310, %v1317
        %v1340 = vunpack.c.l.s4 1983009808
        %v1341 = vunpack.c.0.s8 %v1340
        %v1342 = vlaneseq
        %v1343 = vshrl.u32 %v1342, 7
        %v1344 = vsub.s32 %v1341, %v1343
        %v1345 = vrot.slane %v1338, %v1344
        %v1346 = vcombine.low %v1320, %v1321
        %v1348 = vunpack.c.l.s4 1983009808
        %v1349 = vunpack.c.0.s8 %v1348
        %v1350 = vlaneseq
        %v1351 = vshrl.u32 %v1350, 7
        %v1352 = vsub.s32 %v1349, %v1351
        %v1353 = vrot.slane %v1346, %v1352
        %v1354 = vcombine.low %v1329, %v1337
        %v1355 = vcombine.high %v1329, %v1337
        %v1357 = vunpack.c.l.s4 1934713408
        %v1358 = vunpack.c.0.s8 %v1357
        %v1359 = vlaneseq
        %v1360 = vshrl.u32 %v1359, 7
        %v1361 = vsub.s32 %v1358, %v1360
        %v1362 = vrot.slane %v1354, %v1361
        %v1364 = vunpack.c.l.s4 1934713408
        %v1365 = vunpack.c.0.s8 %v1364
        %v1366 = vlaneseq
        %v1367 = vshrl.u32 %v1366, 7
        %v1368 = vsub.s32 %v1365, %v1367
        %v1369 = vrot.slane %v1355, %v1368
        %v1370 = vcombine.low %v1345, %v1353
        %v1371 = vcombine.high %v1345, %v1353
        %v1373 = vunpack.c.l.s4 1934713408
        %v1374 = vunpack.c.0.s8 %v1373
        %v1375 = vlaneseq
        %v1376 = vshrl.u32 %v1375, 7
        %v1377 = vsub.s32 %v1374, %v1376
        %v1378 = vrot.slane %v1370, %v1377
        %v1380 = vunpack.c.l.s4 1934713408
        %v1381 = vunpack.c.0.s8 %v1380
        %v1382 = vlaneseq
        %v1383 = vshrl.u32 %v1382, 7
        %v1384 = vsub.s32 %v1381, %v1383
        %v1385 = vrot.slane %v1371, %v1384
        %v1386 = vcombine.low %v1362, %v1378
        %v1387 = vcombine.high %v1362, %v1378
        %v1388 = vcombine.low %v1369, %v1385
        %v1389 = vcombine.high %v1369, %v1385
        %v1390 = vld [vmem:[#allocation3] sm:$0xff]
        %v1391 = vld [vmem:[#allocation3 + $0x8] sm:$0xff]
        %v1392 = vld [vmem:[#allocation3 + $0x10] sm:$0xff]
        %v1393 = vld [vmem:[#allocation3 + $0x18] sm:$0xff]
        %vm1394 = vcmask 130048
        %v1396 = vsel %vm1394, %v1386, 0
        %v1399 = vsel %vm1394, %v1390, 0
        %1401 = vmatprep.subr.mxu0 0.0
        %1402 = vmatpush1.xpose.msra.mxu0 %v1399
        %1403 = vmatprep.subr.mxu0 0.0
        %1404 = vmatpush1.xpose.msra.mxu0 0.0
        %1405 = vmatprep.subr.mxu0 0.0
        %1406 = vmatpush1.xpose.msra.mxu0 0.0
        %1407 = vmatprep.subr.mxu0 0.0
        %1408 = vmatpush1.xpose.msra.mxu0 0.0
        %1409 = vmatprep.subr.mxu0 0.0
        %1410 = vmatpush1.xpose.msra.mxu0 0.0
        %1411 = vmatprep.subr.mxu0 0.0
        %1412 = vmatpush1.xpose.msra.mxu0 0.0
        %1413 = vmatprep.subr.mxu0 0.0
        %1414 = vmatpush1.xpose.msra.mxu0 0.0
        %1415 = vmatprep.subr.mxu0 0.0
        %1416 = vmatpush1.xpose.msra.mxu0 0.0
        %1417 = vmatprep.subr.mxu0 0.0
        %1418 = vmatpush1.xpose.msra.mxu0 0.0
        %1419 = vmatprep.subr.mxu0 0.0
        %1420 = vmatpush1.xpose.msra.mxu0 0.0
        %1421 = vmatprep.subr.mxu0 0.0
        %1422 = vmatpush1.xpose.msra.mxu0 0.0
        %1423 = vmatprep.subr.mxu0 0.0
        %1424 = vmatpush1.xpose.msra.mxu0 0.0
        %1425 = vmatprep.subr.mxu0 0.0
        %1426 = vmatpush1.xpose.msra.mxu0 0.0
        %1427 = vmatprep.subr.mxu0 0.0
        %1428 = vmatpush1.xpose.msra.mxu0 0.0
        %1429 = vmatprep.subr.mxu0 0.0
        %1430 = vmatpush1.xpose.msra.mxu0 0.0
        %1431 = vmatprep.subr.mxu0 0.0
        %1432 = vmatpush1.xpose.msra.mxu0 0.0
        %1433 = vmatprep.subr.mxu0 0.0
        %1434 = vmatpush1.xpose.msra.mxu0 0.0
        %1435 = vmatprep.subr.mxu0 0.0
        %1436 = vmatpush1.xpose.msra.mxu0 0.0
        %1437 = vmatprep.subr.mxu0 0.0
        %1438 = vmatpush1.xpose.msra.mxu0 0.0
        %1439 = vmatprep.subr.mxu0 0.0
        %1440 = vmatpush1.xpose.msra.mxu0 0.0
        %1441 = vmatprep.subr.mxu0 0.0
        %1442 = vmatpush1.xpose.msra.mxu0 0.0
        %1443 = vmatprep.subr.mxu0 0.0
        %1444 = vmatpush1.xpose.msra.mxu0 0.0
        %1445 = vmatprep.subr.mxu0 0.0
        %1446 = vmatpush1.xpose.msra.mxu0 0.0
        %1447 = vmatprep.subr.mxu0 0.0
        %1448 = vmatpush1.xpose.msra.mxu0 0.0
        %1449 = vmatprep.subr.mxu0 0.0
        %1450 = vmatpush1.xpose.msra.mxu0 0.0
        %1451 = vmatprep.subr.mxu0 0.0
        %1452 = vmatpush1.xpose.msra.mxu0 0.0
        %1453 = vmatprep.subr.mxu0 0.0
        %1454 = vmatpush1.xpose.msra.mxu0 0.0
        %1455 = vmatprep.subr.mxu0 0.0
        %1456 = vmatpush1.xpose.msra.mxu0 0.0
        %1457 = vmatprep.subr.mxu0 0.0
        %1458 = vmatpush1.xpose.msra.mxu0 0.0
        %1459 = vmatprep.subr.mxu0 0.0
        %1460 = vmatpush1.xpose.msra.mxu0 0.0
        %1461 = vmatprep.subr.mxu0 0.0
        %1462 = vmatpush1.xpose.msra.mxu0 0.0
        %1463 = vmatprep.subr.mxu0 0.0
        %1464 = vmatpush1.xpose.msra.mxu0 0.0
        %1465 = vmatprep.mubr.f32.mxu0 0.0
        %1466 = vmatmul.mubr.f32.gmra.mrb[0].mxu0 %v1396
        %v1467 = vpop.f32.mrb[0].mxu0
        %v1468 = vadd.f32 0.0, %v1467
        %v1469 = vpop.f32.mrb[0].mxu0
        %1470 = vdwg.mxu0
        %v1472 = vsel %vm1394, %v1387, 0
        %v1475 = vsel %vm1394, %v1391, 0
        %1477 = vmatprep.subr.mxu0 0.0
        %1478 = vmatpush1.xpose.msra.mxu0 %v1475
        %1479 = vmatprep.subr.mxu0 0.0
        %1480 = vmatpush1.xpose.msra.mxu0 0.0
        %1481 = vmatprep.subr.mxu0 0.0
        %1482 = vmatpush1.xpose.msra.mxu0 0.0
        %1483 = vmatprep.subr.mxu0 0.0
        %1484 = vmatpush1.xpose.msra.mxu0 0.0
        %1485 = vmatprep.subr.mxu0 0.0
        %1486 = vmatpush1.xpose.msra.mxu0 0.0
        %1487 = vmatprep.subr.mxu0 0.0
        %1488 = vmatpush1.xpose.msra.mxu0 0.0
        %1489 = vmatprep.subr.mxu0 0.0
        %1490 = vmatpush1.xpose.msra.mxu0 0.0
        %1491 = vmatprep.subr.mxu0 0.0
        %1492 = vmatpush1.xpose.msra.mxu0 0.0
        %1493 = vmatprep.subr.mxu0 0.0
        %1494 = vmatpush1.xpose.msra.mxu0 0.0
        %1495 = vmatprep.subr.mxu0 0.0
        %1496 = vmatpush1.xpose.msra.mxu0 0.0
        %1497 = vmatprep.subr.mxu0 0.0
        %1498 = vmatpush1.xpose.msra.mxu0 0.0
        %1499 = vmatprep.subr.mxu0 0.0
        %1500 = vmatpush1.xpose.msra.mxu0 0.0
        %1501 = vmatprep.subr.mxu0 0.0
        %1502 = vmatpush1.xpose.msra.mxu0 0.0
        %1503 = vmatprep.subr.mxu0 0.0
        %1504 = vmatpush1.xpose.msra.mxu0 0.0
        %1505 = vmatprep.subr.mxu0 0.0
        %1506 = vmatpush1.xpose.msra.mxu0 0.0
        %1507 = vmatprep.subr.mxu0 0.0
        %1508 = vmatpush1.xpose.msra.mxu0 0.0
        %1509 = vmatprep.subr.mxu0 0.0
        %1510 = vmatpush1.xpose.msra.mxu0 0.0
        %1511 = vmatprep.subr.mxu0 0.0
        %1512 = vmatpush1.xpose.msra.mxu0 0.0
        %1513 = vmatprep.subr.mxu0 0.0
        %1514 = vmatpush1.xpose.msra.mxu0 0.0
        %1515 = vmatprep.subr.mxu0 0.0
        %1516 = vmatpush1.xpose.msra.mxu0 0.0
        %1517 = vmatprep.subr.mxu0 0.0
        %1518 = vmatpush1.xpose.msra.mxu0 0.0
        %1519 = vmatprep.subr.mxu0 0.0
        %1520 = vmatpush1.xpose.msra.mxu0 0.0
        %1521 = vmatprep.subr.mxu0 0.0
        %1522 = vmatpush1.xpose.msra.mxu0 0.0
        %1523 = vmatprep.subr.mxu0 0.0
        %1524 = vmatpush1.xpose.msra.mxu0 0.0
        %1525 = vmatprep.subr.mxu0 0.0
        %1526 = vmatpush1.xpose.msra.mxu0 0.0
        %1527 = vmatprep.subr.mxu0 0.0
        %1528 = vmatpush1.xpose.msra.mxu0 0.0
        %1529 = vmatprep.subr.mxu0 0.0
        %1530 = vmatpush1.xpose.msra.mxu0 0.0
        %1531 = vmatprep.subr.mxu0 0.0
        %1532 = vmatpush1.xpose.msra.mxu0 0.0
        %1533 = vmatprep.subr.mxu0 0.0
        %1534 = vmatpush1.xpose.msra.mxu0 0.0
        %1535 = vmatprep.subr.mxu0 0.0
        %1536 = vmatpush1.xpose.msra.mxu0 0.0
        %1537 = vmatprep.subr.mxu0 0.0
        %1538 = vmatpush1.xpose.msra.mxu0 0.0
        %1539 = vmatprep.subr.mxu0 0.0
        %1540 = vmatpush1.xpose.msra.mxu0 0.0
        %1541 = vmatprep.mubr.f32.mxu0 0.0
        %1542 = vmatmul.mubr.f32.gmra.mrb[0].mxu0 %v1472
        %v1543 = vpop.f32.mrb[0].mxu0
        %v1544 = vadd.f32 0.0, %v1543
        %v1545 = vpop.f32.mrb[0].mxu0
        %1546 = vdwg.mxu0
        %v1548 = vsel %vm1394, %v1388, 0
        %v1551 = vsel %vm1394, %v1392, 0
        %1553 = vmatprep.subr.mxu0 0.0
        %1554 = vmatpush1.xpose.msra.mxu0 %v1551
        %1555 = vmatprep.subr.mxu0 0.0
        %1556 = vmatpush1.xpose.msra.mxu0 0.0
        %1557 = vmatprep.subr.mxu0 0.0
        %1558 = vmatpush1.xpose.msra.mxu0 0.0
        %1559 = vmatprep.subr.mxu0 0.0
        %1560 = vmatpush1.xpose.msra.mxu0 0.0
        %1561 = vmatprep.subr.mxu0 0.0
        %1562 = vmatpush1.xpose.msra.mxu0 0.0
        %1563 = vmatprep.subr.mxu0 0.0
        %1564 = vmatpush1.xpose.msra.mxu0 0.0
        %1565 = vmatprep.subr.mxu0 0.0
        %1566 = vmatpush1.xpose.msra.mxu0 0.0
        %1567 = vmatprep.subr.mxu0 0.0
        %1568 = vmatpush1.xpose.msra.mxu0 0.0
        %1569 = vmatprep.subr.mxu0 0.0
        %1570 = vmatpush1.xpose.msra.mxu0 0.0
        %1571 = vmatprep.subr.mxu0 0.0
        %1572 = vmatpush1.xpose.msra.mxu0 0.0
        %1573 = vmatprep.subr.mxu0 0.0
        %1574 = vmatpush1.xpose.msra.mxu0 0.0
        %1575 = vmatprep.subr.mxu0 0.0
        %1576 = vmatpush1.xpose.msra.mxu0 0.0
        %1577 = vmatprep.subr.mxu0 0.0
        %1578 = vmatpush1.xpose.msra.mxu0 0.0
        %1579 = vmatprep.subr.mxu0 0.0
        %1580 = vmatpush1.xpose.msra.mxu0 0.0
        %1581 = vmatprep.subr.mxu0 0.0
        %1582 = vmatpush1.xpose.msra.mxu0 0.0
        %1583 = vmatprep.subr.mxu0 0.0
        %1584 = vmatpush1.xpose.msra.mxu0 0.0
        %1585 = vmatprep.subr.mxu0 0.0
        %1586 = vmatpush1.xpose.msra.mxu0 0.0
        %1587 = vmatprep.subr.mxu0 0.0
        %1588 = vmatpush1.xpose.msra.mxu0 0.0
        %1589 = vmatprep.subr.mxu0 0.0
        %1590 = vmatpush1.xpose.msra.mxu0 0.0
        %1591 = vmatprep.subr.mxu0 0.0
        %1592 = vmatpush1.xpose.msra.mxu0 0.0
        %1593 = vmatprep.subr.mxu0 0.0
        %1594 = vmatpush1.xpose.msra.mxu0 0.0
        %1595 = vmatprep.subr.mxu0 0.0
        %1596 = vmatpush1.xpose.msra.mxu0 0.0
        %1597 = vmatprep.subr.mxu0 0.0
        %1598 = vmatpush1.xpose.msra.mxu0 0.0
        %1599 = vmatprep.subr.mxu0 0.0
        %1600 = vmatpush1.xpose.msra.mxu0 0.0
        %1601 = vmatprep.subr.mxu0 0.0
        %1602 = vmatpush1.xpose.msra.mxu0 0.0
        %1603 = vmatprep.subr.mxu0 0.0
        %1604 = vmatpush1.xpose.msra.mxu0 0.0
        %1605 = vmatprep.subr.mxu0 0.0
        %1606 = vmatpush1.xpose.msra.mxu0 0.0
        %1607 = vmatprep.subr.mxu0 0.0
        %1608 = vmatpush1.xpose.msra.mxu0 0.0
        %1609 = vmatprep.subr.mxu0 0.0
        %1610 = vmatpush1.xpose.msra.mxu0 0.0
        %1611 = vmatprep.subr.mxu0 0.0
        %1612 = vmatpush1.xpose.msra.mxu0 0.0
        %1613 = vmatprep.subr.mxu0 0.0
        %1614 = vmatpush1.xpose.msra.mxu0 0.0
        %1615 = vmatprep.subr.mxu0 0.0
        %1616 = vmatpush1.xpose.msra.mxu0 0.0
        %1617 = vmatprep.mubr.f32.mxu0 0.0
        %1618 = vmatmul.mubr.f32.gmra.mrb[0].mxu0 %v1548
        %v1619 = vpop.f32.mrb[0].mxu0
        %v1620 = vadd.f32 0.0, %v1619
        %v1621 = vpop.f32.mrb[0].mxu0
        %1622 = vdwg.mxu0
        %v1624 = vsel %vm1394, %v1389, 0
        %v1627 = vsel %vm1394, %v1393, 0
        %1629 = vmatprep.subr.mxu0 0.0
        %1630 = vmatpush1.xpose.msra.mxu0 %v1627
        %1631 = vmatprep.subr.mxu0 0.0
        %1632 = vmatpush1.xpose.msra.mxu0 0.0
        %1633 = vmatprep.subr.mxu0 0.0
        %1634 = vmatpush1.xpose.msra.mxu0 0.0
        %1635 = vmatprep.subr.mxu0 0.0
        %1636 = vmatpush1.xpose.msra.mxu0 0.0
        %1637 = vmatprep.subr.mxu0 0.0
        %1638 = vmatpush1.xpose.msra.mxu0 0.0
        %1639 = vmatprep.subr.mxu0 0.0
        %1640 = vmatpush1.xpose.msra.mxu0 0.0
        %1641 = vmatprep.subr.mxu0 0.0
        %1642 = vmatpush1.xpose.msra.mxu0 0.0
        %1643 = vmatprep.subr.mxu0 0.0
        %1644 = vmatpush1.xpose.msra.mxu0 0.0
        %1645 = vmatprep.subr.mxu0 0.0
        %1646 = vmatpush1.xpose.msra.mxu0 0.0
        %1647 = vmatprep.subr.mxu0 0.0
        %1648 = vmatpush1.xpose.msra.mxu0 0.0
        %1649 = vmatprep.subr.mxu0 0.0
        %1650 = vmatpush1.xpose.msra.mxu0 0.0
        %1651 = vmatprep.subr.mxu0 0.0
        %1652 = vmatpush1.xpose.msra.mxu0 0.0
        %1653 = vmatprep.subr.mxu0 0.0
        %1654 = vmatpush1.xpose.msra.mxu0 0.0
        %1655 = vmatprep.subr.mxu0 0.0
        %1656 = vmatpush1.xpose.msra.mxu0 0.0
        %1657 = vmatprep.subr.mxu0 0.0
        %1658 = vmatpush1.xpose.msra.mxu0 0.0
        %1659 = vmatprep.subr.mxu0 0.0
        %1660 = vmatpush1.xpose.msra.mxu0 0.0
        %1661 = vmatprep.subr.mxu0 0.0
        %1662 = vmatpush1.xpose.msra.mxu0 0.0
        %1663 = vmatprep.subr.mxu0 0.0
        %1664 = vmatpush1.xpose.msra.mxu0 0.0
        %1665 = vmatprep.subr.mxu0 0.0
        %1666 = vmatpush1.xpose.msra.mxu0 0.0
        %1667 = vmatprep.subr.mxu0 0.0
        %1668 = vmatpush1.xpose.msra.mxu0 0.0
        %1669 = vmatprep.subr.mxu0 0.0
        %1670 = vmatpush1.xpose.msra.mxu0 0.0
        %1671 = vmatprep.subr.mxu0 0.0
        %1672 = vmatpush1.xpose.msra.mxu0 0.0
        %1673 = vmatprep.subr.mxu0 0.0
        %1674 = vmatpush1.xpose.msra.mxu0 0.0
        %1675 = vmatprep.subr.mxu0 0.0
        %1676 = vmatpush1.xpose.msra.mxu0 0.0
        %1677 = vmatprep.subr.mxu0 0.0
        %1678 = vmatpush1.xpose.msra.mxu0 0.0
        %1679 = vmatprep.subr.mxu0 0.0
        %1680 = vmatpush1.xpose.msra.mxu0 0.0
        %1681 = vmatprep.subr.mxu0 0.0
        %1682 = vmatpush1.xpose.msra.mxu0 0.0
        %1683 = vmatprep.subr.mxu0 0.0
        %1684 = vmatpush1.xpose.msra.mxu0 0.0
        %1685 = vmatprep.subr.mxu0 0.0
        %1686 = vmatpush1.xpose.msra.mxu0 0.0
        %1687 = vmatprep.subr.mxu0 0.0
        %1688 = vmatpush1.xpose.msra.mxu0 0.0
        %1689 = vmatprep.subr.mxu0 0.0
        %1690 = vmatpush1.xpose.msra.mxu0 0.0
        %1691 = vmatprep.subr.mxu0 0.0
        %1692 = vmatpush1.xpose.msra.mxu0 0.0
        %1693 = vmatprep.mubr.f32.mxu0 0.0
        %1694 = vmatmul.mubr.f32.gmra.mrb[0].mxu0 %v1624
        %v1695 = vpop.f32.mrb[0].mxu0
        %v1696 = vadd.f32 0.0, %v1695
        %v1697 = vpop.f32.mrb[0].mxu0
        %1698 = vdwg.mxu0
        %vm1699 = vcmask 64512
        %v1700 = vsel %vm1699, %v1468, -inf
        %1701 = vmax.xlane.f32.xlu0 %v1700
        %v1702 = vpop.xlane.xlu0 %1701
        %v1703 = vsel %vm1699, %v1544, -inf
        %1704 = vmax.xlane.f32.xlu0 %v1703
        %v1705 = vpop.xlane.xlu0 %1704
        %v1706 = vsel %vm1699, %v1620, -inf
        %1707 = vmax.xlane.f32.xlu0 %v1706
        %v1708 = vpop.xlane.xlu0 %1707
        %v1709 = vsel %vm1699, %v1696, -inf
        %1710 = vmax.xlane.f32.xlu0 %v1709
        %v1711 = vpop.xlane.xlu0 %1710
        %v1712 = vsub.f32 %v1468, %v1702
        %v1713 = vsub.f32 %v1544, %v1705
        %v1714 = vsub.f32 %v1620, %v1708
        %v1715 = vsub.f32 %v1696, %v1711
        %v1716 = vmul.f32 %v1712, 1.442695
        %v1717 = vpow.pop %v1716
        %v1718 = vmul.f32 %v1713, 1.442695
        %v1719 = vpow.pop %v1718
        %v1720 = vmul.f32 %v1714, 1.442695
        %v1721 = vpow.pop %v1720
        %v1722 = vmul.f32 %v1715, 1.442695
        %v1723 = vpow.pop %v1722
        %v1724 = vsel %vm1699, %v1717, 0.0
        %1725 = vadd.xlane.f32.xlu0 %v1724
        %v1726 = vpop.xlane.xlu0 %1725
        %v1727 = vsel %vm1699, %v1719, 0.0
        %1728 = vadd.xlane.f32.xlu0 %v1727
        %v1729 = vpop.xlane.xlu0 %1728
        %v1730 = vsel %vm1699, %v1721, 0.0
        %1731 = vadd.xlane.f32.xlu0 %v1730
        %v1732 = vpop.xlane.xlu0 %1731
        %v1733 = vsel %vm1699, %v1723, 0.0
        %1734 = vadd.xlane.f32.xlu0 %v1733
        %v1735 = vpop.xlane.xlu0 %1734
        %v1736 = vrcp.pop %v1726
        %v1737 = vrcp.pop %v1729
        %v1738 = vrcp.pop %v1732
        %v1739 = vrcp.pop %v1735
        %v1740 = vmul.f32 %v1717, %v1736
        %v1741 = vmul.f32 %v1719, %v1737
        %v1742 = vmul.f32 %v1721, %v1738
        %v1743 = vmul.f32 %v1723, %v1739
        %v1744 = vld [vmem:[#allocation4] sm:$0xff]
        %v1745 = vld [vmem:[#allocation4 + $0x8] sm:$0xff]
        %v1746 = vld [vmem:[#allocation4 + $0x10] sm:$0xff]
        %v1747 = vld [vmem:[#allocation4 + $0x18] sm:$0xff]
        %v1749 = vsel %vm1699, %v1740, 0
        %1751 = vmatprep.subr.mxu0 0.0
        %1752 = vmatpush1.msra.mxu0 %v1744
        %1753 = vmatprep.subr.mxu0 0.0
        %1754 = vmatpush1.msra.mxu0 0.0
        %1755 = vmatprep.subr.mxu0 0.0
        %1756 = vmatpush1.msra.mxu0 0.0
        %1757 = vmatprep.subr.mxu0 0.0
        %1758 = vmatpush1.msra.mxu0 0.0
        %1759 = vmatprep.subr.mxu0 0.0
        %1760 = vmatpush1.msra.mxu0 0.0
        %1761 = vmatprep.subr.mxu0 0.0
        %1762 = vmatpush1.msra.mxu0 0.0
        %1763 = vmatprep.subr.mxu0 0.0
        %1764 = vmatpush1.msra.mxu0 0.0
        %1765 = vmatprep.subr.mxu0 0.0
        %1766 = vmatpush1.msra.mxu0 0.0
        %1767 = vmatprep.subr.mxu0 0.0
        %1768 = vmatpush1.msra.mxu0 0.0
        %1769 = vmatprep.subr.mxu0 0.0
        %1770 = vmatpush1.msra.mxu0 0.0
        %1771 = vmatprep.subr.mxu0 0.0
        %1772 = vmatpush1.msra.mxu0 0.0
        %1773 = vmatprep.subr.mxu0 0.0
        %1774 = vmatpush1.msra.mxu0 0.0
        %1775 = vmatprep.subr.mxu0 0.0
        %1776 = vmatpush1.msra.mxu0 0.0
        %1777 = vmatprep.subr.mxu0 0.0
        %1778 = vmatpush1.msra.mxu0 0.0
        %1779 = vmatprep.subr.mxu0 0.0
        %1780 = vmatpush1.msra.mxu0 0.0
        %1781 = vmatprep.subr.mxu0 0.0
        %1782 = vmatpush1.msra.mxu0 0.0
        %1783 = vmatprep.subr.mxu0 0.0
        %1784 = vmatpush1.msra.mxu0 0.0
        %1785 = vmatprep.subr.mxu0 0.0
        %1786 = vmatpush1.msra.mxu0 0.0
        %1787 = vmatprep.subr.mxu0 0.0
        %1788 = vmatpush1.msra.mxu0 0.0
        %1789 = vmatprep.subr.mxu0 0.0
        %1790 = vmatpush1.msra.mxu0 0.0
        %1791 = vmatprep.subr.mxu0 0.0
        %1792 = vmatpush1.msra.mxu0 0.0
        %1793 = vmatprep.subr.mxu0 0.0
        %1794 = vmatpush1.msra.mxu0 0.0
        %1795 = vmatprep.subr.mxu0 0.0
        %1796 = vmatpush1.msra.mxu0 0.0
        %1797 = vmatprep.subr.mxu0 0.0
        %1798 = vmatpush1.msra.mxu0 0.0
        %1799 = vmatprep.subr.mxu0 0.0
        %1800 = vmatpush1.msra.mxu0 0.0
        %1801 = vmatprep.subr.mxu0 0.0
        %1802 = vmatpush1.msra.mxu0 0.0
        %1803 = vmatprep.subr.mxu0 0.0
        %1804 = vmatpush1.msra.mxu0 0.0
        %1805 = vmatprep.subr.mxu0 0.0
        %1806 = vmatpush1.msra.mxu0 0.0
        %1807 = vmatprep.subr.mxu0 0.0
        %1808 = vmatpush1.msra.mxu0 0.0
        %1809 = vmatprep.subr.mxu0 0.0
        %1810 = vmatpush1.msra.mxu0 0.0
        %1811 = vmatprep.subr.mxu0 0.0
        %1812 = vmatpush1.msra.mxu0 0.0
        %1813 = vmatprep.subr.mxu0 0.0
        %1814 = vmatpush1.msra.mxu0 0.0
        %1815 = vmatprep.mubr.f32.mxu0 0.0
        %1816 = vmatmul.mubr.f32.gmra.mrb[0].mxu0 %v1749
        %v1817 = vpop.f32.mrb[0].mxu0
        %v1818 = vadd.f32 0.0, %v1817
        %v1819 = vpop.f32.mrb[0].mxu0
        %1820 = vdwg.mxu0
        %v1822 = vsel %vm1699, %v1741, 0
        %1824 = vmatprep.subr.mxu0 0.0
        %1825 = vmatpush1.msra.mxu0 %v1745
        %1826 = vmatprep.subr.mxu0 0.0
        %1827 = vmatpush1.msra.mxu0 0.0
        %1828 = vmatprep.subr.mxu0 0.0
        %1829 = vmatpush1.msra.mxu0 0.0
        %1830 = vmatprep.subr.mxu0 0.0
        %1831 = vmatpush1.msra.mxu0 0.0
        %1832 = vmatprep.subr.mxu0 0.0
        %1833 = vmatpush1.msra.mxu0 0.0
        %1834 = vmatprep.subr.mxu0 0.0
        %1835 = vmatpush1.msra.mxu0 0.0
        %1836 = vmatprep.subr.mxu0 0.0
        %1837 = vmatpush1.msra.mxu0 0.0
        %1838 = vmatprep.subr.mxu0 0.0
        %1839 = vmatpush1.msra.mxu0 0.0
        %1840 = vmatprep.subr.mxu0 0.0
        %1841 = vmatpush1.msra.mxu0 0.0
        %1842 = vmatprep.subr.mxu0 0.0
        %1843 = vmatpush1.msra.mxu0 0.0
        %1844 = vmatprep.subr.mxu0 0.0
        %1845 = vmatpush1.msra.mxu0 0.0
        %1846 = vmatprep.subr.mxu0 0.0
        %1847 = vmatpush1.msra.mxu0 0.0
        %1848 = vmatprep.subr.mxu0 0.0
        %1849 = vmatpush1.msra.mxu0 0.0
        %1850 = vmatprep.subr.mxu0 0.0
        %1851 = vmatpush1.msra.mxu0 0.0
        %1852 = vmatprep.subr.mxu0 0.0
        %1853 = vmatpush1.msra.mxu0 0.0
        %1854 = vmatprep.subr.mxu0 0.0
        %1855 = vmatpush1.msra.mxu0 0.0
        %1856 = vmatprep.subr.mxu0 0.0
        %1857 = vmatpush1.msra.mxu0 0.0
        %1858 = vmatprep.subr.mxu0 0.0
        %1859 = vmatpush1.msra.mxu0 0.0
        %1860 = vmatprep.subr.mxu0 0.0
        %1861 = vmatpush1.msra.mxu0 0.0
        %1862 = vmatprep.subr.mxu0 0.0
        %1863 = vmatpush1.msra.mxu0 0.0
        %1864 = vmatprep.subr.mxu0 0.0
        %1865 = vmatpush1.msra.mxu0 0.0
        %1866 = vmatprep.subr.mxu0 0.0
        %1867 = vmatpush1.msra.mxu0 0.0
        %1868 = vmatprep.subr.mxu0 0.0
        %1869 = vmatpush1.msra.mxu0 0.0
        %1870 = vmatprep.subr.mxu0 0.0
        %1871 = vmatpush1.msra.mxu0 0.0
        %1872 = vmatprep.subr.mxu0 0.0
        %1873 = vmatpush1.msra.mxu0 0.0
        %1874 = vmatprep.subr.mxu0 0.0
        %1875 = vmatpush1.msra.mxu0 0.0
        %1876 = vmatprep.subr.mxu0 0.0
        %1877 = vmatpush1.msra.mxu0 0.0
        %1878 = vmatprep.subr.mxu0 0.0
        %1879 = vmatpush1.msra.mxu0 0.0
        %1880 = vmatprep.subr.mxu0 0.0
        %1881 = vmatpush1.msra.mxu0 0.0
        %1882 = vmatprep.subr.mxu0 0.0
        %1883 = vmatpush1.msra.mxu0 0.0
        %1884 = vmatprep.subr.mxu0 0.0
        %1885 = vmatpush1.msra.mxu0 0.0
        %1886 = vmatprep.subr.mxu0 0.0
        %1887 = vmatpush1.msra.mxu0 0.0
        %1888 = vmatprep.mubr.f32.mxu0 0.0
        %1889 = vmatmul.mubr.f32.gmra.mrb[0].mxu0 %v1822
        %v1890 = vpop.f32.mrb[0].mxu0
        %v1891 = vadd.f32 0.0, %v1890
        %v1892 = vpop.f32.mrb[0].mxu0
        %1893 = vdwg.mxu0
        %v1895 = vsel %vm1699, %v1742, 0
        %1897 = vmatprep.subr.mxu0 0.0
        %1898 = vmatpush1.msra.mxu0 %v1746
        %1899 = vmatprep.subr.mxu0 0.0
        %1900 = vmatpush1.msra.mxu0 0.0
        %1901 = vmatprep.subr.mxu0 0.0
        %1902 = vmatpush1.msra.mxu0 0.0
        %1903 = vmatprep.subr.mxu0 0.0
        %1904 = vmatpush1.msra.mxu0 0.0
        %1905 = vmatprep.subr.mxu0 0.0
        %1906 = vmatpush1.msra.mxu0 0.0
        %1907 = vmatprep.subr.mxu0 0.0
        %1908 = vmatpush1.msra.mxu0 0.0
        %1909 = vmatprep.subr.mxu0 0.0
        %1910 = vmatpush1.msra.mxu0 0.0
        %1911 = vmatprep.subr.mxu0 0.0
        %1912 = vmatpush1.msra.mxu0 0.0
        %1913 = vmatprep.subr.mxu0 0.0
        %1914 = vmatpush1.msra.mxu0 0.0
        %1915 = vmatprep.subr.mxu0 0.0
        %1916 = vmatpush1.msra.mxu0 0.0
        %1917 = vmatprep.subr.mxu0 0.0
        %1918 = vmatpush1.msra.mxu0 0.0
        %1919 = vmatprep.subr.mxu0 0.0
        %1920 = vmatpush1.msra.mxu0 0.0
        %1921 = vmatprep.subr.mxu0 0.0
        %1922 = vmatpush1.msra.mxu0 0.0
        %1923 = vmatprep.subr.mxu0 0.0
        %1924 = vmatpush1.msra.mxu0 0.0
        %1925 = vmatprep.subr.mxu0 0.0
        %1926 = vmatpush1.msra.mxu0 0.0
        %1927 = vmatprep.subr.mxu0 0.0
        %1928 = vmatpush1.msra.mxu0 0.0
        %1929 = vmatprep.subr.mxu0 0.0
        %1930 = vmatpush1.msra.mxu0 0.0
        %1931 = vmatprep.subr.mxu0 0.0
        %1932 = vmatpush1.msra.mxu0 0.0
        %1933 = vmatprep.subr.mxu0 0.0
        %1934 = vmatpush1.msra.mxu0 0.0
        %1935 = vmatprep.subr.mxu0 0.0
        %1936 = vmatpush1.msra.mxu0 0.0
        %1937 = vmatprep.subr.mxu0 0.0
        %1938 = vmatpush1.msra.mxu0 0.0
        %1939 = vmatprep.subr.mxu0 0.0
        %1940 = vmatpush1.msra.mxu0 0.0
        %1941 = vmatprep.subr.mxu0 0.0
        %1942 = vmatpush1.msra.mxu0 0.0
        %1943 = vmatprep.subr.mxu0 0.0
        %1944 = vmatpush1.msra.mxu0 0.0
        %1945 = vmatprep.subr.mxu0 0.0
        %1946 = vmatpush1.msra.mxu0 0.0
        %1947 = vmatprep.subr.mxu0 0.0
        %1948 = vmatpush1.msra.mxu0 0.0
        %1949 = vmatprep.subr.mxu0 0.0
        %1950 = vmatpush1.msra.mxu0 0.0
        %1951 = vmatprep.subr.mxu0 0.0
        %1952 = vmatpush1.msra.mxu0 0.0
        %1953 = vmatprep.subr.mxu0 0.0
        %1954 = vmatpush1.msra.mxu0 0.0
        %1955 = vmatprep.subr.mxu0 0.0
        %1956 = vmatpush1.msra.mxu0 0.0
        %1957 = vmatprep.subr.mxu0 0.0
        %1958 = vmatpush1.msra.mxu0 0.0
        %1959 = vmatprep.subr.mxu0 0.0
        %1960 = vmatpush1.msra.mxu0 0.0
        %1961 = vmatprep.mubr.f32.mxu0 0.0
        %1962 = vmatmul.mubr.f32.gmra.mrb[0].mxu0 %v1895
        %v1963 = vpop.f32.mrb[0].mxu0
        %v1964 = vadd.f32 0.0, %v1963
        %v1965 = vpop.f32.mrb[0].mxu0
        %1966 = vdwg.mxu0
        %v1968 = vsel %vm1699, %v1743, 0
        %1970 = vmatprep.subr.mxu0 0.0
        %1971 = vmatpush1.msra.mxu0 %v1747
        %1972 = vmatprep.subr.mxu0 0.0
        %1973 = vmatpush1.msra.mxu0 0.0
        %1974 = vmatprep.subr.mxu0 0.0
        %1975 = vmatpush1.msra.mxu0 0.0
        %1976 = vmatprep.subr.mxu0 0.0
        %1977 = vmatpush1.msra.mxu0 0.0
        %1978 = vmatprep.subr.mxu0 0.0
        %1979 = vmatpush1.msra.mxu0 0.0
        %1980 = vmatprep.subr.mxu0 0.0
        %1981 = vmatpush1.msra.mxu0 0.0
        %1982 = vmatprep.subr.mxu0 0.0
        %1983 = vmatpush1.msra.mxu0 0.0
        %1984 = vmatprep.subr.mxu0 0.0
        %1985 = vmatpush1.msra.mxu0 0.0
        %1986 = vmatprep.subr.mxu0 0.0
        %1987 = vmatpush1.msra.mxu0 0.0
        %1988 = vmatprep.subr.mxu0 0.0
        %1989 = vmatpush1.msra.mxu0 0.0
        %1990 = vmatprep.subr.mxu0 0.0
        %1991 = vmatpush1.msra.mxu0 0.0
        %1992 = vmatprep.subr.mxu0 0.0
        %1993 = vmatpush1.msra.mxu0 0.0
        %1994 = vmatprep.subr.mxu0 0.0
        %1995 = vmatpush1.msra.mxu0 0.0
        %1996 = vmatprep.subr.mxu0 0.0
        %1997 = vmatpush1.msra.mxu0 0.0
        %1998 = vmatprep.subr.mxu0 0.0
        %1999 = vmatpush1.msra.mxu0 0.0
        %2000 = vmatprep.subr.mxu0 0.0
        %2001 = vmatpush1.msra.mxu0 0.0
        %2002 = vmatprep.subr.mxu0 0.0
        %2003 = vmatpush1.msra.mxu0 0.0
        %2004 = vmatprep.subr.mxu0 0.0
        %2005 = vmatpush1.msra.mxu0 0.0
        %2006 = vmatprep.subr.mxu0 0.0
        %2007 = vmatpush1.msra.mxu0 0.0
        %2008 = vmatprep.subr.mxu0 0.0
        %2009 = vmatpush1.msra.mxu0 0.0
        %2010 = vmatprep.subr.mxu0 0.0
        %2011 = vmatpush1.msra.mxu0 0.0
        %2012 = vmatprep.subr.mxu0 0.0
        %2013 = vmatpush1.msra.mxu0 0.0
        %2014 = vmatprep.subr.mxu0 0.0
        %2015 = vmatpush1.msra.mxu0 0.0
        %2016 = vmatprep.subr.mxu0 0.0
        %2017 = vmatpush1.msra.mxu0 0.0
        %2018 = vmatprep.subr.mxu0 0.0
        %2019 = vmatpush1.msra.mxu0 0.0
        %2020 = vmatprep.subr.mxu0 0.0
        %2021 = vmatpush1.msra.mxu0 0.0
        %2022 = vmatprep.subr.mxu0 0.0
        %2023 = vmatpush1.msra.mxu0 0.0
        %2024 = vmatprep.subr.mxu0 0.0
        %2025 = vmatpush1.msra.mxu0 0.0
        %2026 = vmatprep.subr.mxu0 0.0
        %2027 = vmatpush1.msra.mxu0 0.0
        %2028 = vmatprep.subr.mxu0 0.0
        %2029 = vmatpush1.msra.mxu0 0.0
        %2030 = vmatprep.subr.mxu0 0.0
        %2031 = vmatpush1.msra.mxu0 0.0
        %2032 = vmatprep.subr.mxu0 0.0
        %2033 = vmatpush1.msra.mxu0 0.0
        %2034 = vmatprep.mubr.f32.mxu0 0.0
        %2035 = vmatmul.mubr.f32.gmra.mrb[0].mxu0 %v1968
        %v2036 = vpop.f32.mrb[0].mxu0
        %v2037 = vadd.f32 0.0, %v2036
        %v2038 = vpop.f32.mrb[0].mxu0
        %2039 = vdwg.mxu0
        %v2040 = vcombine.low %v1818, %v1964
        %v2041 = vcombine.high %v1818, %v1964
        %v2043 = vunpack.c.l.s4 1983009808
        %v2044 = vunpack.c.0.s8 %v2043
        %v2045 = vlaneseq
        %v2046 = vshrl.u32 %v2045, 7
        %v2047 = vsub.s32 %v2044, %v2046
        %v2048 = vrot.slane %v2040, %v2047
        %v2050 = vunpack.c.l.s4 1983009808
        %v2051 = vunpack.c.0.s8 %v2050
        %v2052 = vlaneseq
        %v2053 = vshrl.u32 %v2052, 7
        %v2054 = vsub.s32 %v2051, %v2053
        %v2055 = vrot.slane %v2041, %v2054
        %v2056 = vcombine.low %v1891, %v2037
        %v2057 = vcombine.high %v1891, %v2037
        %v2059 = vunpack.c.l.s4 1983009808
        %v2060 = vunpack.c.0.s8 %v2059
        %v2061 = vlaneseq
        %v2062 = vshrl.u32 %v2061, 7
        %v2063 = vsub.s32 %v2060, %v2062
        %v2064 = vrot.slane %v2056, %v2063
        %v2066 = vunpack.c.l.s4 1983009808
        %v2067 = vunpack.c.0.s8 %v2066
        %v2068 = vlaneseq
        %v2069 = vshrl.u32 %v2068, 7
        %v2070 = vsub.s32 %v2067, %v2069
        %v2071 = vrot.slane %v2057, %v2070
        %v2072 = vcombine.low %v2048, %v2064
        %v2073 = vcombine.high %v2048, %v2064
        %v2075 = vunpack.c.l.s4 1934713408
        %v2076 = vunpack.c.0.s8 %v2075
        %v2077 = vlaneseq
        %v2078 = vshrl.u32 %v2077, 7
        %v2079 = vsub.s32 %v2076, %v2078
        %v2080 = vrot.slane %v2072, %v2079
        %v2082 = vunpack.c.l.s4 1934713408
        %v2083 = vunpack.c.0.s8 %v2082
        %v2084 = vlaneseq
        %v2085 = vshrl.u32 %v2084, 7
        %v2086 = vsub.s32 %v2083, %v2085
        %v2087 = vrot.slane %v2073, %v2086
        %v2088 = vcombine.low %v2055, %v2071
        %v2089 = vcombine.high %v2055, %v2071
        %v2091 = vunpack.c.l.s4 1934713408
        %v2092 = vunpack.c.0.s8 %v2091
        %v2093 = vlaneseq
        %v2094 = vshrl.u32 %v2093, 7
        %v2095 = vsub.s32 %v2092, %v2094
        %v2096 = vrot.slane %v2088, %v2095
        %v2098 = vunpack.c.l.s4 1934713408
        %v2099 = vunpack.c.0.s8 %v2098
        %v2100 = vlaneseq
        %v2101 = vshrl.u32 %v2100, 7
        %v2102 = vsub.s32 %v2099, %v2101
        %v2103 = vrot.slane %v2089, %v2102
        %v2104 = vcombine.high %v2080, 0.0
        %v2105 = vcombine.high %v2087, 0.0
        %v2106 = vcombine.high %v2096, 0.0
        %v2107 = vcombine.high %v2103, 0.0
        %v2108 = vcombine.low %v2080, %v2087
        %v2110 = vunpack.c.l.s4 1983009808
        %v2111 = vunpack.c.0.s8 %v2110
        %v2112 = vlaneseq
        %v2113 = vshrl.u32 %v2112, 7
        %v2114 = vsub.s32 %v2111, %v2113
        %v2115 = vrot.slane %v2108, %v2114
        %v2116 = vcombine.low %v2104, %v2105
        %v2118 = vunpack.c.l.s4 1983009808
        %v2119 = vunpack.c.0.s8 %v2118
        %v2120 = vlaneseq
        %v2121 = vshrl.u32 %v2120, 7
        %v2122 = vsub.s32 %v2119, %v2121
        %v2123 = vrot.slane %v2116, %v2122
        %v2124 = vcombine.low %v2096, %v2103
        %v2126 = vunpack.c.l.s4 1983009808
        %v2127 = vunpack.c.0.s8 %v2126
        %v2128 = vlaneseq
        %v2129 = vshrl.u32 %v2128, 7
        %v2130 = vsub.s32 %v2127, %v2129
        %v2131 = vrot.slane %v2124, %v2130
        %v2132 = vcombine.low %v2106, %v2107
        %v2134 = vunpack.c.l.s4 1983009808
        %v2135 = vunpack.c.0.s8 %v2134
        %v2136 = vlaneseq
        %v2137 = vshrl.u32 %v2136, 7
        %v2138 = vsub.s32 %v2135, %v2137
        %v2139 = vrot.slane %v2132, %v2138
        %v2140 = vcombine.low %v2115, %v2123
        %v2141 = vcombine.high %v2115, %v2123
        %v2143 = vunpack.c.l.s4 1934713408
        %v2144 = vunpack.c.0.s8 %v2143
        %v2145 = vlaneseq
        %v2146 = vshrl.u32 %v2145, 7
        %v2147 = vsub.s32 %v2144, %v2146
        %v2148 = vrot.slane %v2140, %v2147
        %v2150 = vunpack.c.l.s4 1934713408
        %v2151 = vunpack.c.0.s8 %v2150
        %v2152 = vlaneseq
        %v2153 = vshrl.u32 %v2152, 7
        %v2154 = vsub.s32 %v2151, %v2153
        %v2155 = vrot.slane %v2141, %v2154
        %v2156 = vcombine.low %v2131, %v2139
        %v2157 = vcombine.high %v2131, %v2139
        %v2159 = vunpack.c.l.s4 1934713408
        %v2160 = vunpack.c.0.s8 %v2159
        %v2161 = vlaneseq
        %v2162 = vshrl.u32 %v2161, 7
        %v2163 = vsub.s32 %v2160, %v2162
        %v2164 = vrot.slane %v2156, %v2163
        %v2166 = vunpack.c.l.s4 1934713408
        %v2167 = vunpack.c.0.s8 %v2166
        %v2168 = vlaneseq
        %v2169 = vshrl.u32 %v2168, 7
        %v2170 = vsub.s32 %v2167, %v2169
        %v2171 = vrot.slane %v2157, %v2170
        %v2172 = vcombine.low %v2148, %v2164
        %v2173 = vcombine.high %v2148, %v2164
        %v2174 = vcombine.low %v2155, %v2171
        %v2175 = vcombine.high %v2155, %v2171
        %2177 = vrot.lane.b32.xlu0 %v2173, 16
        %v2178 = vpop.permute.xlu0 %2177
        %2181 = vrot.lane.b32.xlu0 %v2174, 32
        %v2182 = vpop.permute.xlu0 %2181
        %2185 = vrot.lane.b32.xlu0 %v2175, 48
        %v2186 = vpop.permute.xlu0 %2185
        %v2188 = vsel %vm1394, %v2172, %v2178
        %v2189 = vsel %vm1170, %v2188, %v2182
        %vm2190 = vcmask 392192
        %v2191 = vsel %vm2190, %v2189, %v2186
        %v2192 = vld [vmem:[#allocation16] sm:$0xff]
        %v2193 = vld [vmem:[#allocation16 + $0x8] sm:$0xff]
        %v2194 = vld [vmem:[#allocation16 + $0x10] sm:$0xff]
        %v2195 = vld [vmem:[#allocation16 + $0x18] sm:$0xff]
        %v2196 = vld [vmem:[#allocation16 + $0x20] sm:$0xff]
        %v2197 = vld [vmem:[#allocation16 + $0x28] sm:$0xff]
        %v2198 = vld [vmem:[#allocation16 + $0x30] sm:$0xff]
        %v2199 = vld [vmem:[#allocation16 + $0x38] sm:$0xff]
        %v2200 = vld [vmem:[#allocation17] sm:$0x1]
        %v2202 = vlaneseq
        %v2203 = vshrl.u32 %v2202, 7
        %v2204 = vsub.s32 0, %v2203
        %v2205 = vrot.slane %v2200, %v2204
        %vm2207 = vcmask 523264
        %v2209 = vsel %vm2207, %v2191, 0
        %2211 = vmatprep.subr.mxu0 0.0
        %2212 = vmatpush1.msra.mxu0 %v2192
        %2213 = vmatprep.subr.mxu0 0.0
        %2214 = vmatpush1.msra.mxu0 %v2193
        %2215 = vmatprep.subr.mxu0 0.0
        %2216 = vmatpush1.msra.mxu0 %v2194
        %2217 = vmatprep.subr.mxu0 0.0
        %2218 = vmatpush1.msra.mxu0 %v2195
        %2219 = vmatprep.subr.mxu0 0.0
        %2220 = vmatpush1.msra.mxu0 %v2196
        %2221 = vmatprep.subr.mxu0 0.0
        %2222 = vmatpush1.msra.mxu0 %v2197
        %2223 = vmatprep.subr.mxu0 0.0
        %2224 = vmatpush1.msra.mxu0 %v2198
        %2225 = vmatprep.subr.mxu0 0.0
        %2226 = vmatpush1.msra.mxu0 %v2199
        %2227 = vmatprep.subr.mxu0 0.0
        %2228 = vmatpush1.msra.mxu0 0.0
        %2229 = vmatprep.subr.mxu0 0.0
        %2230 = vmatpush1.msra.mxu0 0.0
        %2231 = vmatprep.subr.mxu0 0.0
        %2232 = vmatpush1.msra.mxu0 0.0
        %2233 = vmatprep.subr.mxu0 0.0
        %2234 = vmatpush1.msra.mxu0 0.0
        %2235 = vmatprep.subr.mxu0 0.0
        %2236 = vmatpush1.msra.mxu0 0.0
        %2237 = vmatprep.subr.mxu0 0.0
        %2238 = vmatpush1.msra.mxu0 0.0
        %2239 = vmatprep.subr.mxu0 0.0
        %2240 = vmatpush1.msra.mxu0 0.0
        %2241 = vmatprep.subr.mxu0 0.0
        %2242 = vmatpush1.msra.mxu0 0.0
        %2243 = vmatprep.subr.mxu0 0.0
        %2244 = vmatpush1.msra.mxu0 0.0
        %2245 = vmatprep.subr.mxu0 0.0
        %2246 = vmatpush1.msra.mxu0 0.0
        %2247 = vmatprep.subr.mxu0 0.0
        %2248 = vmatpush1.msra.mxu0 0.0
        %2249 = vmatprep.subr.mxu0 0.0
        %2250 = vmatpush1.msra.mxu0 0.0
        %2251 = vmatprep.subr.mxu0 0.0
        %2252 = vmatpush1.msra.mxu0 0.0
        %2253 = vmatprep.subr.mxu0 0.0
        %2254 = vmatpush1.msra.mxu0 0.0
        %2255 = vmatprep.subr.mxu0 0.0
        %2256 = vmatpush1.msra.mxu0 0.0
        %2257 = vmatprep.subr.mxu0 0.0
        %2258 = vmatpush1.msra.mxu0 0.0
        %2259 = vmatprep.subr.mxu0 0.0
        %2260 = vmatpush1.msra.mxu0 0.0
        %2261 = vmatprep.subr.mxu0 0.0
        %2262 = vmatpush1.msra.mxu0 0.0
        %2263 = vmatprep.subr.mxu0 0.0
        %2264 = vmatpush1.msra.mxu0 0.0
        %2265 = vmatprep.subr.mxu0 0.0
        %2266 = vmatpush1.msra.mxu0 0.0
        %2267 = vmatprep.subr.mxu0 0.0
        %2268 = vmatpush1.msra.mxu0 0.0
        %2269 = vmatprep.subr.mxu0 0.0
        %2270 = vmatpush1.msra.mxu0 0.0
        %2271 = vmatprep.subr.mxu0 0.0
        %2272 = vmatpush1.msra.mxu0 0.0
        %2273 = vmatprep.subr.mxu0 0.0
        %2274 = vmatpush1.msra.mxu0 0.0
        %2275 = vmatprep.mubr.f32.mxu0 0.0
        %2276 = vmatmul.mubr.f32.gmra.mrb[0].mxu0 %v2209
        %v2277 = vpop.f32.mrb[0].mxu0
        %v2278 = vadd.f32 %v2205, %v2277
        %v2279 = vpop.f32.mrb[0].mxu0
        %2280 = vdwg.mxu0
        %v2281 = vadd.f32 %v2278, %v1163
        %v2282 = vld [vmem:[#allocation19] sm:$0x1]
        %v2283 = vld [vmem:[#allocation20] sm:$0x1]
        %v2284 = vsel %vm1170, %v2281, 0.0
        %2285 = vadd.xlane.f32.xlu0 %v2284
        %v2286 = vpop.xlane.xlu0 %2285
        %v2287 = vrcp.pop 32.0
        %v2288 = vmul.f32 %v2286, %v2287
        %v2289 = vsub.f32 %v2281, %v2288
        %v2290 = vmul.f32 %v2289, %v2289
        %v2291 = vsel %vm1170, %v2290, 0.0
        %2292 = vadd.xlane.f32.xlu0 %v2291
        %v2293 = vpop.xlane.xlu0 %2292
        %v2294 = vmul.f32 %v2293, %v2287
        %v2295 = vadd.f32 %v2294, 1e-05
        %v2296 = vrsqrt.pop %v2295
        %v2297 = vmul.f32 %v2289, %v2296
        %v2299 = vlaneseq
        %v2300 = vshrl.u32 %v2299, 7
        %v2301 = vsub.s32 0, %v2300
        %v2302 = vrot.slane %v2282, %v2301
        %v2304 = vmul.f32 %v2297, %v2302
        %v2306 = vlaneseq
        %v2307 = vshrl.u32 %v2306, 7
        %v2308 = vsub.s32 0, %v2307
        %v2309 = vrot.slane %v2283, %v2308
        %v2311 = vadd.f32 %v2304, %v2309
        %v2312 = vld [vmem:[#allocation22] sm:$0xff]
        %v2313 = vld [vmem:[#allocation22 + $0x8] sm:$0xff]
        %v2314 = vld [vmem:[#allocation22 + $0x10] sm:$0xff]
        %v2315 = vld [vmem:[#allocation22 + $0x18] sm:$0xff]
        %v2316 = vld [vmem:[#allocation23] sm:$0x1]
        %v2318 = vlaneseq
        %v2319 = vshrl.u32 %v2318, 7
        %v2320 = vsub.s32 0, %v2319
        %v2321 = vrot.slane %v2316, %v2320
        %v2324 = vsel %vm1170, %v2311, 0
        %2326 = vmatprep.subr.mxu0 0.0
        %2327 = vmatpush1.msra.mxu0 %v2312
        %2328 = vmatprep.subr.mxu0 0.0
        %2329 = vmatpush1.msra.mxu0 %v2313
        %2330 = vmatprep.subr.mxu0 0.0
        %2331 = vmatpush1.msra.mxu0 %v2314
        %2332 = vmatprep.subr.mxu0 0.0
        %2333 = vmatpush1.msra.mxu0 %v2315
        %2334 = vmatprep.subr.mxu0 0.0
        %2335 = vmatpush1.msra.mxu0 0.0
        %2336 = vmatprep.subr.mxu0 0.0
        %2337 = vmatpush1.msra.mxu0 0.0
        %2338 = vmatprep.subr.mxu0 0.0
        %2339 = vmatpush1.msra.mxu0 0.0
        %2340 = vmatprep.subr.mxu0 0.0
        %2341 = vmatpush1.msra.mxu0 0.0
        %2342 = vmatprep.subr.mxu0 0.0
        %2343 = vmatpush1.msra.mxu0 0.0
        %2344 = vmatprep.subr.mxu0 0.0
        %2345 = vmatpush1.msra.mxu0 0.0
        %2346 = vmatprep.subr.mxu0 0.0
        %2347 = vmatpush1.msra.mxu0 0.0
        %2348 = vmatprep.subr.mxu0 0.0
        %2349 = vmatpush1.msra.mxu0 0.0
        %2350 = vmatprep.subr.mxu0 0.0
        %2351 = vmatpush1.msra.mxu0 0.0
        %2352 = vmatprep.subr.mxu0 0.0
        %2353 = vmatpush1.msra.mxu0 0.0
        %2354 = vmatprep.subr.mxu0 0.0
        %2355 = vmatpush1.msra.mxu0 0.0
        %2356 = vmatprep.subr.mxu0 0.0
        %2357 = vmatpush1.msra.mxu0 0.0
        %2358 = vmatprep.subr.mxu0 0.0
        %2359 = vmatpush1.msra.mxu0 0.0
        %2360 = vmatprep.subr.mxu0 0.0
        %2361 = vmatpush1.msra.mxu0 0.0
        %2362 = vmatprep.subr.mxu0 0.0
        %2363 = vmatpush1.msra.mxu0 0.0
        %2364 = vmatprep.subr.mxu0 0.0
        %2365 = vmatpush1.msra.mxu0 0.0
        %2366 = vmatprep.subr.mxu0 0.0
        %2367 = vmatpush1.msra.mxu0 0.0
        %2368 = vmatprep.subr.mxu0 0.0
        %2369 = vmatpush1.msra.mxu0 0.0
        %2370 = vmatprep.subr.mxu0 0.0
        %2371 = vmatpush1.msra.mxu0 0.0
        %2372 = vmatprep.subr.mxu0 0.0
        %2373 = vmatpush1.msra.mxu0 0.0
        %2374 = vmatprep.subr.mxu0 0.0
        %2375 = vmatpush1.msra.mxu0 0.0
        %2376 = vmatprep.subr.mxu0 0.0
        %2377 = vmatpush1.msra.mxu0 0.0
        %2378 = vmatprep.subr.mxu0 0.0
        %2379 = vmatpush1.msra.mxu0 0.0
        %2380 = vmatprep.subr.mxu0 0.0
        %2381 = vmatpush1.msra.mxu0 0.0
        %2382 = vmatprep.subr.mxu0 0.0
        %2383 = vmatpush1.msra.mxu0 0.0
        %2384 = vmatprep.subr.mxu0 0.0
        %2385 = vmatpush1.msra.mxu0 0.0
        %2386 = vmatprep.subr.mxu0 0.0
        %2387 = vmatpush1.msra.mxu0 0.0
        %2388 = vmatprep.subr.mxu0 0.0
        %2389 = vmatpush1.msra.mxu0 0.0
        %2390 = vmatprep.mubr.f32.mxu0 0.0
        %2391 = vmatmul.mubr.f32.gmra.mrb[0].mxu0 %v2324
        %v2392 = vpop.f32.mrb[0].mxu0
        %v2393 = vadd.f32 %v2321, %v2392
        %v2394 = vpop.f32.mrb[0].mxu0
        %2395 = vdwg.mxu0
        %v2396 = vmul.f32 %v2393, 0.5
        %v2397 = vmul.f32 %v2393, 0.70710677
        %v2398 = verf.f32.pop %v2397
        %v2399 = vadd.f32 %v2398, 1.0
        %v2400 = vmul.f32 %v2396, %v2399
        %v2401 = vld [vmem:[#allocation25] sm:$0xff]
        %v2402 = vld [vmem:[#allocation25 + $0x8] sm:$0xff]
        %v2403 = vld [vmem:[#allocation25 + $0x10] sm:$0xff]
        %v2404 = vld [vmem:[#allocation25 + $0x18] sm:$0xff]
        %v2405 = vld [vmem:[#allocation25 + $0x20] sm:$0xff]
        %v2406 = vld [vmem:[#allocation25 + $0x28] sm:$0xff]
        %v2407 = vld [vmem:[#allocation25 + $0x30] sm:$0xff]
        %v2408 = vld [vmem:[#allocation25 + $0x38] sm:$0xff]
        %v2409 = vld [vmem:[#allocation26] sm:$0x1]
        %v2411 = vlaneseq
        %v2412 = vshrl.u32 %v2411, 7
        %v2413 = vsub.s32 0, %v2412
        %v2414 = vrot.slane %v2409, %v2413
        %v2417 = vsel %vm2207, %v2400, 0
        %2419 = vmatprep.subr.mxu0 0.0
        %2420 = vmatpush1.msra.mxu0 %v2401
        %2421 = vmatprep.subr.mxu0 0.0
        %2422 = vmatpush1.msra.mxu0 %v2402
        %2423 = vmatprep.subr.mxu0 0.0
        %2424 = vmatpush1.msra.mxu0 %v2403
        %2425 = vmatprep.subr.mxu0 0.0
        %2426 = vmatpush1.msra.mxu0 %v2404
        %2427 = vmatprep.subr.mxu0 0.0
        %2428 = vmatpush1.msra.mxu0 %v2405
        %2429 = vmatprep.subr.mxu0 0.0
        %2430 = vmatpush1.msra.mxu0 %v2406
        %2431 = vmatprep.subr.mxu0 0.0
        %2432 = vmatpush1.msra.mxu0 %v2407
        %2433 = vmatprep.subr.mxu0 0.0
        %2434 = vmatpush1.msra.mxu0 %v2408
        %2435 = vmatprep.subr.mxu0 0.0
        %2436 = vmatpush1.msra.mxu0 0.0
        %2437 = vmatprep.subr.mxu0 0.0
        %2438 = vmatpush1.msra.mxu0 0.0
        %2439 = vmatprep.subr.mxu0 0.0
        %2440 = vmatpush1.msra.mxu0 0.0
        %2441 = vmatprep.subr.mxu0 0.0
        %2442 = vmatpush1.msra.mxu0 0.0
        %2443 = vmatprep.subr.mxu0 0.0
        %2444 = vmatpush1.msra.mxu0 0.0
        %2445 = vmatprep.subr.mxu0 0.0
        %2446 = vmatpush1.msra.mxu0 0.0
        %2447 = vmatprep.subr.mxu0 0.0
        %2448 = vmatpush1.msra.mxu0 0.0
        %2449 = vmatprep.subr.mxu0 0.0
        %2450 = vmatpush1.msra.mxu0 0.0
        %2451 = vmatprep.subr.mxu0 0.0
        %2452 = vmatpush1.msra.mxu0 0.0
        %2453 = vmatprep.subr.mxu0 0.0
        %2454 = vmatpush1.msra.mxu0 0.0
        %2455 = vmatprep.subr.mxu0 0.0
        %2456 = vmatpush1.msra.mxu0 0.0
        %2457 = vmatprep.subr.mxu0 0.0
        %2458 = vmatpush1.msra.mxu0 0.0
        %2459 = vmatprep.subr.mxu0 0.0
        %2460 = vmatpush1.msra.mxu0 0.0
        %2461 = vmatprep.subr.mxu0 0.0
        %2462 = vmatpush1.msra.mxu0 0.0
        %2463 = vmatprep.subr.mxu0 0.0
        %2464 = vmatpush1.msra.mxu0 0.0
        %2465 = vmatprep.subr.mxu0 0.0
        %2466 = vmatpush1.msra.mxu0 0.0
        %2467 = vmatprep.subr.mxu0 0.0
        %2468 = vmatpush1.msra.mxu0 0.0
        %2469 = vmatprep.subr.mxu0 0.0
        %2470 = vmatpush1.msra.mxu0 0.0
        %2471 = vmatprep.subr.mxu0 0.0
        %2472 = vmatpush1.msra.mxu0 0.0
        %2473 = vmatprep.subr.mxu0 0.0
        %2474 = vmatpush1.msra.mxu0 0.0
        %2475 = vmatprep.subr.mxu0 0.0
        %2476 = vmatpush1.msra.mxu0 0.0
        %2477 = vmatprep.subr.mxu0 0.0
        %2478 = vmatpush1.msra.mxu0 0.0
        %2479 = vmatprep.subr.mxu0 0.0
        %2480 = vmatpush1.msra.mxu0 0.0
        %2481 = vmatprep.subr.mxu0 0.0
        %2482 = vmatpush1.msra.mxu0 0.0
        %2483 = vmatprep.mubr.f32.mxu0 0.0
        %2484 = vmatmul.mubr.f32.gmra.mrb[0].mxu0 %v2417
        %v2485 = vpop.f32.mrb[0].mxu0
        %v2486 = vadd.f32 %v2414, %v2485
        %v2487 = vpop.f32.mrb[0].mxu0
        %2488 = vdwg.mxu0
        %v2489 = vadd.f32 %v2486, %v2281
        %2490 = vst.msk [vmem:[%s671] sm:$0xff] %vm1170, %v2489
        %s2491 = sand.u32 %s359, 1
        %s2492 = scalar_lea.sflag [#allocation7], %s2491
        %s2493 = sand.u32 %s359, 1
        %s2494 = smul.addr %s2493, 8
        %s2495 = scalar_lea.vmem [#allocation28], %s2494
        // Predicated region
        $region137: #{tpu_custom_call.1} parent=75 // pred_check
          %p2496 = pneg %p369
        $region138: #{tpu_custom_call.1} parent=75 // pred_check_branch
          %2498 = sbr.rel (%p2496) target = $region140
        $region139: #{tpu_custom_call.1} parent=75 // pred_region
          %s2500 = ssub.s32 128, 128
          %2501 = vsyncadd %s2492, %s2500
          %s2502 = sadd.s32 %s43, %s42
          %s2503 = smul.addr %s2502, 128
          %s2504 = scalar_lea.hbm %s14, %s2503
          %s2506 = sshll.u32 %s2495, 4
          %s2507 = int_to_ptr.vmem [resolvable:$true] %s2506
          %2509 = dma.vmem_to_hbm [thread:$0]  %s2507, 128, %s2504, %s2492
        $region140: #{tpu_custom_call.1} parent=75 // pred_fallthru
          _
      $region76: #{tpu_custom_call.1} parent=5 // pred_fallthru
        _
      %p2510 = scmp.le.s32.totalorder 2, %s33
      // Predicated region
      $region141: #{tpu_custom_call.1} parent=5 // pred_check
        %p2511 = pneg %p2510
      $region142: #{tpu_custom_call.1} parent=5 // pred_check_branch
        %2513 = sbr.rel (%p2511) target = $region144
      $region143: #{tpu_custom_call.1} parent=5 // pred_region
        %s2514 = ssub.s32 %s33, 2
        // Predicated region
        $region145: #{tpu_custom_call.1} parent=143 // pred_check
          %p2515 = pneg %p375
        $region146: #{tpu_custom_call.1} parent=143 // pred_check_branch
          %2517 = sbr.rel (%p2515) target = $region148
        $region147: #{tpu_custom_call.1} parent=143 // pred_region
          %s2518 = sand.u32 %s360, 1
          %s2519 = scalar_lea.sflag [#allocation7], %s2518
          %s2520 = sand.u32 %s360, 1
          %s2521 = smul.addr %s2520, 8
          %s2522 = scalar_lea.vmem [#allocation28], %s2521
          %2523 = dma.done %s2519, 128
        $region148: #{tpu_custom_call.1} parent=143 // pred_fallthru
          _
      $region144: #{tpu_custom_call.1} parent=5 // pred_fallthru
        _
    $region6: #{tpu_custom_call.1} parent=1 // loop_footer
      %s37 = sadd.s32 1, %s33
    $region7: #{tpu_custom_call.1} parent=1 // loop_footer_branch
      %32 = sbr.rel target = $region3
    $region8: #{tpu_custom_call.1} parent=1 // loop_exit
      _
    %2524 = vsyncpa [#allocation6], 1
    %s2525 = scalar_lea.sflag [#allocation6], 1
    %2526 = vsyncpa %s2525, 1
    %2527 = vsyncpa [#allocation9], 1
    %2528 = vsyncpa [#allocation12], 1
    %2529 = vsyncpa [#allocation15], 1
    %2530 = vsyncpa [#allocation18], 1
    %2531 = vsyncpa [#allocation21], 1
    %2532 = vsyncpa [#allocation24], 1
    %2533 = vsyncpa [#allocation27], 1
    %2534 = vsyncpa [#allocation7], 1
    %s2535 = scalar_lea.sflag [#allocation7], 1
    %2536 = vsyncpa %s2535, 1

</llo_original>
